<compile_context>
chip_gen: v6e
topology: v6e:2x2x1
jax: 0.10.0
libtpu: 0.0.40
codegen_flags: <defaults>
</compile_context>

<pallas_src>
import functools

import jax
import jax.numpy as jnp
from jax.experimental import pallas as pl
from jax.experimental.pallas import tpu as pltpu

LANE = 128  # channel padding granularity (TPU lane width)


def _rup(x, m):
    return ((x + m - 1) // m) * m


# ---------------------------------------------------------------------------
# Pallas kernels
# ---------------------------------------------------------------------------
def _conv_stats_kernel(x_ref, w_ref, y_ref, stats_ref, *, KH, KW, stride):
    """Direct conv (tap loop, no im2col) + fused per-channel [sum, sum_sq].

    x_ref:     (1, Hp, Wp, Cin_p)  bf16  spatially padded input, one image
    w_ref:     (KH*KW, Cin_p, TN)  bf16  weights for one out-channel tile
    y_ref:     (1, OH, OW, TN)     f32   conv output
    stats_ref: (1, 2, TN)          f32   [sum, sum_sq] over this image's rows
    """
    _, OH, OW, TN = y_ref.shape
    cin = x_ref.shape[-1]
    acc = jnp.zeros((OH * OW, TN), jnp.float32)
    for idx in range(KH * KW):
        kh, kw = idx // KW, idx % KW
        if stride == 1:
            xs = x_ref[0, pl.ds(kh, OH), pl.ds(kw, OW), :]
        else:
            # TODO(synk): stride>1 path (strided window loads) is implemented
            # but not exercised by the __main__ demo (default stride is 1).
            xs = x_ref[0, pl.ds(kh, OH, stride=stride),
                       pl.ds(kw, OW, stride=stride), :]
        acc = acc + jnp.dot(xs.reshape(OH * OW, cin), w_ref[idx],
                            preferred_element_type=jnp.float32)
    y_ref[0] = acc.reshape(OH, OW, TN)
    s = jnp.sum(acc, axis=0, keepdims=True)
    ss = jnp.sum(acc * acc, axis=0, keepdims=True)
    stats_ref[0] = jnp.concatenate([s, ss], axis=0)


def _bn_affine_kernel(y_ref, s_ref, t_ref, o_ref, *, relu):
    v = y_ref[...] * s_ref[...] + t_ref[...]
    if relu:
        v = jnp.maximum(v, 0.0)
    o_ref[...] = v


def _bn_affine_res_kernel(y_ref, s_ref, t_ref, r_ref, o_ref, *, relu):
    v = y_ref[...] * s_ref[...] + t_ref[...] + r_ref[...]
    if relu:
        v = jnp.maximum(v, 0.0)
    o_ref[...] = v


# ---------------------------------------------------------------------------
# Wrappers
# ---------------------------------------------------------------------------
def conv2d_with_stats(x, w, stride, pad):
    """x: (N, H, W, Cin_p) f32 channel-padded NHWC; w: (KH, KW, Cin, Cout) f32.

    Returns y: (N, OH, OW, Cout_p) f32 and stats: (2, Cout_p) f32 with
    per-channel sum / sum-of-squares over the N*OH*OW real output rows.
    Padded output channels (zero weights) stay exactly zero.
    """
    N, H, W, Cin_p = x.shape
    KH, KW, Cin, Cout = w.shape
    Cout_p = _rup(Cout, LANE)
    OH = (H + 2 * pad - KH) // stride + 1
    OW = (W + 2 * pad - KW) // stride + 1
    Hp, Wp = H + 2 * pad, W + 2 * pad

    # bf16 operands for the MXU; zero-pad channels to the lane-padded widths.
    xp = jnp.pad(x.astype(jnp.bfloat16),
                 ((0, 0), (pad, pad), (pad, pad), (0, 0)))
    wp = jnp.pad(w, ((0, 0), (0, 0), (0, Cin_p - Cin), (0, Cout_p - Cout)))
    wp = wp.reshape(KH * KW, Cin_p, Cout_p).astype(jnp.bfloat16)

    TN = 256 if Cout_p % 256 == 0 else 128  # wider tiles for v6e/v7x MXU
    J = Cout_p // TN

    kern = functools.partial(_conv_stats_kernel, KH=KH, KW=KW, stride=stride)
    y, part = pl.pallas_call(
        kern,
        out_shape=(
            jax.ShapeDtypeStruct((N, OH, OW, Cout_p), jnp.float32),
            jax.ShapeDtypeStruct((N, 2, Cout_p), jnp.float32),
        ),
        grid=(N, J),
        in_specs=[
            pl.BlockSpec((1, Hp, Wp, Cin_p), lambda n, j: (n, 0, 0, 0)),
            pl.BlockSpec((KH * KW, Cin_p, TN), lambda n, j: (0, 0, j)),
        ],
        out_specs=[
            pl.BlockSpec((1, OH, OW, TN), lambda n, j: (n, 0, 0, j)),
            pl.BlockSpec((1, 2, TN), lambda n, j: (n, 0, j)),
        ],
        compiler_params=pltpu.CompilerParams(
            dimension_semantics=("parallel", "parallel")),
    )(xp, wp)
    # Tiny (N, 2, Cout_p) partial-stat reduction; y is never re-read from HBM.
    return y, jnp.sum(part, axis=0)


def bn_affine(y, stats, gamma, beta, *, relu, residual=None, eps=1e-5):
    """out = maybe_relu(y * scale + shift [+ residual]); batch-stat BatchNorm."""
    N, OH, OW, Cp = y.shape
    M = N * OH * OW
    mean = stats[0] / M
    var = jnp.maximum(stats[1] / M - mean * mean, 0.0)  # biased var (training BN)
    # Padded channels: var == 0 -> rsqrt(eps) is large, but gamma/beta are
    # zero-padded so scale == shift == 0 and the padded lanes stay exactly 0.
    g = jnp.pad(gamma.astype(jnp.float32), (0, Cp - gamma.shape[0]))
    b = jnp.pad(beta.astype(jnp.float32), (0, Cp - beta.shape[0]))
    inv = jax.lax.rsqrt(var + eps)
    scale = (g * inv).reshape(1, 1, 1, Cp)
    shift = (b - mean * g * inv).reshape(1, 1, 1, Cp)

    row = pl.BlockSpec((1, OH, OW, Cp), lambda n: (n, 0, 0, 0))
    vec = pl.BlockSpec((1, 1, 1, Cp), lambda n: (0, 0, 0, 0))
    if residual is None:
        kern = functools.partial(_bn_affine_kernel, relu=relu)
        in_specs = [row, vec, vec]
        args = (y, scale, shift)
    else:
        kern = functools.partial(_bn_affine_res_kernel, relu=relu)
        in_specs = [row, vec, vec, row]
        args = (y, scale, shift, residual)
    return pl.pallas_call(
        kern,
        out_shape=jax.ShapeDtypeStruct((N, OH, OW, Cp), jnp.float32),
        grid=(N,),
        in_specs=in_specs,
        out_specs=row,
        compiler_params=pltpu.CompilerParams(dimension_semantics=("parallel",)),
    )(*args)


def conv_bn(x, w, stride, pad, gamma, beta, *, relu, residual=None, eps=1e-5):
    y, stats = conv2d_with_stats(x, w, stride, pad)
    return bn_affine(y, stats, gamma, beta, relu=relu, residual=residual, eps=eps)


# ---------------------------------------------------------------------------
# BasicBlock_ACPR forward (matches the PyTorch module's forward)
# ---------------------------------------------------------------------------
def basic_block_forward(params, x_nchw):
    N, C, H, W = x_nchw.shape
    Cp = _rup(C, LANE)
    # NCHW -> NHWC once, pad channels to a multiple of 128 lanes once; keep the
    # padded layout persistent through the whole block.
    x = jnp.transpose(x_nchw, (0, 2, 3, 1)).astype(jnp.float32)
    x = jnp.pad(x, ((0, 0), (0, 0), (0, 0), (0, Cp - C)))

    identity = x
    out = conv_bn(x, params["conv1_w"], params["stride"], 1,
                  params["bn1_g"], params["bn1_b"], relu=True)
    if "down_w" in params:  # downsample = conv1x1 + BN (no ReLU)
        identity = conv_bn(x, params["down_w"], params["stride"], 0,
                           params["down_g"], params["down_b"], relu=False)
    # conv2 -> bn2 -> (+identity) -> relu, residual+ReLU fused into the affine
    out = conv_bn(out, params["conv2_w"], 1, 1,
                  params["bn2_g"], params["bn2_b"], relu=True,
                  residual=identity)
    Cout = params["conv2_w"].shape[-1]
    return jnp.transpose(out[..., :Cout], (0, 3, 1, 2))  # back to NCHW


# ---------------------------------------------------------------------------
# Parameter init (fresh torch module: kaiming conv weights, BN gamma=1 beta=0)
# ---------------------------------------------------------------------------
def init_block_params(key, inplanes, planes, purncfg=None, stride=1):
    if purncfg is None:
        purncfg = [planes, planes]
    k1, k2, k3 = jax.random.split(key, 3)

    def conv_w(k, kh, kw, ic, oc):
        std = (2.0 / (oc * kh * kw)) ** 0.5  # kaiming_normal_, fan_out, relu
        return jax.random.normal(k, (kh, kw, ic, oc), jnp.float32) * std

    p = {
        "stride": stride,
        "conv1_w": conv_w(k1, 3, 3, inplanes, purncfg[0]),
        "bn1_g": jnp.ones((purncfg[0],), jnp.float32),
        "bn1_b": jnp.zeros((purncfg[0],), jnp.float32),
        "conv2_w": conv_w(k2, 3, 3, purncfg[0], purncfg[1]),
        "bn2_g": jnp.ones((purncfg[1],), jnp.float32),
        "bn2_b": jnp.zeros((purncfg[1],), jnp.float32),
    }
    if stride != 1 or inplanes != purncfg[1]:  # BasicBlock.expansion == 1
        p["down_w"] = conv_w(k3, 1, 1, inplanes, purncfg[1])
        p["down_g"] = jnp.ones((purncfg[1],), jnp.float32)
        p["down_b"] = jnp.zeros((purncfg[1],), jnp.float32)
    return p


# ---------------------------------------------------------------------------
# Pure-JAX reference (for a loose numerical sanity check; bf16 MXU path)
# ---------------------------------------------------------------------------
def _ref_conv_bn(x, w, stride, pad, gamma, beta, relu, residual=None, eps=1e-5):
    y = jax.lax.conv_general_dilated(
        x, w, window_strides=(stride, stride),
        padding=[(pad, pad), (pad, pad)],
        dimension_numbers=("NHWC", "HWIO", "NHWC"))
    mean = jnp.mean(y, axis=(0, 1, 2))
    var = jnp.mean((y - mean) ** 2, axis=(0, 1, 2))
    y = (y - mean) * jax.lax.rsqrt(var + eps) * gamma + beta
    if residual is not None:
        y = y + residual
    if relu:
        y = jnp.maximum(y, 0.0)
    return y


def basic_block_reference(params, x_nchw):
    x = jnp.transpose(x_nchw, (0, 2, 3, 1)).astype(jnp.float32)
    identity = x
    out = _ref_conv_bn(x, params["conv1_w"], params["stride"], 1,
                       params["bn1_g"], params["bn1_b"], True)
    if "down_w" in params:
        identity = _ref_conv_bn(x, params["down_w"], params["stride"], 0,
                                params["down_g"], params["down_b"], False)
    out = _ref_conv_bn(out, params["conv2_w"], 1, 1,
                       params["bn2_g"], params["bn2_b"], True,
                       residual=identity)
    return jnp.transpose(out, (0, 3, 1, 2))


if __name__ == "__main__":
    key = jax.random.PRNGKey(0)
    k_p1, k_p2, k_x = jax.random.split(key, 3)

    # BasicBlock_ACPR(inplanes=32, planes=32, purncfg=[24, 32]) with the default
    # stride=1 / downsample=None constructor args (training-mode BatchNorm).
    params1 = init_block_params(k_p1, inplanes=32, planes=32,
                                purncfg=[24, 32], stride=1)
    x = jax.random.normal(k_x, (2, 32, 16, 16), jnp.float32)  # NCHW like torch

    out1 = jax.block_until_ready(basic_block_forward(params1, x))
    assert out1.shape == (2, 32, 16, 16)
    err1 = float(jnp.max(jnp.abs(out1 - basic_block_reference(params1, x))))
    assert bool(jnp.all(jnp.isfinite(out1))) and err1 < 0.25, err1

    # Second instance exercising the downsample path (1x1 conv + BN), used
    # when inplanes != planes.
    params2 = init_block_params(k_p2, inplanes=32, planes=64, stride=1)
    out2 = jax.block_until_ready(basic_block_forward(params2, x))
    assert out2.shape == (2, 64, 16, 16)
    err2 = float(jnp.max(jnp.abs(out2 - basic_block_reference(params2, x))))
    assert bool(jnp.all(jnp.isfinite(out2))) and err2 < 0.25, err2

    print("KERNEL_OK")
</pallas_src>

<mosaic_0001>
module attributes {stable_mosaic.version = 11 : i64} {
  func.func @_conv_stats_kernel(%arg0: i32, %arg1: i32, %arg2: memref<1x18x18x128xbf16, #tpu.memory_space<vmem>>, %arg3: memref<9x128x128xbf16, #tpu.memory_space<vmem>>, %arg4: memref<1x16x16x128xf32, #tpu.memory_space<vmem>>, %arg5: memref<1x2x128xf32, #tpu.memory_space<vmem>>) attributes {dimension_semantics = [#tpu.dimension_semantics<parallel>, #tpu.dimension_semantics<parallel>], iteration_bounds = array<i64: 2, 1>, scalar_prefetch = 0 : i64, scratch_operands = 0 : i64, tpu.core_type = #tpu.core_type<tc>, window_params = [{transform_indices = @transform_0, window_bounds = array<i64: 1, 18, 18, 128>}, {transform_indices = @transform_1, window_bounds = array<i64: 9, 128, 128>}, {transform_indices = @transform_2, window_bounds = array<i64: 1, 16, 16, 128>}, {transform_indices = @transform_3, window_bounds = array<i64: 1, 2, 128>}]} {
    %cst = arith.constant 0.000000e+00 : f32
    %0 = vector.broadcast %cst : f32 to vector<256x128xf32>
    %c0 = arith.constant 0 : index
    %c0_0 = arith.constant 0 : index
    %c0_1 = arith.constant 0 : index
    %c0_2 = arith.constant 0 : index
    %1 = vector.load %arg2[%c0, %c0_0, %c0_1, %c0_2] : memref<1x18x18x128xbf16, #tpu.memory_space<vmem>>, vector<1x16x16x128xbf16>
    %2 = vector.shape_cast %1 : vector<1x16x16x128xbf16> to vector<16x16x128xbf16>
    %3 = vector.shape_cast %2 : vector<16x16x128xbf16> to vector<256x128xbf16>
    %c0_3 = arith.constant 0 : index
    %c0_4 = arith.constant 0 : index
    %c0_5 = arith.constant 0 : index
    %4 = vector.load %arg3[%c0_3, %c0_4, %c0_5] : memref<9x128x128xbf16, #tpu.memory_space<vmem>>, vector<1x128x128xbf16>
    %5 = vector.shape_cast %4 : vector<1x128x128xbf16> to vector<128x128xbf16>
    %cst_6 = arith.constant dense<0.000000e+00> : vector<256x128xf32>
    %6 = tpu.matmul %3, %5, %cst_6 {dimension_numbers = #tpu.dot_dimension_numbers<[1], [0], [0], [1], [0, 0, 1, 1], [], []>} : vector<256x128xbf16>, vector<128x128xbf16>, vector<256x128xf32> -> vector<256x128xf32>
    %7 = arith.addf %0, %6 : vector<256x128xf32>
    %c0_7 = arith.constant 0 : index
    %c0_8 = arith.constant 0 : index
    %c1 = arith.constant 1 : index
    %c0_9 = arith.constant 0 : index
    %8 = vector.load %arg2[%c0_7, %c0_8, %c1, %c0_9] : memref<1x18x18x128xbf16, #tpu.memory_space<vmem>>, vector<1x16x16x128xbf16>
    %9 = vector.shape_cast %8 : vector<1x16x16x128xbf16> to vector<16x16x128xbf16>
    %10 = vector.shape_cast %9 : vector<16x16x128xbf16> to vector<256x128xbf16>
    %c1_10 = arith.constant 1 : index
    %c0_11 = arith.constant 0 : index
    %c0_12 = arith.constant 0 : index
    %11 = vector.load %arg3[%c1_10, %c0_11, %c0_12] : memref<9x128x128xbf16, #tpu.memory_space<vmem>>, vector<1x128x128xbf16>
    %12 = vector.shape_cast %11 : vector<1x128x128xbf16> to vector<128x128xbf16>
    %cst_13 = arith.constant dense<0.000000e+00> : vector<256x128xf32>
    %13 = tpu.matmul %10, %12, %cst_13 {dimension_numbers = #tpu.dot_dimension_numbers<[1], [0], [0], [1], [0, 0, 1, 1], [], []>} : vector<256x128xbf16>, vector<128x128xbf16>, vector<256x128xf32> -> vector<256x128xf32>
    %14 = arith.addf %7, %13 : vector<256x128xf32>
    %c0_14 = arith.constant 0 : index
    %c0_15 = arith.constant 0 : index
    %c2 = arith.constant 2 : index
    %c0_16 = arith.constant 0 : index
    %15 = vector.load %arg2[%c0_14, %c0_15, %c2, %c0_16] : memref<1x18x18x128xbf16, #tpu.memory_space<vmem>>, vector<1x16x16x128xbf16>
    %16 = vector.shape_cast %15 : vector<1x16x16x128xbf16> to vector<16x16x128xbf16>
    %17 = vector.shape_cast %16 : vector<16x16x128xbf16> to vector<256x128xbf16>
    %c2_17 = arith.constant 2 : index
    %c0_18 = arith.constant 0 : index
    %c0_19 = arith.constant 0 : index
    %18 = vector.load %arg3[%c2_17, %c0_18, %c0_19] : memref<9x128x128xbf16, #tpu.memory_space<vmem>>, vector<1x128x128xbf16>
    %19 = vector.shape_cast %18 : vector<1x128x128xbf16> to vector<128x128xbf16>
    %cst_20 = arith.constant dense<0.000000e+00> : vector<256x128xf32>
    %20 = tpu.matmul %17, %19, %cst_20 {dimension_numbers = #tpu.dot_dimension_numbers<[1], [0], [0], [1], [0, 0, 1, 1], [], []>} : vector<256x128xbf16>, vector<128x128xbf16>, vector<256x128xf32> -> vector<256x128xf32>
    %21 = arith.addf %14, %20 : vector<256x128xf32>
    %c0_21 = arith.constant 0 : index
    %c1_22 = arith.constant 1 : index
    %c0_23 = arith.constant 0 : index
    %c0_24 = arith.constant 0 : index
    %22 = vector.load %arg2[%c0_21, %c1_22, %c0_23, %c0_24] : memref<1x18x18x128xbf16, #tpu.memory_space<vmem>>, vector<1x16x16x128xbf16>
    %23 = vector.shape_cast %22 : vector<1x16x16x128xbf16> to vector<16x16x128xbf16>
    %24 = vector.shape_cast %23 : vector<16x16x128xbf16> to vector<256x128xbf16>
    %c3 = arith.constant 3 : index
    %c0_25 = arith.constant 0 : index
    %c0_26 = arith.constant 0 : index
    %25 = vector.load %arg3[%c3, %c0_25, %c0_26] : memref<9x128x128xbf16, #tpu.memory_space<vmem>>, vector<1x128x128xbf16>
    %26 = vector.shape_cast %25 : vector<1x128x128xbf16> to vector<128x128xbf16>
    %cst_27 = arith.constant dense<0.000000e+00> : vector<256x128xf32>
    %27 = tpu.matmul %24, %26, %cst_27 {dimension_numbers = #tpu.dot_dimension_numbers<[1], [0], [0], [1], [0, 0, 1, 1], [], []>} : vector<256x128xbf16>, vector<128x128xbf16>, vector<256x128xf32> -> vector<256x128xf32>
    %28 = arith.addf %21, %27 : vector<256x128xf32>
    %c0_28 = arith.constant 0 : index
    %c1_29 = arith.constant 1 : index
    %c1_30 = arith.constant 1 : index
    %c0_31 = arith.constant 0 : index
    %29 = vector.load %arg2[%c0_28, %c1_29, %c1_30, %c0_31] : memref<1x18x18x128xbf16, #tpu.memory_space<vmem>>, vector<1x16x16x128xbf16>
    %30 = vector.shape_cast %29 : vector<1x16x16x128xbf16> to vector<16x16x128xbf16>
    %31 = vector.shape_cast %30 : vector<16x16x128xbf16> to vector<256x128xbf16>
    %c4 = arith.constant 4 : index
    %c0_32 = arith.constant 0 : index
    %c0_33 = arith.constant 0 : index
    %32 = vector.load %arg3[%c4, %c0_32, %c0_33] : memref<9x128x128xbf16, #tpu.memory_space<vmem>>, vector<1x128x128xbf16>
    %33 = vector.shape_cast %32 : vector<1x128x128xbf16> to vector<128x128xbf16>
    %cst_34 = arith.constant dense<0.000000e+00> : vector<256x128xf32>
    %34 = tpu.matmul %31, %33, %cst_34 {dimension_numbers = #tpu.dot_dimension_numbers<[1], [0], [0], [1], [0, 0, 1, 1], [], []>} : vector<256x128xbf16>, vector<128x128xbf16>, vector<256x128xf32> -> vector<256x128xf32>
    %35 = arith.addf %28, %34 : vector<256x128xf32>
    %c0_35 = arith.constant 0 : index
    %c1_36 = arith.constant 1 : index
    %c2_37 = arith.constant 2 : index
    %c0_38 = arith.constant 0 : index
    %36 = vector.load %arg2[%c0_35, %c1_36, %c2_37, %c0_38] : memref<1x18x18x128xbf16, #tpu.memory_space<vmem>>, vector<1x16x16x128xbf16>
    %37 = vector.shape_cast %36 : vector<1x16x16x128xbf16> to vector<16x16x128xbf16>
    %38 = vector.shape_cast %37 : vector<16x16x128xbf16> to vector<256x128xbf16>
    %c5 = arith.constant 5 : index
    %c0_39 = arith.constant 0 : index
    %c0_40 = arith.constant 0 : index
    %39 = vector.load %arg3[%c5, %c0_39, %c0_40] : memref<9x128x128xbf16, #tpu.memory_space<vmem>>, vector<1x128x128xbf16>
    %40 = vector.shape_cast %39 : vector<1x128x128xbf16> to vector<128x128xbf16>
    %cst_41 = arith.constant dense<0.000000e+00> : vector<256x128xf32>
    %41 = tpu.matmul %38, %40, %cst_41 {dimension_numbers = #tpu.dot_dimension_numbers<[1], [0], [0], [1], [0, 0, 1, 1], [], []>} : vector<256x128xbf16>, vector<128x128xbf16>, vector<256x128xf32> -> vector<256x128xf32>
    %42 = arith.addf %35, %41 : vector<256x128xf32>
    %c0_42 = arith.constant 0 : index
    %c2_43 = arith.constant 2 : index
    %c0_44 = arith.constant 0 : index
    %c0_45 = arith.constant 0 : index
    %43 = vector.load %arg2[%c0_42, %c2_43, %c0_44, %c0_45] : memref<1x18x18x128xbf16, #tpu.memory_space<vmem>>, vector<1x16x16x128xbf16>
    %44 = vector.shape_cast %43 : vector<1x16x16x128xbf16> to vector<16x16x128xbf16>
    %45 = vector.shape_cast %44 : vector<16x16x128xbf16> to vector<256x128xbf16>
    %c6 = arith.constant 6 : index
    %c0_46 = arith.constant 0 : index
    %c0_47 = arith.constant 0 : index
    %46 = vector.load %arg3[%c6, %c0_46, %c0_47] : memref<9x128x128xbf16, #tpu.memory_space<vmem>>, vector<1x128x128xbf16>
    %47 = vector.shape_cast %46 : vector<1x128x128xbf16> to vector<128x128xbf16>
    %cst_48 = arith.constant dense<0.000000e+00> : vector<256x128xf32>
    %48 = tpu.matmul %45, %47, %cst_48 {dimension_numbers = #tpu.dot_dimension_numbers<[1], [0], [0], [1], [0, 0, 1, 1], [], []>} : vector<256x128xbf16>, vector<128x128xbf16>, vector<256x128xf32> -> vector<256x128xf32>
    %49 = arith.addf %42, %48 : vector<256x128xf32>
    %c0_49 = arith.constant 0 : index
    %c2_50 = arith.constant 2 : index
    %c1_51 = arith.constant 1 : index
    %c0_52 = arith.constant 0 : index
    %50 = vector.load %arg2[%c0_49, %c2_50, %c1_51, %c0_52] : memref<1x18x18x128xbf16, #tpu.memory_space<vmem>>, vector<1x16x16x128xbf16>
    %51 = vector.shape_cast %50 : vector<1x16x16x128xbf16> to vector<16x16x128xbf16>
    %52 = vector.shape_cast %51 : vector<16x16x128xbf16> to vector<256x128xbf16>
    %c7 = arith.constant 7 : index
    %c0_53 = arith.constant 0 : index
    %c0_54 = arith.constant 0 : index
    %53 = vector.load %arg3[%c7, %c0_53, %c0_54] : memref<9x128x128xbf16, #tpu.memory_space<vmem>>, vector<1x128x128xbf16>
    %54 = vector.shape_cast %53 : vector<1x128x128xbf16> to vector<128x128xbf16>
    %cst_55 = arith.constant dense<0.000000e+00> : vector<256x128xf32>
    %55 = tpu.matmul %52, %54, %cst_55 {dimension_numbers = #tpu.dot_dimension_numbers<[1], [0], [0], [1], [0, 0, 1, 1], [], []>} : vector<256x128xbf16>, vector<128x128xbf16>, vector<256x128xf32> -> vector<256x128xf32>
    %56 = arith.addf %49, %55 : vector<256x128xf32>
    %c0_56 = arith.constant 0 : index
    %c2_57 = arith.constant 2 : index
    %c2_58 = arith.constant 2 : index
    %c0_59 = arith.constant 0 : index
    %57 = vector.load %arg2[%c0_56, %c2_57, %c2_58, %c0_59] : memref<1x18x18x128xbf16, #tpu.memory_space<vmem>>, vector<1x16x16x128xbf16>
    %58 = vector.shape_cast %57 : vector<1x16x16x128xbf16> to vector<16x16x128xbf16>
    %59 = vector.shape_cast %58 : vector<16x16x128xbf16> to vector<256x128xbf16>
    %c8 = arith.constant 8 : index
    %c0_60 = arith.constant 0 : index
    %c0_61 = arith.constant 0 : index
    %60 = vector.load %arg3[%c8, %c0_60, %c0_61] : memref<9x128x128xbf16, #tpu.memory_space<vmem>>, vector<1x128x128xbf16>
    %61 = vector.shape_cast %60 : vector<1x128x128xbf16> to vector<128x128xbf16>
    %cst_62 = arith.constant dense<0.000000e+00> : vector<256x128xf32>
    %62 = tpu.matmul %59, %61, %cst_62 {dimension_numbers = #tpu.dot_dimension_numbers<[1], [0], [0], [1], [0, 0, 1, 1], [], []>} : vector<256x128xbf16>, vector<128x128xbf16>, vector<256x128xf32> -> vector<256x128xf32>
    %63 = arith.addf %56, %62 : vector<256x128xf32>
    %64 = vector.shape_cast %63 : vector<256x128xf32> to vector<16x16x128xf32>
    %c0_63 = arith.constant 0 : index
    %c0_64 = arith.constant 0 : index
    %c0_65 = arith.constant 0 : index
    %c0_66 = arith.constant 0 : index
    %65 = vector.load %arg4[%c0_63, %c0_64, %c0_65, %c0_66] : memref<1x16x16x128xf32, #tpu.memory_space<vmem>>, vector<1x16x16x128xf32>
    %66 = vector.shape_cast %65 : vector<1x16x16x128xf32> to vector<16x16x128xf32>
    %67 = vector.shape_cast %64 : vector<16x16x128xf32> to vector<1x16x16x128xf32>
    tpu.vector_store %arg4[%c0_63, %c0_64, %c0_65, %c0_66], %67 {strides = array<i32>} : memref<1x16x16x128xf32, #tpu.memory_space<vmem>>, vector<1x16x16x128xf32>,
    %cst_67 = arith.constant dense<0.000000e+00> : vector<128xf32>
    %68 = vector.multi_reduction <add>, %63, %cst_67 [0] : vector<256x128xf32> to vector<128xf32>
    %69 = vector.shape_cast %68 : vector<128xf32> to vector<1x128xf32>
    %70 = arith.mulf %63, %63 : vector<256x128xf32>
    %cst_68 = arith.constant dense<0.000000e+00> : vector<128xf32>
    %71 = vector.multi_reduction <add>, %70, %cst_68 [0] : vector<256x128xf32> to vector<128xf32>
    %72 = vector.shape_cast %71 : vector<128xf32> to vector<1x128xf32>
    %73 = tpu.concatenate %69, %72 in 0 : vector<1x128xf32>, vector<1x128xf32> -> vector<2x128xf32>
    %c0_69 = arith.constant 0 : index
    %c0_70 = arith.constant 0 : index
    %c0_71 = arith.constant 0 : index
    %74 = vector.load %arg5[%c0_69, %c0_70, %c0_71] : memref<1x2x128xf32, #tpu.memory_space<vmem>>, vector<1x2x128xf32>
    %75 = vector.shape_cast %74 : vector<1x2x128xf32> to vector<2x128xf32>
    %76 = vector.shape_cast %73 : vector<2x128xf32> to vector<1x2x128xf32>
    tpu.vector_store %arg5[%c0_69, %c0_70, %c0_71], %76 {strides = array<i32>} : memref<1x2x128xf32, #tpu.memory_space<vmem>>, vector<1x2x128xf32>,
    return
  }
  func.func @transform_0(%arg0: i32, %arg1: i32) -> (i32, i32, i32, i32) {
    %c0_i32 = arith.constant 0 : i32
    %c0_i32_0 = arith.constant 0 : i32
    %c0_i32_1 = arith.constant 0 : i32
    %c0_i32_2 = arith.constant 0 : i32
    return %arg0, %c0_i32, %c0_i32_0, %c0_i32_1 : i32, i32, i32, i32
  }
  func.func @transform_1(%arg0: i32, %arg1: i32) -> (i32, i32, i32) {
    %c0_i32 = arith.constant 0 : i32
    %c0_i32_0 = arith.constant 0 : i32
    %c0_i32_1 = arith.constant 0 : i32
    return %c0_i32, %c0_i32_0, %arg1 : i32, i32, i32
  }
  func.func @transform_2(%arg0: i32, %arg1: i32) -> (i32, i32, i32, i32) {
    %c0_i32 = arith.constant 0 : i32
    %c0_i32_0 = arith.constant 0 : i32
    %c0_i32_1 = arith.constant 0 : i32
    return %arg0, %c0_i32, %c0_i32_0, %arg1 : i32, i32, i32, i32
  }
  func.func @transform_3(%arg0: i32, %arg1: i32) -> (i32, i32, i32) {
    %c0_i32 = arith.constant 0 : i32
    %c0_i32_0 = arith.constant 0 : i32
    return %arg0, %c0_i32, %arg1 : i32, i32, i32
  }
}

</mosaic_0001>

<llo_original>
// kernel: tpu_custom_call.1
$region0: #{tpu_custom_call.1}
  #allocation0 [shape = 'u32[]', space=smem, size = 0x4, offset = 0x4, fixed_abs, tag = 'smem constant byte address 0x4 - core index']
  #allocation1 [shape = 'u32[144,128]{1,0:T(1,128)}', space=vmem, size = 0x12000, scoped, tag = 'internal scratch']
  %s0 = inlined_call_operand.vmem [shape: bf16[2,18,18,128], index: 0, kind: input, shape index: {}]
  %s1 = inlined_call_operand.vmem [shape: bf16[9,128,128], index: 1, kind: input, shape index: {}]
  %s2 = inlined_call_operand.hbm [shape: f32[2,16,16,128], index: 2, kind: output, shape index: {0}]
  %s3 = inlined_call_operand.hbm [shape: f32[2,2,128], index: 3, kind: output, shape index: {1}]
  %4 = xla_tuple %s2, %s3
  %s5 = sld [smem:[#allocation0]]
  $region49: #{tpu_custom_call.1} parent=0
    _
  %s7 = ssub.s32 1, %s5
  %s8 = scalar_select 0, %s7, %s5
  $region1: #{tpu_custom_call.1} parent=0
    #allocation2 [shape = 'u8[262144]{0}', space=vmem, size = 0x40000, scoped, tag = 'output window, operand 0']
    #allocation3 [shape = 's32[2]{0}', space=sflag, size = 0x8, scoped, tag = 'scoped memory for tpu_custom_call.1']
    #allocation4 [shape = 'u8[2048]{0}', space=vmem, size = 0x800, scoped, tag = 'output window, operand 1']
    #allocation5 [shape = 's32[2]{0}', space=sflag, size = 0x8, scoped, tag = 'scoped memory for tpu_custom_call.1']
    %9 = vsyncpa [#allocation3], 0
    %s10 = scalar_lea.sflag [#allocation3], 1
    %11 = vsyncpa %s10, 0
    %12 = vsyncpa [#allocation5], 0
    %s13 = scalar_lea.sflag [#allocation5], 1
    %14 = vsyncpa %s13, 0
    loop: start=0, step=1, limit=4
    $region2: #{tpu_custom_call.1} parent=1 // loop_pre_header
      _
    $region3: #{tpu_custom_call.1} parent=1 // loop_header
      %s16 = sphi 0, %s20
      %p17 = scmp.ge.s32.totalorder %s16, 4
      %s23 = sphi 0, %s35
      %s24 = sphi 0, %s31
      %s25 = sphi 0, %s23
      %s26 = sphi 0, %s24
      %s27 = sphi 0, %s25
      %s28 = sphi 0, %s26
      %s38 = sphi 0, %s40
      %s41 = sphi 0, %s38
      %s42 = sphi 0, %s41
      %s58 = sphi 0, %s42
      %s64 = sphi 0, %s66
      %s67 = sphi 0, %s64
      %s68 = sphi 0, %s67
      %s84 = sphi 0, %s68
      %s92 = sphi 0, %s94
      %s95 = sphi 0, %s92
      %s96 = sphi 0, %s95
      %s112 = sphi 0, %s96
      %s120 = sphi 0, %s122
      %s123 = sphi 0, %s120
      %s124 = sphi 0, %s123
      %s140 = sphi 0, %s124
    $region4: #{tpu_custom_call.1} parent=1 // loop_header_branch
      %19 = sbr.rel (%p17) target = $region8
    $region5: #{tpu_custom_call.1} parent=1 // loop_body
      %s21 = ssub.s32 %s16, 1
      %s22 = ssub.s32 %s16, 2
      %s29 = sadd.s32 1, %s24
      %p30 = scmp.ge.s32.totalorder %s29, 1
      %s31 = scalar_select %p30, 0, %s29
      %s32 = sadd.s32 1, %s23
      %s33 = scalar_select %p30, %s32, %s23
      %p34 = scmp.ge.s32.totalorder %s33, 2
      %s35 = scalar_select %p34, 0, %s33
      %s36 = ssub.s32 %s23, %s35
      %p37 = scmp.eq.s32.totalorder %s36, 0
      %s39 = sadd.s32 %s38, 1
      %s40 = scalar_select %p37, %s38, %s39
      %p43 = pneg %p37
      %p44 = scmp.eq.s32.totalorder %s16, 1
      %p45 = por %p43, %p44
      %p46 = scmp.ne.s32.totalorder %s38, %s41
      %p47 = scmp.eq.s32.totalorder %s16, 0
      %p48 = por %p46, %p47
      %p49 = scmp.ne.s32.totalorder %s38, %s41
      %p50 = scmp.eq.s32.totalorder %s21, 1
      %p51 = por %p49, %p50
      %p52 = scmp.ne.s32.totalorder %s41, %s42
      %p53 = scmp.eq.s32.totalorder %s21, 0
      %p54 = por %p52, %p53
      %p55 = scmp.ne.s32.totalorder %s41, %s42
      %p56 = scmp.eq.s32.totalorder %s22, 1
      %p57 = por %p55, %p56
      %p59 = scmp.ne.s32.totalorder %s42, %s58
      %p60 = scmp.eq.s32.totalorder %s22, 0
      %p61 = por %p59, %p60
      %s62 = ssub.s32 %s24, %s31
      %p63 = scmp.eq.s32.totalorder %s62, 0
      %s65 = sadd.s32 %s64, 1
      %s66 = scalar_select %p63, %s64, %s65
      %p69 = pneg %p63
      %p70 = scmp.eq.s32.totalorder %s16, 1
      %p71 = por %p69, %p70
      %p72 = scmp.ne.s32.totalorder %s64, %s67
      %p73 = scmp.eq.s32.totalorder %s16, 0
      %p74 = por %p72, %p73
      %p75 = scmp.ne.s32.totalorder %s64, %s67
      %p76 = scmp.eq.s32.totalorder %s21, 1
      %p77 = por %p75, %p76
      %p78 = scmp.ne.s32.totalorder %s67, %s68
      %p79 = scmp.eq.s32.totalorder %s21, 0
      %p80 = por %p78, %p79
      %p81 = scmp.ne.s32.totalorder %s67, %s68
      %p82 = scmp.eq.s32.totalorder %s22, 1
      %p83 = por %p81, %p82
      %p85 = scmp.ne.s32.totalorder %s68, %s84
      %p86 = scmp.eq.s32.totalorder %s22, 0
      %p87 = por %p85, %p86
      %s88 = ssub.s32 %s23, %s35
      %s89 = ssub.s32 %s24, %s31
      %s90 = sor.u32 %s88, %s89
      %p91 = scmp.eq.s32.totalorder %s90, 0
      %s93 = sadd.s32 %s92, 1
      %s94 = scalar_select %p91, %s92, %s93
      %p97 = pneg %p91
      %p98 = scmp.eq.s32.totalorder %s16, 1
      %p99 = por %p97, %p98
      %p100 = scmp.ne.s32.totalorder %s92, %s95
      %p101 = scmp.eq.s32.totalorder %s16, 0
      %p102 = por %p100, %p101
      %p103 = scmp.ne.s32.totalorder %s92, %s95
      %p104 = scmp.eq.s32.totalorder %s21, 1
      %p105 = por %p103, %p104
      %p106 = scmp.ne.s32.totalorder %s95, %s96
      %p107 = scmp.eq.s32.totalorder %s21, 0
      %p108 = por %p106, %p107
      %p109 = scmp.ne.s32.totalorder %s95, %s96
      %p110 = scmp.eq.s32.totalorder %s22, 1
      %p111 = por %p109, %p110
      %p113 = scmp.ne.s32.totalorder %s96, %s112
      %p114 = scmp.eq.s32.totalorder %s22, 0
      %p115 = por %p113, %p114
      %s116 = ssub.s32 %s23, %s35
      %s117 = ssub.s32 %s24, %s31
      %s118 = sor.u32 %s116, %s117
      %p119 = scmp.eq.s32.totalorder %s118, 0
      %s121 = sadd.s32 %s120, 1
      %s122 = scalar_select %p119, %s120, %s121
      %p125 = pneg %p119
      %p126 = scmp.eq.s32.totalorder %s16, 1
      %p127 = por %p125, %p126
      %p128 = scmp.ne.s32.totalorder %s120, %s123
      %p129 = scmp.eq.s32.totalorder %s16, 0
      %p130 = por %p128, %p129
      %p131 = scmp.ne.s32.totalorder %s120, %s123
      %p132 = scmp.eq.s32.totalorder %s21, 1
      %p133 = por %p131, %p132
      %p134 = scmp.ne.s32.totalorder %s123, %s124
      %p135 = scmp.eq.s32.totalorder %s21, 0
      %p136 = por %p134, %p135
      %p137 = scmp.ne.s32.totalorder %s123, %s124
      %p138 = scmp.eq.s32.totalorder %s22, 1
      %p139 = por %p137, %p138
      %p141 = scmp.ne.s32.totalorder %s124, %s140
      %p142 = scmp.eq.s32.totalorder %s22, 0
      %p143 = por %p141, %p142
      %p144 = scmp.le.s32.totalorder 1, %s16
      %p145 = scmp.lt.s32.totalorder %s16, 3
      %p146 = pnand %p144, %p145
      %p147 = pneg %p146
      // Predicated region
      $region9: #{tpu_custom_call.1} parent=5 // pred_check
        _
      $region10: #{tpu_custom_call.1} parent=5 // pred_check_branch
        %149 = sbr.rel (%p146) target = $region12
      $region11: #{tpu_custom_call.1} parent=5 // pred_region
        %s150 = ssub.s32 %s16, 1
        // Predicated region
        $region13: #{tpu_custom_call.1} parent=11 // pred_check
          %p151 = pneg %p80
        $region14: #{tpu_custom_call.1} parent=11 // pred_check_branch
          %153 = sbr.rel (%p151) target = $region16
        $region15: #{tpu_custom_call.1} parent=11 // pred_region
          %p154 = scmp.lt.s32.totalorder %s26, 0
          %s155 = scalar_select %p154, %s26, 0
          %s156 = smul.addr %s155, 4
          %s157 = scalar_lea.vmem %s1, %s156
        $region16: #{tpu_custom_call.1} parent=11 // pred_fallthru
          _
      $region12: #{tpu_custom_call.1} parent=5 // pred_fallthru
        _
      %p158 = scmp.lt.s32.totalorder %s16, 2
      // Predicated region
      $region17: #{tpu_custom_call.1} parent=5 // pred_check
        %p159 = pneg %p158
      $region18: #{tpu_custom_call.1} parent=5 // pred_check_branch
        %161 = sbr.rel (%p159) target = $region20
      $region19: #{tpu_custom_call.1} parent=5 // pred_region
        // Predicated region
        $region21: #{tpu_custom_call.1} parent=19 // pred_check
          %p162 = pneg %p48
        $region22: #{tpu_custom_call.1} parent=19 // pred_check_branch
          %164 = sbr.rel (%p162) target = $region24
        $region23: #{tpu_custom_call.1} parent=19 // pred_region
          %p165 = scmp.lt.s32.totalorder %s23, 1
          %s166 = scalar_select %p165, %s23, 1
          %s167 = smul.addr %s166, 54
          %s168 = smul.addr %s167, 4
          %s169 = scalar_lea.vmem %s0, %s168
        $region24: #{tpu_custom_call.1} parent=19 // pred_fallthru
          _
      $region20: #{tpu_custom_call.1} parent=5 // pred_fallthru
        _
      %p170 = scmp.le.s32.totalorder 1, %s16
      %p171 = scmp.lt.s32.totalorder %s16, 3
      %p172 = pnand %p170, %p171
      %p173 = pneg %p172
      // Predicated region
      $region25: #{tpu_custom_call.1} parent=5 // pred_check
        _
      $region26: #{tpu_custom_call.1} parent=5 // pred_check_branch
        %175 = sbr.rel (%p172) target = $region28
      $region27: #{tpu_custom_call.1} parent=5 // pred_region
        %s176 = ssub.s32 %s16, 1
        %p177 = scmp.lt.s32.totalorder %s25, 1
        %s178 = scalar_select %p177, %s25, 1
        %s179 = smul.addr %s178, 54
        %s180 = smul.addr %s179, 4
        %s181 = scalar_lea.vmem %s0, %s180
        %p182 = pneg %p54
        %p183 = pneg %p51
        %p184 = scmp.lt.s32.totalorder %s26, 0
        %s185 = scalar_select %p184, %s26, 0
        %s186 = smul.addr %s185, 4
        %s187 = scalar_lea.vmem %s1, %s186
        %p188 = pneg %p80
        %p189 = pneg %p77
        %p190 = pneg %p108
        %p191 = pneg %p105
        %s192 = sand.u32 %s95, 1
        %s193 = scalar_lea.sflag [#allocation3], %s192
        %s194 = sand.u32 %s95, 1
        %s195 = smul.addr %s194, 256
        %s196 = scalar_lea.vmem [#allocation2], %s195
        %p197 = pneg %p136
        %p198 = pneg %p133
        %s199 = sand.u32 %s123, 1
        %s200 = scalar_lea.sflag [#allocation5], %s199
        %s201 = sand.u32 %s123, 1
        %s202 = smul.addr %s201, 2
        %s203 = scalar_lea.vmem [#allocation4], %s202
        %p204 = scmp.lt.s32.totalorder %s25, 1
        %s205 = scalar_select %p204, %s25, 1
        %s206 = smul.addr %s205, 54
        %s207 = smul.addr %s206, 4
        %s208 = scalar_lea.vmem %s0, %s207
        %p209 = scmp.lt.s32.totalorder %s26, 0
        %s210 = scalar_select %p209, %s26, 0
        %s211 = smul.addr %s210, 4
        %s212 = scalar_lea.vmem %s1, %s211
        %v214 = vld [vmem:[%s208] sm:$0xf]
        %v215 = vld [vmem:[%s208 + $0x4] sm:$0xf]
        %v216 = vld [vmem:[%s208 + $0xc] sm:$0xf]
        %v217 = vld [vmem:[%s208 + $0x10] sm:$0xf]
        %v218 = vld [vmem:[%s208 + $0x18] sm:$0xf]
        %v219 = vld [vmem:[%s208 + $0x1c] sm:$0xf]
        %v220 = vld [vmem:[%s208 + $0x24] sm:$0xf]
        %v221 = vld [vmem:[%s208 + $0x28] sm:$0xf]
        %v222 = vld [vmem:[%s208 + $0x30] sm:$0xf]
        %v223 = vld [vmem:[%s208 + $0x34] sm:$0xf]
        %v224 = vld [vmem:[%s208 + $0x3c] sm:$0xf]
        %v225 = vld [vmem:[%s208 + $0x40] sm:$0xf]
        %v226 = vld [vmem:[%s208 + $0x48] sm:$0xf]
        %v227 = vld [vmem:[%s208 + $0x4c] sm:$0xf]
        %v228 = vld [vmem:[%s208 + $0x54] sm:$0xf]
        %v229 = vld [vmem:[%s208 + $0x58] sm:$0xf]
        %v230 = vld [vmem:[%s208 + $0x60] sm:$0xf]
        %v231 = vld [vmem:[%s208 + $0x64] sm:$0xf]
        %v232 = vld [vmem:[%s208 + $0x6c] sm:$0xf]
        %v233 = vld [vmem:[%s208 + $0x70] sm:$0xf]
        %v234 = vld [vmem:[%s208 + $0x78] sm:$0xf]
        %v235 = vld [vmem:[%s208 + $0x7c] sm:$0xf]
        %v236 = vld [vmem:[%s208 + $0x84] sm:$0xf]
        %v237 = vld [vmem:[%s208 + $0x88] sm:$0xf]
        %v238 = vld [vmem:[%s208 + $0x90] sm:$0xf]
        %v239 = vld [vmem:[%s208 + $0x94] sm:$0xf]
        %v240 = vld [vmem:[%s208 + $0x9c] sm:$0xf]
        %v241 = vld [vmem:[%s208 + $0xa0] sm:$0xf]
        %v242 = vld [vmem:[%s208 + $0xa8] sm:$0xf]
        %v243 = vld [vmem:[%s208 + $0xac] sm:$0xf]
        %v244 = vld [vmem:[%s208 + $0xb4] sm:$0xf]
        %v245 = vld [vmem:[%s208 + $0xb8] sm:$0xf]
        %v246 = vld [vmem:[%s212] sm:$0xf]
        %v247 = vld [vmem:[%s212 + $0x4] sm:$0xf]
        %v248 = vld [vmem:[%s212 + $0x8] sm:$0xf]
        %v249 = vld [vmem:[%s212 + $0xc] sm:$0xf]
        %v250 = vld [vmem:[%s212 + $0x10] sm:$0xf]
        %v251 = vld [vmem:[%s212 + $0x14] sm:$0xf]
        %v252 = vld [vmem:[%s212 + $0x18] sm:$0xf]
        %v253 = vld [vmem:[%s212 + $0x1c] sm:$0xf]
        %v254 = vld [vmem:[%s212 + $0x20] sm:$0xf]
        %v255 = vld [vmem:[%s212 + $0x24] sm:$0xf]
        %v256 = vld [vmem:[%s212 + $0x28] sm:$0xf]
        %v257 = vld [vmem:[%s212 + $0x2c] sm:$0xf]
        %v258 = vld [vmem:[%s212 + $0x30] sm:$0xf]
        %v259 = vld [vmem:[%s212 + $0x34] sm:$0xf]
        %v260 = vld [vmem:[%s212 + $0x38] sm:$0xf]
        %v261 = vld [vmem:[%s212 + $0x3c] sm:$0xf]
        %v262 = vld [vmem:[%s208 + $0x8] sm:$0x1]
        %v263 = vld [vmem:[%s208 + $0x14] sm:$0x1]
        %v264 = vld [vmem:[%s208 + $0x20] sm:$0x1]
        %v265 = vld [vmem:[%s208 + $0x2c] sm:$0x1]
        %v266 = vld [vmem:[%s208 + $0x38] sm:$0x1]
        %v267 = vld [vmem:[%s208 + $0x44] sm:$0x1]
        %v268 = vld [vmem:[%s208 + $0x50] sm:$0x1]
        %v269 = vld [vmem:[%s208 + $0x5c] sm:$0x1]
        %v270 = vld [vmem:[%s208 + $0x68] sm:$0x1]
        %v271 = vld [vmem:[%s208 + $0x74] sm:$0x1]
        %v272 = vld [vmem:[%s208 + $0x80] sm:$0x1]
        %v273 = vld [vmem:[%s208 + $0x8c] sm:$0x1]
        %v274 = vld [vmem:[%s208 + $0x98] sm:$0x1]
        %v275 = vld [vmem:[%s208 + $0xa4] sm:$0x1]
        %v276 = vld [vmem:[%s208 + $0xb0] sm:$0x1]
        %v277 = vld [vmem:[%s208 + $0xbc] sm:$0x1]
        %vm278 = vsmask.f32 3328
        %vm279 = vsmask.f32 7440
        %vm280 = vmor %vm278, %vm279
        %v282 = vshrl.u32 %v214, 16
        %v284 = vrot.slane %v282, 4
        %v285 = vshll.u32 %v214, 16
        %v287 = vrot.slane %v285, 5
        %v288 = vor.u32 %v284, %v287
        %v289 = vrot.slane %v288, 4
        %v291 = vshll.u32 %v215, 16
        %v293 = vrot.slane %v291, 5
        %v294 = vsel %vm280, %v289, %v293
        %v295 = vshrl.u32 %v215, 16
        %v297 = vrot.slane %v295, 4
        %v298 = vor.u32 %v297, %v293
        %v299 = vrot.slane %v298, 4
        %v301 = vshll.u32 %v262, 16
        %v303 = vrot.slane %v301, 5
        %v304 = vsel %vm280, %v299, %v303
        %v306 = vshrl.u32 %v216, 16
        %v308 = vrot.slane %v306, 4
        %v309 = vshll.u32 %v216, 16
        %v311 = vrot.slane %v309, 5
        %v312 = vor.u32 %v308, %v311
        %v313 = vrot.slane %v312, 4
        %v315 = vshll.u32 %v217, 16
        %v317 = vrot.slane %v315, 5
        %v318 = vsel %vm280, %v313, %v317
        %v319 = vshrl.u32 %v217, 16
        %v321 = vrot.slane %v319, 4
        %v322 = vor.u32 %v321, %v317
        %v323 = vrot.slane %v322, 4
        %v325 = vshll.u32 %v263, 16
        %v327 = vrot.slane %v325, 5
        %v328 = vsel %vm280, %v323, %v327
        %v330 = vshrl.u32 %v218, 16
        %v332 = vrot.slane %v330, 4
        %v333 = vshll.u32 %v218, 16
        %v335 = vrot.slane %v333, 5
        %v336 = vor.u32 %v332, %v335
        %v337 = vrot.slane %v336, 4
        %v339 = vshll.u32 %v219, 16
        %v341 = vrot.slane %v339, 5
        %v342 = vsel %vm280, %v337, %v341
        %v343 = vshrl.u32 %v219, 16
        %v345 = vrot.slane %v343, 4
        %v346 = vor.u32 %v345, %v341
        %v347 = vrot.slane %v346, 4
        %v349 = vshll.u32 %v264, 16
        %v351 = vrot.slane %v349, 5
        %v352 = vsel %vm280, %v347, %v351
        %v354 = vshrl.u32 %v220, 16
        %v356 = vrot.slane %v354, 4
        %v357 = vshll.u32 %v220, 16
        %v359 = vrot.slane %v357, 5
        %v360 = vor.u32 %v356, %v359
        %v361 = vrot.slane %v360, 4
        %v363 = vshll.u32 %v221, 16
        %v365 = vrot.slane %v363, 5
        %v366 = vsel %vm280, %v361, %v365
        %v367 = vshrl.u32 %v221, 16
        %v369 = vrot.slane %v367, 4
        %v370 = vor.u32 %v369, %v365
        %v371 = vrot.slane %v370, 4
        %v373 = vshll.u32 %v265, 16
        %v375 = vrot.slane %v373, 5
        %v376 = vsel %vm280, %v371, %v375
        %v378 = vshrl.u32 %v222, 16
        %v380 = vrot.slane %v378, 4
        %v381 = vshll.u32 %v222, 16
        %v383 = vrot.slane %v381, 5
        %v384 = vor.u32 %v380, %v383
        %v385 = vrot.slane %v384, 4
        %v387 = vshll.u32 %v223, 16
        %v389 = vrot.slane %v387, 5
        %v390 = vsel %vm280, %v385, %v389
        %v391 = vshrl.u32 %v223, 16
        %v393 = vrot.slane %v391, 4
        %v394 = vor.u32 %v393, %v389
        %v395 = vrot.slane %v394, 4
        %v397 = vshll.u32 %v266, 16
        %v399 = vrot.slane %v397, 5
        %v400 = vsel %vm280, %v395, %v399
        %v402 = vshrl.u32 %v224, 16
        %v404 = vrot.slane %v402, 4
        %v405 = vshll.u32 %v224, 16
        %v407 = vrot.slane %v405, 5
        %v408 = vor.u32 %v404, %v407
        %v409 = vrot.slane %v408, 4
        %v411 = vshll.u32 %v225, 16
        %v413 = vrot.slane %v411, 5
        %v414 = vsel %vm280, %v409, %v413
        %v415 = vshrl.u32 %v225, 16
        %v417 = vrot.slane %v415, 4
        %v418 = vor.u32 %v417, %v413
        %v419 = vrot.slane %v418, 4
        %v421 = vshll.u32 %v267, 16
        %v423 = vrot.slane %v421, 5
        %v424 = vsel %vm280, %v419, %v423
        %v426 = vshrl.u32 %v226, 16
        %v428 = vrot.slane %v426, 4
        %v429 = vshll.u32 %v226, 16
        %v431 = vrot.slane %v429, 5
        %v432 = vor.u32 %v428, %v431
        %v433 = vrot.slane %v432, 4
        %v435 = vshll.u32 %v227, 16
        %v437 = vrot.slane %v435, 5
        %v438 = vsel %vm280, %v433, %v437
        %v439 = vshrl.u32 %v227, 16
        %v441 = vrot.slane %v439, 4
        %v442 = vor.u32 %v441, %v437
        %v443 = vrot.slane %v442, 4
        %v445 = vshll.u32 %v268, 16
        %v447 = vrot.slane %v445, 5
        %v448 = vsel %vm280, %v443, %v447
        %v450 = vshrl.u32 %v228, 16
        %v452 = vrot.slane %v450, 4
        %v453 = vshll.u32 %v228, 16
        %v455 = vrot.slane %v453, 5
        %v456 = vor.u32 %v452, %v455
        %v457 = vrot.slane %v456, 4
        %v459 = vshll.u32 %v229, 16
        %v461 = vrot.slane %v459, 5
        %v462 = vsel %vm280, %v457, %v461
        %v463 = vshrl.u32 %v229, 16
        %v465 = vrot.slane %v463, 4
        %v466 = vor.u32 %v465, %v461
        %v467 = vrot.slane %v466, 4
        %v469 = vshll.u32 %v269, 16
        %v471 = vrot.slane %v469, 5
        %v472 = vsel %vm280, %v467, %v471
        %v474 = vshrl.u32 %v230, 16
        %v476 = vrot.slane %v474, 4
        %v477 = vshll.u32 %v230, 16
        %v479 = vrot.slane %v477, 5
        %v480 = vor.u32 %v476, %v479
        %v481 = vrot.slane %v480, 4
        %v483 = vshll.u32 %v231, 16
        %v485 = vrot.slane %v483, 5
        %v486 = vsel %vm280, %v481, %v485
        %v487 = vshrl.u32 %v231, 16
        %v489 = vrot.slane %v487, 4
        %v490 = vor.u32 %v489, %v485
        %v491 = vrot.slane %v490, 4
        %v493 = vshll.u32 %v270, 16
        %v495 = vrot.slane %v493, 5
        %v496 = vsel %vm280, %v491, %v495
        %v498 = vshrl.u32 %v232, 16
        %v500 = vrot.slane %v498, 4
        %v501 = vshll.u32 %v232, 16
        %v503 = vrot.slane %v501, 5
        %v504 = vor.u32 %v500, %v503
        %v505 = vrot.slane %v504, 4
        %v507 = vshll.u32 %v233, 16
        %v509 = vrot.slane %v507, 5
        %v510 = vsel %vm280, %v505, %v509
        %v511 = vshrl.u32 %v233, 16
        %v513 = vrot.slane %v511, 4
        %v514 = vor.u32 %v513, %v509
        %v515 = vrot.slane %v514, 4
        %v517 = vshll.u32 %v271, 16
        %v519 = vrot.slane %v517, 5
        %v520 = vsel %vm280, %v515, %v519
        %v522 = vshrl.u32 %v234, 16
        %v524 = vrot.slane %v522, 4
        %v525 = vshll.u32 %v234, 16
        %v527 = vrot.slane %v525, 5
        %v528 = vor.u32 %v524, %v527
        %v529 = vrot.slane %v528, 4
        %v531 = vshll.u32 %v235, 16
        %v533 = vrot.slane %v531, 5
        %v534 = vsel %vm280, %v529, %v533
        %v535 = vshrl.u32 %v235, 16
        %v537 = vrot.slane %v535, 4
        %v538 = vor.u32 %v537, %v533
        %v539 = vrot.slane %v538, 4
        %v541 = vshll.u32 %v272, 16
        %v543 = vrot.slane %v541, 5
        %v544 = vsel %vm280, %v539, %v543
        %v546 = vshrl.u32 %v236, 16
        %v548 = vrot.slane %v546, 4
        %v549 = vshll.u32 %v236, 16
        %v551 = vrot.slane %v549, 5
        %v552 = vor.u32 %v548, %v551
        %v553 = vrot.slane %v552, 4
        %v555 = vshll.u32 %v237, 16
        %v557 = vrot.slane %v555, 5
        %v558 = vsel %vm280, %v553, %v557
        %v559 = vshrl.u32 %v237, 16
        %v561 = vrot.slane %v559, 4
        %v562 = vor.u32 %v561, %v557
        %v563 = vrot.slane %v562, 4
        %v565 = vshll.u32 %v273, 16
        %v567 = vrot.slane %v565, 5
        %v568 = vsel %vm280, %v563, %v567
        %v570 = vshrl.u32 %v238, 16
        %v572 = vrot.slane %v570, 4
        %v573 = vshll.u32 %v238, 16
        %v575 = vrot.slane %v573, 5
        %v576 = vor.u32 %v572, %v575
        %v577 = vrot.slane %v576, 4
        %v579 = vshll.u32 %v239, 16
        %v581 = vrot.slane %v579, 5
        %v582 = vsel %vm280, %v577, %v581
        %v583 = vshrl.u32 %v239, 16
        %v585 = vrot.slane %v583, 4
        %v586 = vor.u32 %v585, %v581
        %v587 = vrot.slane %v586, 4
        %v589 = vshll.u32 %v274, 16
        %v591 = vrot.slane %v589, 5
        %v592 = vsel %vm280, %v587, %v591
        %v594 = vshrl.u32 %v240, 16
        %v596 = vrot.slane %v594, 4
        %v597 = vshll.u32 %v240, 16
        %v599 = vrot.slane %v597, 5
        %v600 = vor.u32 %v596, %v599
        %v601 = vrot.slane %v600, 4
        %v603 = vshll.u32 %v241, 16
        %v605 = vrot.slane %v603, 5
        %v606 = vsel %vm280, %v601, %v605
        %v607 = vshrl.u32 %v241, 16
        %v609 = vrot.slane %v607, 4
        %v610 = vor.u32 %v609, %v605
        %v611 = vrot.slane %v610, 4
        %v613 = vshll.u32 %v275, 16
        %v615 = vrot.slane %v613, 5
        %v616 = vsel %vm280, %v611, %v615
        %v618 = vshrl.u32 %v242, 16
        %v620 = vrot.slane %v618, 4
        %v621 = vshll.u32 %v242, 16
        %v623 = vrot.slane %v621, 5
        %v624 = vor.u32 %v620, %v623
        %v625 = vrot.slane %v624, 4
        %v627 = vshll.u32 %v243, 16
        %v629 = vrot.slane %v627, 5
        %v630 = vsel %vm280, %v625, %v629
        %v631 = vshrl.u32 %v243, 16
        %v633 = vrot.slane %v631, 4
        %v634 = vor.u32 %v633, %v629
        %v635 = vrot.slane %v634, 4
        %v637 = vshll.u32 %v276, 16
        %v639 = vrot.slane %v637, 5
        %v640 = vsel %vm280, %v635, %v639
        %v642 = vshrl.u32 %v244, 16
        %v644 = vrot.slane %v642, 4
        %v645 = vshll.u32 %v244, 16
        %v647 = vrot.slane %v645, 5
        %v648 = vor.u32 %v644, %v647
        %v649 = vrot.slane %v648, 4
        %v651 = vshll.u32 %v245, 16
        %v653 = vrot.slane %v651, 5
        %v654 = vsel %vm280, %v649, %v653
        %v655 = vshrl.u32 %v245, 16
        %v657 = vrot.slane %v655, 4
        %v658 = vor.u32 %v657, %v653
        %v659 = vrot.slane %v658, 4
        %v661 = vshll.u32 %v277, 16
        %v663 = vrot.slane %v661, 5
        %v664 = vsel %vm280, %v659, %v663
        %s665 = scalar_lea.vmem %s212, 64
        %v666 = vld [vmem:[%s665] sm:$0xf]
        %v667 = vld [vmem:[%s665 + $0x4] sm:$0xf]
        %v668 = vld [vmem:[%s665 + $0x8] sm:$0xf]
        %v669 = vld [vmem:[%s665 + $0xc] sm:$0xf]
        %v670 = vld [vmem:[%s665 + $0x10] sm:$0xf]
        %v671 = vld [vmem:[%s665 + $0x14] sm:$0xf]
        %v672 = vld [vmem:[%s665 + $0x18] sm:$0xf]
        %v673 = vld [vmem:[%s665 + $0x1c] sm:$0xf]
        %v674 = vld [vmem:[%s665 + $0x20] sm:$0xf]
        %v675 = vld [vmem:[%s665 + $0x24] sm:$0xf]
        %v676 = vld [vmem:[%s665 + $0x28] sm:$0xf]
        %v677 = vld [vmem:[%s665 + $0x2c] sm:$0xf]
        %v678 = vld [vmem:[%s665 + $0x30] sm:$0xf]
        %v679 = vld [vmem:[%s665 + $0x34] sm:$0xf]
        %v680 = vld [vmem:[%s665 + $0x38] sm:$0xf]
        %v681 = vld [vmem:[%s665 + $0x3c] sm:$0xf]
        %v682 = vunpack.c.l.b16 %v294
        %v683 = vunpack.c.l.b16 %v304
        %v684 = vunpack.c.l.b16 %v318
        %v685 = vunpack.c.l.b16 %v328
        %v686 = vunpack.c.l.b16 %v342
        %v687 = vunpack.c.l.b16 %v352
        %v688 = vunpack.c.l.b16 %v366
        %v689 = vunpack.c.l.b16 %v376
        %v690 = vunpack.c.l.b16 %v390
        %v691 = vunpack.c.l.b16 %v400
        %v692 = vunpack.c.l.b16 %v414
        %v693 = vunpack.c.l.b16 %v424
        %v694 = vunpack.c.l.b16 %v438
        %v695 = vunpack.c.l.b16 %v448
        %v696 = vunpack.c.l.b16 %v462
        %v697 = vunpack.c.l.b16 %v472
        %v698 = vunpack.c.l.b16 %v486
        %v699 = vunpack.c.l.b16 %v496
        %v700 = vunpack.c.l.b16 %v510
        %v701 = vunpack.c.l.b16 %v520
        %v702 = vunpack.c.l.b16 %v534
        %v703 = vunpack.c.l.b16 %v544
        %v704 = vunpack.c.l.b16 %v558
        %v705 = vunpack.c.l.b16 %v568
        %v706 = vunpack.c.l.b16 %v582
        %v707 = vunpack.c.l.b16 %v592
        %v708 = vunpack.c.l.b16 %v606
        %v709 = vunpack.c.l.b16 %v616
        %v710 = vunpack.c.l.b16 %v630
        %v711 = vunpack.c.l.b16 %v640
        %v712 = vunpack.c.l.b16 %v654
        %v713 = vunpack.c.l.b16 %v664
        %v714 = vpack.c.b16 %v683, %v682
        %v715 = vpack.c.b16 %v685, %v684
        %v716 = vpack.c.b16 %v687, %v686
        %v717 = vpack.c.b16 %v689, %v688
        %v718 = vpack.c.b16 %v691, %v690
        %v719 = vpack.c.b16 %v693, %v692
        %v720 = vpack.c.b16 %v695, %v694
        %v721 = vpack.c.b16 %v697, %v696
        %v722 = vpack.c.b16 %v699, %v698
        %v723 = vpack.c.b16 %v701, %v700
        %v724 = vpack.c.b16 %v703, %v702
        %v725 = vpack.c.b16 %v705, %v704
        %v726 = vpack.c.b16 %v707, %v706
        %v727 = vpack.c.b16 %v709, %v708
        %v728 = vpack.c.b16 %v711, %v710
        %v729 = vpack.c.b16 %v713, %v712
        %v762 = vunpack.c.l.b16 %v666
        %v763 = vunpack.c.l.b16 %v667
        %v764 = vunpack.c.l.b16 %v668
        %v765 = vunpack.c.l.b16 %v669
        %v766 = vunpack.c.l.b16 %v670
        %v767 = vunpack.c.l.b16 %v671
        %v768 = vunpack.c.l.b16 %v672
        %v769 = vunpack.c.l.b16 %v673
        %v770 = vunpack.c.l.b16 %v674
        %v771 = vunpack.c.l.b16 %v675
        %v772 = vunpack.c.l.b16 %v676
        %v773 = vunpack.c.l.b16 %v677
        %v774 = vunpack.c.l.b16 %v678
        %v775 = vunpack.c.l.b16 %v679
        %v776 = vunpack.c.l.b16 %v680
        %v777 = vunpack.c.l.b16 %v681
        %v778 = vpack.c.b16 %v763, %v762
        %v779 = vpack.c.b16 %v765, %v764
        %v780 = vpack.c.b16 %v767, %v766
        %v781 = vpack.c.b16 %v769, %v768
        %v782 = vpack.c.b16 %v771, %v770
        %v783 = vpack.c.b16 %v773, %v772
        %v784 = vpack.c.b16 %v775, %v774
        %v785 = vpack.c.b16 %v777, %v776
        %794 = vmatprep.subr.bf16.mxu0 0
        %795 = vmatpush1.bf16.msra.mxu0 %v785
        %796 = vmatprep.subr.bf16.mxu0 0
        %797 = vmatpush1.bf16.msra.mxu0 %v784
        %798 = vmatprep.subr.bf16.mxu0 0
        %799 = vmatpush1.bf16.msra.mxu0 %v783
        %800 = vmatprep.subr.bf16.mxu0 0
        %801 = vmatpush1.bf16.msra.mxu0 %v782
        %802 = vmatprep.subr.bf16.mxu0 0
        %803 = vmatpush1.bf16.msra.mxu0 %v781
        %804 = vmatprep.subr.bf16.mxu0 0
        %805 = vmatpush1.bf16.msra.mxu0 %v780
        %806 = vmatprep.subr.bf16.mxu0 0
        %807 = vmatpush1.bf16.msra.mxu0 %v779
        %808 = vmatprep.subr.bf16.mxu0 0
        %809 = vmatpush1.bf16.msra.mxu0 %v778
        %810 = vmatprep.subr.bf16.mxu0 0
        %811 = vmatpush2.bf16.msra.mxu0 0
        %812 = vmatprep.subr.bf16.mxu0 0
        %813 = vmatpush2.bf16.msra.mxu0 0
        %814 = vmatprep.subr.bf16.mxu0 0
        %815 = vmatpush2.bf16.msra.mxu0 0
        %816 = vmatprep.subr.bf16.mxu0 0
        %817 = vmatpush2.bf16.msra.mxu0 0
        %818 = vmatprep.subr.bf16.mxu0 0
        %819 = vmatpush2.bf16.msra.mxu0 0
        %820 = vmatprep.subr.bf16.mxu0 0
        %821 = vmatpush2.bf16.msra.mxu0 0
        %822 = vmatprep.subr.bf16.mxu0 0
        %823 = vmatpush2.bf16.msra.mxu0 0
        %824 = vmatprep.subr.bf16.mxu0 0
        %825 = vmatpush2.bf16.msra.mxu0 0
        %826 = vmatprep.mubr.bf16.mxu0 0
        %827 = vmatmul.mubr.bf16.gmra.mxu0 %v714
        %v828 = vpop.f32.mrf.mxu0
        %v829 = vadd.f32 0.0, %v828
        %v830 = vpop.f32.mrf.mxu0
        %v831 = vpop.f32.mrf.mxu0
        %v832 = vadd.f32 0.0, %v831
        %v833 = vpop.f32.mrf.mxu0
        %834 = vmatprep.mubr.bf16.mxu0 0
        %835 = vmatmul.mubr.bf16.gmra.mxu0 %v715
        %v836 = vpop.f32.mrf.mxu0
        %v837 = vadd.f32 0.0, %v836
        %v838 = vpop.f32.mrf.mxu0
        %v839 = vpop.f32.mrf.mxu0
        %v840 = vadd.f32 0.0, %v839
        %v841 = vpop.f32.mrf.mxu0
        %842 = vmatprep.mubr.bf16.mxu0 0
        %843 = vmatmul.mubr.bf16.gmra.mxu0 %v716
        %v844 = vpop.f32.mrf.mxu0
        %v845 = vadd.f32 0.0, %v844
        %v846 = vpop.f32.mrf.mxu0
        %v847 = vpop.f32.mrf.mxu0
        %v848 = vadd.f32 0.0, %v847
        %v849 = vpop.f32.mrf.mxu0
        %850 = vmatprep.mubr.bf16.mxu0 0
        %851 = vmatmul.mubr.bf16.gmra.mxu0 %v717
        %v852 = vpop.f32.mrf.mxu0
        %v853 = vadd.f32 0.0, %v852
        %v854 = vpop.f32.mrf.mxu0
        %v855 = vpop.f32.mrf.mxu0
        %v856 = vadd.f32 0.0, %v855
        %v857 = vpop.f32.mrf.mxu0
        %858 = vmatprep.mubr.bf16.mxu0 0
        %859 = vmatmul.mubr.bf16.gmra.mxu0 %v718
        %v860 = vpop.f32.mrf.mxu0
        %v861 = vadd.f32 0.0, %v860
        %v862 = vpop.f32.mrf.mxu0
        %v863 = vpop.f32.mrf.mxu0
        %v864 = vadd.f32 0.0, %v863
        %v865 = vpop.f32.mrf.mxu0
        %866 = vmatprep.mubr.bf16.mxu0 0
        %867 = vmatmul.mubr.bf16.gmra.mxu0 %v719
        %v868 = vpop.f32.mrf.mxu0
        %v869 = vadd.f32 0.0, %v868
        %v870 = vpop.f32.mrf.mxu0
        %v871 = vpop.f32.mrf.mxu0
        %v872 = vadd.f32 0.0, %v871
        %v873 = vpop.f32.mrf.mxu0
        %874 = vmatprep.mubr.bf16.mxu0 0
        %875 = vmatmul.mubr.bf16.gmra.mxu0 %v720
        %v876 = vpop.f32.mrf.mxu0
        %v877 = vadd.f32 0.0, %v876
        %v878 = vpop.f32.mrf.mxu0
        %v879 = vpop.f32.mrf.mxu0
        %v880 = vadd.f32 0.0, %v879
        %v881 = vpop.f32.mrf.mxu0
        %882 = vmatprep.mubr.bf16.mxu0 0
        %883 = vmatmul.mubr.bf16.gmra.mxu0 %v721
        %v884 = vpop.f32.mrf.mxu0
        %v885 = vadd.f32 0.0, %v884
        %v886 = vpop.f32.mrf.mxu0
        %v887 = vpop.f32.mrf.mxu0
        %v888 = vadd.f32 0.0, %v887
        %v889 = vpop.f32.mrf.mxu0
        %890 = vmatprep.mubr.bf16.mxu0 0
        %891 = vmatmul.mubr.bf16.gmra.mxu0 %v722
        %v892 = vpop.f32.mrf.mxu0
        %v893 = vadd.f32 0.0, %v892
        %v894 = vpop.f32.mrf.mxu0
        %v895 = vpop.f32.mrf.mxu0
        %v896 = vadd.f32 0.0, %v895
        %v897 = vpop.f32.mrf.mxu0
        %898 = vmatprep.mubr.bf16.mxu0 0
        %899 = vmatmul.mubr.bf16.gmra.mxu0 %v723
        %v900 = vpop.f32.mrf.mxu0
        %v901 = vadd.f32 0.0, %v900
        %v902 = vpop.f32.mrf.mxu0
        %v903 = vpop.f32.mrf.mxu0
        %v904 = vadd.f32 0.0, %v903
        %v905 = vpop.f32.mrf.mxu0
        %906 = vmatprep.mubr.bf16.mxu0 0
        %907 = vmatmul.mubr.bf16.gmra.mxu0 %v724
        %v908 = vpop.f32.mrf.mxu0
        %v909 = vadd.f32 0.0, %v908
        %v910 = vpop.f32.mrf.mxu0
        %v911 = vpop.f32.mrf.mxu0
        %v912 = vadd.f32 0.0, %v911
        %v913 = vpop.f32.mrf.mxu0
        %914 = vmatprep.mubr.bf16.mxu0 0
        %915 = vmatmul.mubr.bf16.gmra.mxu0 %v725
        %v916 = vpop.f32.mrf.mxu0
        %v917 = vadd.f32 0.0, %v916
        %v918 = vpop.f32.mrf.mxu0
        %v919 = vpop.f32.mrf.mxu0
        %v920 = vadd.f32 0.0, %v919
        %v921 = vpop.f32.mrf.mxu0
        %922 = vmatprep.mubr.bf16.mxu0 0
        %923 = vmatmul.mubr.bf16.gmra.mxu0 %v726
        %v924 = vpop.f32.mrf.mxu0
        %v925 = vadd.f32 0.0, %v924
        %v926 = vpop.f32.mrf.mxu0
        %v927 = vpop.f32.mrf.mxu0
        %v928 = vadd.f32 0.0, %v927
        %v929 = vpop.f32.mrf.mxu0
        %930 = vmatprep.mubr.bf16.mxu0 0
        %931 = vmatmul.mubr.bf16.gmra.mxu0 %v727
        %v932 = vpop.f32.mrf.mxu0
        %v933 = vadd.f32 0.0, %v932
        %v934 = vpop.f32.mrf.mxu0
        %v935 = vpop.f32.mrf.mxu0
        %v936 = vadd.f32 0.0, %v935
        %v937 = vpop.f32.mrf.mxu0
        %938 = vmatprep.mubr.bf16.mxu0 0
        %939 = vmatmul.mubr.bf16.gmra.mxu0 %v728
        %v940 = vpop.f32.mrf.mxu0
        %v941 = vadd.f32 0.0, %v940
        %v942 = vpop.f32.mrf.mxu0
        %v943 = vpop.f32.mrf.mxu0
        %v944 = vadd.f32 0.0, %v943
        %v945 = vpop.f32.mrf.mxu0
        %946 = vmatprep.mubr.bf16.mxu0 0
        %947 = vmatmul.mubr.bf16.gmra.mxu0 %v729
        %v948 = vpop.f32.mrf.mxu0
        %v949 = vadd.f32 0.0, %v948
        %v950 = vpop.f32.mrf.mxu0
        %v951 = vpop.f32.mrf.mxu0
        %v952 = vadd.f32 0.0, %v951
        %v953 = vpop.f32.mrf.mxu0
        %954 = vdwg.mxu0
        %v987 = vunpack.c.l.b16 %v214
        %v988 = vunpack.c.l.b16 %v215
        %v989 = vunpack.c.l.b16 %v216
        %v990 = vunpack.c.l.b16 %v217
        %v991 = vunpack.c.l.b16 %v218
        %v992 = vunpack.c.l.b16 %v219
        %v993 = vunpack.c.l.b16 %v220
        %v994 = vunpack.c.l.b16 %v221
        %v995 = vunpack.c.l.b16 %v222
        %v996 = vunpack.c.l.b16 %v223
        %v997 = vunpack.c.l.b16 %v224
        %v998 = vunpack.c.l.b16 %v225
        %v999 = vunpack.c.l.b16 %v226
        %v1000 = vunpack.c.l.b16 %v227
        %v1001 = vunpack.c.l.b16 %v228
        %v1002 = vunpack.c.l.b16 %v229
        %v1003 = vunpack.c.l.b16 %v230
        %v1004 = vunpack.c.l.b16 %v231
        %v1005 = vunpack.c.l.b16 %v232
        %v1006 = vunpack.c.l.b16 %v233
        %v1007 = vunpack.c.l.b16 %v234
        %v1008 = vunpack.c.l.b16 %v235
        %v1009 = vunpack.c.l.b16 %v236
        %v1010 = vunpack.c.l.b16 %v237
        %v1011 = vunpack.c.l.b16 %v238
        %v1012 = vunpack.c.l.b16 %v239
        %v1013 = vunpack.c.l.b16 %v240
        %v1014 = vunpack.c.l.b16 %v241
        %v1015 = vunpack.c.l.b16 %v242
        %v1016 = vunpack.c.l.b16 %v243
        %v1017 = vunpack.c.l.b16 %v244
        %v1018 = vunpack.c.l.b16 %v245
        %v1019 = vpack.c.b16 %v988, %v987
        %v1020 = vpack.c.b16 %v990, %v989
        %v1021 = vpack.c.b16 %v992, %v991
        %v1022 = vpack.c.b16 %v994, %v993
        %v1023 = vpack.c.b16 %v996, %v995
        %v1024 = vpack.c.b16 %v998, %v997
        %v1025 = vpack.c.b16 %v1000, %v999
        %v1026 = vpack.c.b16 %v1002, %v1001
        %v1027 = vpack.c.b16 %v1004, %v1003
        %v1028 = vpack.c.b16 %v1006, %v1005
        %v1029 = vpack.c.b16 %v1008, %v1007
        %v1030 = vpack.c.b16 %v1010, %v1009
        %v1031 = vpack.c.b16 %v1012, %v1011
        %v1032 = vpack.c.b16 %v1014, %v1013
        %v1033 = vpack.c.b16 %v1016, %v1015
        %v1034 = vpack.c.b16 %v1018, %v1017
        %v1067 = vunpack.c.l.b16 %v246
        %v1068 = vunpack.c.l.b16 %v247
        %v1069 = vunpack.c.l.b16 %v248
        %v1070 = vunpack.c.l.b16 %v249
        %v1071 = vunpack.c.l.b16 %v250
        %v1072 = vunpack.c.l.b16 %v251
        %v1073 = vunpack.c.l.b16 %v252
        %v1074 = vunpack.c.l.b16 %v253
        %v1075 = vunpack.c.l.b16 %v254
        %v1076 = vunpack.c.l.b16 %v255
        %v1077 = vunpack.c.l.b16 %v256
        %v1078 = vunpack.c.l.b16 %v257
        %v1079 = vunpack.c.l.b16 %v258
        %v1080 = vunpack.c.l.b16 %v259
        %v1081 = vunpack.c.l.b16 %v260
        %v1082 = vunpack.c.l.b16 %v261
        %v1083 = vpack.c.b16 %v1068, %v1067
        %v1084 = vpack.c.b16 %v1070, %v1069
        %v1085 = vpack.c.b16 %v1072, %v1071
        %v1086 = vpack.c.b16 %v1074, %v1073
        %v1087 = vpack.c.b16 %v1076, %v1075
        %v1088 = vpack.c.b16 %v1078, %v1077
        %v1089 = vpack.c.b16 %v1080, %v1079
        %v1090 = vpack.c.b16 %v1082, %v1081
        %1099 = vmatprep.subr.bf16.mxu0 0
        %1100 = vmatpush1.bf16.msra.mxu0 %v1090
        %1101 = vmatprep.subr.bf16.mxu0 0
        %1102 = vmatpush1.bf16.msra.mxu0 %v1089
        %1103 = vmatprep.subr.bf16.mxu0 0
        %1104 = vmatpush1.bf16.msra.mxu0 %v1088
        %1105 = vmatprep.subr.bf16.mxu0 0
        %1106 = vmatpush1.bf16.msra.mxu0 %v1087
        %1107 = vmatprep.subr.bf16.mxu0 0
        %1108 = vmatpush1.bf16.msra.mxu0 %v1086
        %1109 = vmatprep.subr.bf16.mxu0 0
        %1110 = vmatpush1.bf16.msra.mxu0 %v1085
        %1111 = vmatprep.subr.bf16.mxu0 0
        %1112 = vmatpush1.bf16.msra.mxu0 %v1084
        %1113 = vmatprep.subr.bf16.mxu0 0
        %1114 = vmatpush1.bf16.msra.mxu0 %v1083
        %1115 = vmatprep.subr.bf16.mxu0 0
        %1116 = vmatpush2.bf16.msra.mxu0 0
        %1117 = vmatprep.subr.bf16.mxu0 0
        %1118 = vmatpush2.bf16.msra.mxu0 0
        %1119 = vmatprep.subr.bf16.mxu0 0
        %1120 = vmatpush2.bf16.msra.mxu0 0
        %1121 = vmatprep.subr.bf16.mxu0 0
        %1122 = vmatpush2.bf16.msra.mxu0 0
        %1123 = vmatprep.subr.bf16.mxu0 0
        %1124 = vmatpush2.bf16.msra.mxu0 0
        %1125 = vmatprep.subr.bf16.mxu0 0
        %1126 = vmatpush2.bf16.msra.mxu0 0
        %1127 = vmatprep.subr.bf16.mxu0 0
        %1128 = vmatpush2.bf16.msra.mxu0 0
        %1129 = vmatprep.subr.bf16.mxu0 0
        %1130 = vmatpush2.bf16.msra.mxu0 0
        %1131 = vmatprep.mubr.bf16.mxu0 0
        %1132 = vmatmul.mubr.bf16.gmra.mxu0 %v1019
        %v1133 = vpop.f32.mrf.mxu0
        %v1134 = vadd.f32 %v829, %v1133
        %v1135 = vpop.f32.mrf.mxu0
        %v1136 = vpop.f32.mrf.mxu0
        %v1137 = vadd.f32 %v832, %v1136
        %v1138 = vpop.f32.mrf.mxu0
        %1139 = vmatprep.mubr.bf16.mxu0 0
        %1140 = vmatmul.mubr.bf16.gmra.mxu0 %v1020
        %v1141 = vpop.f32.mrf.mxu0
        %v1142 = vadd.f32 %v837, %v1141
        %v1143 = vpop.f32.mrf.mxu0
        %v1144 = vpop.f32.mrf.mxu0
        %v1145 = vadd.f32 %v840, %v1144
        %v1146 = vpop.f32.mrf.mxu0
        %1147 = vmatprep.mubr.bf16.mxu0 0
        %1148 = vmatmul.mubr.bf16.gmra.mxu0 %v1021
        %v1149 = vpop.f32.mrf.mxu0
        %v1150 = vadd.f32 %v845, %v1149
        %v1151 = vpop.f32.mrf.mxu0
        %v1152 = vpop.f32.mrf.mxu0
        %v1153 = vadd.f32 %v848, %v1152
        %v1154 = vpop.f32.mrf.mxu0
        %1155 = vmatprep.mubr.bf16.mxu0 0
        %1156 = vmatmul.mubr.bf16.gmra.mxu0 %v1022
        %v1157 = vpop.f32.mrf.mxu0
        %v1158 = vadd.f32 %v853, %v1157
        %v1159 = vpop.f32.mrf.mxu0
        %v1160 = vpop.f32.mrf.mxu0
        %v1161 = vadd.f32 %v856, %v1160
        %v1162 = vpop.f32.mrf.mxu0
        %1163 = vmatprep.mubr.bf16.mxu0 0
        %1164 = vmatmul.mubr.bf16.gmra.mxu0 %v1023
        %v1165 = vpop.f32.mrf.mxu0
        %v1166 = vadd.f32 %v861, %v1165
        %v1167 = vpop.f32.mrf.mxu0
        %v1168 = vpop.f32.mrf.mxu0
        %v1169 = vadd.f32 %v864, %v1168
        %v1170 = vpop.f32.mrf.mxu0
        %1171 = vmatprep.mubr.bf16.mxu0 0
        %1172 = vmatmul.mubr.bf16.gmra.mxu0 %v1024
        %v1173 = vpop.f32.mrf.mxu0
        %v1174 = vadd.f32 %v869, %v1173
        %v1175 = vpop.f32.mrf.mxu0
        %v1176 = vpop.f32.mrf.mxu0
        %v1177 = vadd.f32 %v872, %v1176
        %v1178 = vpop.f32.mrf.mxu0
        %1179 = vmatprep.mubr.bf16.mxu0 0
        %1180 = vmatmul.mubr.bf16.gmra.mxu0 %v1025
        %v1181 = vpop.f32.mrf.mxu0
        %v1182 = vadd.f32 %v877, %v1181
        %v1183 = vpop.f32.mrf.mxu0
        %v1184 = vpop.f32.mrf.mxu0
        %v1185 = vadd.f32 %v880, %v1184
        %v1186 = vpop.f32.mrf.mxu0
        %1187 = vmatprep.mubr.bf16.mxu0 0
        %1188 = vmatmul.mubr.bf16.gmra.mxu0 %v1026
        %v1189 = vpop.f32.mrf.mxu0
        %v1190 = vadd.f32 %v885, %v1189
        %v1191 = vpop.f32.mrf.mxu0
        %v1192 = vpop.f32.mrf.mxu0
        %v1193 = vadd.f32 %v888, %v1192
        %v1194 = vpop.f32.mrf.mxu0
        %1195 = vmatprep.mubr.bf16.mxu0 0
        %1196 = vmatmul.mubr.bf16.gmra.mxu0 %v1027
        %v1197 = vpop.f32.mrf.mxu0
        %v1198 = vadd.f32 %v893, %v1197
        %v1199 = vpop.f32.mrf.mxu0
        %v1200 = vpop.f32.mrf.mxu0
        %v1201 = vadd.f32 %v896, %v1200
        %v1202 = vpop.f32.mrf.mxu0
        %1203 = vmatprep.mubr.bf16.mxu0 0
        %1204 = vmatmul.mubr.bf16.gmra.mxu0 %v1028
        %v1205 = vpop.f32.mrf.mxu0
        %v1206 = vadd.f32 %v901, %v1205
        %v1207 = vpop.f32.mrf.mxu0
        %v1208 = vpop.f32.mrf.mxu0
        %v1209 = vadd.f32 %v904, %v1208
        %v1210 = vpop.f32.mrf.mxu0
        %1211 = vmatprep.mubr.bf16.mxu0 0
        %1212 = vmatmul.mubr.bf16.gmra.mxu0 %v1029
        %v1213 = vpop.f32.mrf.mxu0
        %v1214 = vadd.f32 %v909, %v1213
        %v1215 = vpop.f32.mrf.mxu0
        %v1216 = vpop.f32.mrf.mxu0
        %v1217 = vadd.f32 %v912, %v1216
        %v1218 = vpop.f32.mrf.mxu0
        %1219 = vmatprep.mubr.bf16.mxu0 0
        %1220 = vmatmul.mubr.bf16.gmra.mxu0 %v1030
        %v1221 = vpop.f32.mrf.mxu0
        %v1222 = vadd.f32 %v917, %v1221
        %v1223 = vpop.f32.mrf.mxu0
        %v1224 = vpop.f32.mrf.mxu0
        %v1225 = vadd.f32 %v920, %v1224
        %v1226 = vpop.f32.mrf.mxu0
        %1227 = vmatprep.mubr.bf16.mxu0 0
        %1228 = vmatmul.mubr.bf16.gmra.mxu0 %v1031
        %v1229 = vpop.f32.mrf.mxu0
        %v1230 = vadd.f32 %v925, %v1229
        %v1231 = vpop.f32.mrf.mxu0
        %v1232 = vpop.f32.mrf.mxu0
        %v1233 = vadd.f32 %v928, %v1232
        %v1234 = vpop.f32.mrf.mxu0
        %1235 = vmatprep.mubr.bf16.mxu0 0
        %1236 = vmatmul.mubr.bf16.gmra.mxu0 %v1032
        %v1237 = vpop.f32.mrf.mxu0
        %v1238 = vadd.f32 %v933, %v1237
        %v1239 = vpop.f32.mrf.mxu0
        %v1240 = vpop.f32.mrf.mxu0
        %v1241 = vadd.f32 %v936, %v1240
        %v1242 = vpop.f32.mrf.mxu0
        %1243 = vmatprep.mubr.bf16.mxu0 0
        %1244 = vmatmul.mubr.bf16.gmra.mxu0 %v1033
        %v1245 = vpop.f32.mrf.mxu0
        %v1246 = vadd.f32 %v941, %v1245
        %v1247 = vpop.f32.mrf.mxu0
        %v1248 = vpop.f32.mrf.mxu0
        %v1249 = vadd.f32 %v944, %v1248
        %v1250 = vpop.f32.mrf.mxu0
        %1251 = vmatprep.mubr.bf16.mxu0 0
        %1252 = vmatmul.mubr.bf16.gmra.mxu0 %v1034
        %v1253 = vpop.f32.mrf.mxu0
        %v1254 = vadd.f32 %v949, %v1253
        %v1255 = vpop.f32.mrf.mxu0
        %v1256 = vpop.f32.mrf.mxu0
        %v1257 = vadd.f32 %v952, %v1256
        %v1258 = vpop.f32.mrf.mxu0
        %1259 = vdwg.mxu0
        %v1260 = vld [vmem:[%s208] sm:$0xe]
        %v1261 = vld [vmem:[%s208 + $0xc] sm:$0xe]
        %v1262 = vld [vmem:[%s208 + $0x18] sm:$0xe]
        %v1263 = vld [vmem:[%s208 + $0x24] sm:$0xe]
        %v1264 = vld [vmem:[%s208 + $0x30] sm:$0xe]
        %v1265 = vld [vmem:[%s208 + $0x3c] sm:$0xe]
        %v1266 = vld [vmem:[%s208 + $0x48] sm:$0xe]
        %v1267 = vld [vmem:[%s208 + $0x54] sm:$0xe]
        %v1268 = vld [vmem:[%s208 + $0x60] sm:$0xe]
        %v1269 = vld [vmem:[%s208 + $0x6c] sm:$0xe]
        %v1270 = vld [vmem:[%s208 + $0x78] sm:$0xe]
        %v1271 = vld [vmem:[%s208 + $0x84] sm:$0xe]
        %v1272 = vld [vmem:[%s208 + $0x90] sm:$0xe]
        %v1273 = vld [vmem:[%s208 + $0x9c] sm:$0xe]
        %v1274 = vld [vmem:[%s208 + $0xa8] sm:$0xe]
        %v1275 = vld [vmem:[%s208 + $0xb4] sm:$0xe]
        %vm1308 = vcmask 1042432
        %vm1309 = vcmask 1046532
        %vm1310 = vmor %vm1308, %vm1309
        %v1311 = vrot.slane %v1260, 5
        %v1312 = vrot.slane %v1311, 4
        %v1313 = vrot.slane %v215, 5
        %v1314 = vsel %vm1310, %v1312, %v1313
        %v1315 = vrot.slane %v1313, 4
        %v1316 = vrot.slane %v262, 5
        %v1317 = vsel %vm1310, %v1315, %v1316
        %v1318 = vrot.slane %v1261, 5
        %v1319 = vrot.slane %v1318, 4
        %v1320 = vrot.slane %v217, 5
        %v1321 = vsel %vm1310, %v1319, %v1320
        %v1322 = vrot.slane %v1320, 4
        %v1323 = vrot.slane %v263, 5
        %v1324 = vsel %vm1310, %v1322, %v1323
        %v1325 = vrot.slane %v1262, 5
        %v1326 = vrot.slane %v1325, 4
        %v1327 = vrot.slane %v219, 5
        %v1328 = vsel %vm1310, %v1326, %v1327
        %v1329 = vrot.slane %v1327, 4
        %v1330 = vrot.slane %v264, 5
        %v1331 = vsel %vm1310, %v1329, %v1330
        %v1332 = vrot.slane %v1263, 5
        %v1333 = vrot.slane %v1332, 4
        %v1334 = vrot.slane %v221, 5
        %v1335 = vsel %vm1310, %v1333, %v1334
        %v1336 = vrot.slane %v1334, 4
        %v1337 = vrot.slane %v265, 5
        %v1338 = vsel %vm1310, %v1336, %v1337
        %v1339 = vrot.slane %v1264, 5
        %v1340 = vrot.slane %v1339, 4
        %v1341 = vrot.slane %v223, 5
        %v1342 = vsel %vm1310, %v1340, %v1341
        %v1343 = vrot.slane %v1341, 4
        %v1344 = vrot.slane %v266, 5
        %v1345 = vsel %vm1310, %v1343, %v1344
        %v1346 = vrot.slane %v1265, 5
        %v1347 = vrot.slane %v1346, 4
        %v1348 = vrot.slane %v225, 5
        %v1349 = vsel %vm1310, %v1347, %v1348
        %v1350 = vrot.slane %v1348, 4
        %v1351 = vrot.slane %v267, 5
        %v1352 = vsel %vm1310, %v1350, %v1351
        %v1353 = vrot.slane %v1266, 5
        %v1354 = vrot.slane %v1353, 4
        %v1355 = vrot.slane %v227, 5
        %v1356 = vsel %vm1310, %v1354, %v1355
        %v1357 = vrot.slane %v1355, 4
        %v1358 = vrot.slane %v268, 5
        %v1359 = vsel %vm1310, %v1357, %v1358
        %v1360 = vrot.slane %v1267, 5
        %v1361 = vrot.slane %v1360, 4
        %v1362 = vrot.slane %v229, 5
        %v1363 = vsel %vm1310, %v1361, %v1362
        %v1364 = vrot.slane %v1362, 4
        %v1365 = vrot.slane %v269, 5
        %v1366 = vsel %vm1310, %v1364, %v1365
        %v1367 = vrot.slane %v1268, 5
        %v1368 = vrot.slane %v1367, 4
        %v1369 = vrot.slane %v231, 5
        %v1370 = vsel %vm1310, %v1368, %v1369
        %v1371 = vrot.slane %v1369, 4
        %v1372 = vrot.slane %v270, 5
        %v1373 = vsel %vm1310, %v1371, %v1372
        %v1374 = vrot.slane %v1269, 5
        %v1375 = vrot.slane %v1374, 4
        %v1376 = vrot.slane %v233, 5
        %v1377 = vsel %vm1310, %v1375, %v1376
        %v1378 = vrot.slane %v1376, 4
        %v1379 = vrot.slane %v271, 5
        %v1380 = vsel %vm1310, %v1378, %v1379
        %v1381 = vrot.slane %v1270, 5
        %v1382 = vrot.slane %v1381, 4
        %v1383 = vrot.slane %v235, 5
        %v1384 = vsel %vm1310, %v1382, %v1383
        %v1385 = vrot.slane %v1383, 4
        %v1386 = vrot.slane %v272, 5
        %v1387 = vsel %vm1310, %v1385, %v1386
        %v1388 = vrot.slane %v1271, 5
        %v1389 = vrot.slane %v1388, 4
        %v1390 = vrot.slane %v237, 5
        %v1391 = vsel %vm1310, %v1389, %v1390
        %v1392 = vrot.slane %v1390, 4
        %v1393 = vrot.slane %v273, 5
        %v1394 = vsel %vm1310, %v1392, %v1393
        %v1395 = vrot.slane %v1272, 5
        %v1396 = vrot.slane %v1395, 4
        %v1397 = vrot.slane %v239, 5
        %v1398 = vsel %vm1310, %v1396, %v1397
        %v1399 = vrot.slane %v1397, 4
        %v1400 = vrot.slane %v274, 5
        %v1401 = vsel %vm1310, %v1399, %v1400
        %v1402 = vrot.slane %v1273, 5
        %v1403 = vrot.slane %v1402, 4
        %v1404 = vrot.slane %v241, 5
        %v1405 = vsel %vm1310, %v1403, %v1404
        %v1406 = vrot.slane %v1404, 4
        %v1407 = vrot.slane %v275, 5
        %v1408 = vsel %vm1310, %v1406, %v1407
        %v1409 = vrot.slane %v1274, 5
        %v1410 = vrot.slane %v1409, 4
        %v1411 = vrot.slane %v243, 5
        %v1412 = vsel %vm1310, %v1410, %v1411
        %v1413 = vrot.slane %v1411, 4
        %v1414 = vrot.slane %v276, 5
        %v1415 = vsel %vm1310, %v1413, %v1414
        %v1416 = vrot.slane %v1275, 5
        %v1417 = vrot.slane %v1416, 4
        %v1418 = vrot.slane %v245, 5
        %v1419 = vsel %vm1310, %v1417, %v1418
        %v1420 = vrot.slane %v1418, 4
        %v1421 = vrot.slane %v277, 5
        %v1422 = vsel %vm1310, %v1420, %v1421
        %s1423 = scalar_lea.vmem %s212, 128
        %v1424 = vld [vmem:[%s1423] sm:$0xf]
        %v1425 = vld [vmem:[%s1423 + $0x4] sm:$0xf]
        %v1426 = vld [vmem:[%s1423 + $0x8] sm:$0xf]
        %v1427 = vld [vmem:[%s1423 + $0xc] sm:$0xf]
        %v1428 = vld [vmem:[%s1423 + $0x10] sm:$0xf]
        %v1429 = vld [vmem:[%s1423 + $0x14] sm:$0xf]
        %v1430 = vld [vmem:[%s1423 + $0x18] sm:$0xf]
        %v1431 = vld [vmem:[%s1423 + $0x1c] sm:$0xf]
        %v1432 = vld [vmem:[%s1423 + $0x20] sm:$0xf]
        %v1433 = vld [vmem:[%s1423 + $0x24] sm:$0xf]
        %v1434 = vld [vmem:[%s1423 + $0x28] sm:$0xf]
        %v1435 = vld [vmem:[%s1423 + $0x2c] sm:$0xf]
        %v1436 = vld [vmem:[%s1423 + $0x30] sm:$0xf]
        %v1437 = vld [vmem:[%s1423 + $0x34] sm:$0xf]
        %v1438 = vld [vmem:[%s1423 + $0x38] sm:$0xf]
        %v1439 = vld [vmem:[%s1423 + $0x3c] sm:$0xf]
        %v1440 = vunpack.c.l.b16 %v1314
        %v1441 = vunpack.c.l.b16 %v1317
        %v1442 = vunpack.c.l.b16 %v1321
        %v1443 = vunpack.c.l.b16 %v1324
        %v1444 = vunpack.c.l.b16 %v1328
        %v1445 = vunpack.c.l.b16 %v1331
        %v1446 = vunpack.c.l.b16 %v1335
        %v1447 = vunpack.c.l.b16 %v1338
        %v1448 = vunpack.c.l.b16 %v1342
        %v1449 = vunpack.c.l.b16 %v1345
        %v1450 = vunpack.c.l.b16 %v1349
        %v1451 = vunpack.c.l.b16 %v1352
        %v1452 = vunpack.c.l.b16 %v1356
        %v1453 = vunpack.c.l.b16 %v1359
        %v1454 = vunpack.c.l.b16 %v1363
        %v1455 = vunpack.c.l.b16 %v1366
        %v1456 = vunpack.c.l.b16 %v1370
        %v1457 = vunpack.c.l.b16 %v1373
        %v1458 = vunpack.c.l.b16 %v1377
        %v1459 = vunpack.c.l.b16 %v1380
        %v1460 = vunpack.c.l.b16 %v1384
        %v1461 = vunpack.c.l.b16 %v1387
        %v1462 = vunpack.c.l.b16 %v1391
        %v1463 = vunpack.c.l.b16 %v1394
        %v1464 = vunpack.c.l.b16 %v1398
        %v1465 = vunpack.c.l.b16 %v1401
        %v1466 = vunpack.c.l.b16 %v1405
        %v1467 = vunpack.c.l.b16 %v1408
        %v1468 = vunpack.c.l.b16 %v1412
        %v1469 = vunpack.c.l.b16 %v1415
        %v1470 = vunpack.c.l.b16 %v1419
        %v1471 = vunpack.c.l.b16 %v1422
        %v1472 = vpack.c.b16 %v1441, %v1440
        %v1473 = vpack.c.b16 %v1443, %v1442
        %v1474 = vpack.c.b16 %v1445, %v1444
        %v1475 = vpack.c.b16 %v1447, %v1446
        %v1476 = vpack.c.b16 %v1449, %v1448
        %v1477 = vpack.c.b16 %v1451, %v1450
        %v1478 = vpack.c.b16 %v1453, %v1452
        %v1479 = vpack.c.b16 %v1455, %v1454
        %v1480 = vpack.c.b16 %v1457, %v1456
        %v1481 = vpack.c.b16 %v1459, %v1458
        %v1482 = vpack.c.b16 %v1461, %v1460
        %v1483 = vpack.c.b16 %v1463, %v1462
        %v1484 = vpack.c.b16 %v1465, %v1464
        %v1485 = vpack.c.b16 %v1467, %v1466
        %v1486 = vpack.c.b16 %v1469, %v1468
        %v1487 = vpack.c.b16 %v1471, %v1470
        %v1520 = vunpack.c.l.b16 %v1424
        %v1521 = vunpack.c.l.b16 %v1425
        %v1522 = vunpack.c.l.b16 %v1426
        %v1523 = vunpack.c.l.b16 %v1427
        %v1524 = vunpack.c.l.b16 %v1428
        %v1525 = vunpack.c.l.b16 %v1429
        %v1526 = vunpack.c.l.b16 %v1430
        %v1527 = vunpack.c.l.b16 %v1431
        %v1528 = vunpack.c.l.b16 %v1432
        %v1529 = vunpack.c.l.b16 %v1433
        %v1530 = vunpack.c.l.b16 %v1434
        %v1531 = vunpack.c.l.b16 %v1435
        %v1532 = vunpack.c.l.b16 %v1436
        %v1533 = vunpack.c.l.b16 %v1437
        %v1534 = vunpack.c.l.b16 %v1438
        %v1535 = vunpack.c.l.b16 %v1439
        %v1536 = vpack.c.b16 %v1521, %v1520
        %v1537 = vpack.c.b16 %v1523, %v1522
        %v1538 = vpack.c.b16 %v1525, %v1524
        %v1539 = vpack.c.b16 %v1527, %v1526
        %v1540 = vpack.c.b16 %v1529, %v1528
        %v1541 = vpack.c.b16 %v1531, %v1530
        %v1542 = vpack.c.b16 %v1533, %v1532
        %v1543 = vpack.c.b16 %v1535, %v1534
        %1552 = vmatprep.subr.bf16.mxu0 0
        %1553 = vmatpush1.bf16.msra.mxu0 %v1543
        %1554 = vmatprep.subr.bf16.mxu0 0
        %1555 = vmatpush1.bf16.msra.mxu0 %v1542
        %1556 = vmatprep.subr.bf16.mxu0 0
        %1557 = vmatpush1.bf16.msra.mxu0 %v1541
        %1558 = vmatprep.subr.bf16.mxu0 0
        %1559 = vmatpush1.bf16.msra.mxu0 %v1540
        %1560 = vmatprep.subr.bf16.mxu0 0
        %1561 = vmatpush1.bf16.msra.mxu0 %v1539
        %1562 = vmatprep.subr.bf16.mxu0 0
        %1563 = vmatpush1.bf16.msra.mxu0 %v1538
        %1564 = vmatprep.subr.bf16.mxu0 0
        %1565 = vmatpush1.bf16.msra.mxu0 %v1537
        %1566 = vmatprep.subr.bf16.mxu0 0
        %1567 = vmatpush1.bf16.msra.mxu0 %v1536
        %1568 = vmatprep.subr.bf16.mxu0 0
        %1569 = vmatpush2.bf16.msra.mxu0 0
        %1570 = vmatprep.subr.bf16.mxu0 0
        %1571 = vmatpush2.bf16.msra.mxu0 0
        %1572 = vmatprep.subr.bf16.mxu0 0
        %1573 = vmatpush2.bf16.msra.mxu0 0
        %1574 = vmatprep.subr.bf16.mxu0 0
        %1575 = vmatpush2.bf16.msra.mxu0 0
        %1576 = vmatprep.subr.bf16.mxu0 0
        %1577 = vmatpush2.bf16.msra.mxu0 0
        %1578 = vmatprep.subr.bf16.mxu0 0
        %1579 = vmatpush2.bf16.msra.mxu0 0
        %1580 = vmatprep.subr.bf16.mxu0 0
        %1581 = vmatpush2.bf16.msra.mxu0 0
        %1582 = vmatprep.subr.bf16.mxu0 0
        %1583 = vmatpush2.bf16.msra.mxu0 0
        %1584 = vmatprep.mubr.bf16.mxu0 0
        %1585 = vmatmul.mubr.bf16.gmra.mxu0 %v1472
        %v1586 = vpop.f32.mrf.mxu0
        %v1587 = vadd.f32 0.0, %v1586
        %v1588 = vpop.f32.mrf.mxu0
        %v1589 = vpop.f32.mrf.mxu0
        %v1590 = vadd.f32 0.0, %v1589
        %v1591 = vpop.f32.mrf.mxu0
        %1592 = vmatprep.mubr.bf16.mxu0 0
        %1593 = vmatmul.mubr.bf16.gmra.mxu0 %v1473
        %v1594 = vpop.f32.mrf.mxu0
        %v1595 = vadd.f32 0.0, %v1594
        %v1596 = vpop.f32.mrf.mxu0
        %v1597 = vpop.f32.mrf.mxu0
        %v1598 = vadd.f32 0.0, %v1597
        %v1599 = vpop.f32.mrf.mxu0
        %1600 = vmatprep.mubr.bf16.mxu0 0
        %1601 = vmatmul.mubr.bf16.gmra.mxu0 %v1474
        %v1602 = vpop.f32.mrf.mxu0
        %v1603 = vadd.f32 0.0, %v1602
        %v1604 = vpop.f32.mrf.mxu0
        %v1605 = vpop.f32.mrf.mxu0
        %v1606 = vadd.f32 0.0, %v1605
        %v1607 = vpop.f32.mrf.mxu0
        %1608 = vmatprep.mubr.bf16.mxu0 0
        %1609 = vmatmul.mubr.bf16.gmra.mxu0 %v1475
        %v1610 = vpop.f32.mrf.mxu0
        %v1611 = vadd.f32 0.0, %v1610
        %v1612 = vpop.f32.mrf.mxu0
        %v1613 = vpop.f32.mrf.mxu0
        %v1614 = vadd.f32 0.0, %v1613
        %v1615 = vpop.f32.mrf.mxu0
        %1616 = vmatprep.mubr.bf16.mxu0 0
        %1617 = vmatmul.mubr.bf16.gmra.mxu0 %v1476
        %v1618 = vpop.f32.mrf.mxu0
        %v1619 = vadd.f32 0.0, %v1618
        %v1620 = vpop.f32.mrf.mxu0
        %v1621 = vpop.f32.mrf.mxu0
        %v1622 = vadd.f32 0.0, %v1621
        %v1623 = vpop.f32.mrf.mxu0
        %1624 = vmatprep.mubr.bf16.mxu0 0
        %1625 = vmatmul.mubr.bf16.gmra.mxu0 %v1477
        %v1626 = vpop.f32.mrf.mxu0
        %v1627 = vadd.f32 0.0, %v1626
        %v1628 = vpop.f32.mrf.mxu0
        %v1629 = vpop.f32.mrf.mxu0
        %v1630 = vadd.f32 0.0, %v1629
        %v1631 = vpop.f32.mrf.mxu0
        %1632 = vmatprep.mubr.bf16.mxu0 0
        %1633 = vmatmul.mubr.bf16.gmra.mxu0 %v1478
        %v1634 = vpop.f32.mrf.mxu0
        %v1635 = vadd.f32 0.0, %v1634
        %v1636 = vpop.f32.mrf.mxu0
        %v1637 = vpop.f32.mrf.mxu0
        %v1638 = vadd.f32 0.0, %v1637
        %v1639 = vpop.f32.mrf.mxu0
        %1640 = vmatprep.mubr.bf16.mxu0 0
        %1641 = vmatmul.mubr.bf16.gmra.mxu0 %v1479
        %v1642 = vpop.f32.mrf.mxu0
        %v1643 = vadd.f32 0.0, %v1642
        %v1644 = vpop.f32.mrf.mxu0
        %v1645 = vpop.f32.mrf.mxu0
        %v1646 = vadd.f32 0.0, %v1645
        %v1647 = vpop.f32.mrf.mxu0
        %1648 = vmatprep.mubr.bf16.mxu0 0
        %1649 = vmatmul.mubr.bf16.gmra.mxu0 %v1480
        %v1650 = vpop.f32.mrf.mxu0
        %v1651 = vadd.f32 0.0, %v1650
        %v1652 = vpop.f32.mrf.mxu0
        %v1653 = vpop.f32.mrf.mxu0
        %v1654 = vadd.f32 0.0, %v1653
        %v1655 = vpop.f32.mrf.mxu0
        %1656 = vmatprep.mubr.bf16.mxu0 0
        %1657 = vmatmul.mubr.bf16.gmra.mxu0 %v1481
        %v1658 = vpop.f32.mrf.mxu0
        %v1659 = vadd.f32 0.0, %v1658
        %v1660 = vpop.f32.mrf.mxu0
        %v1661 = vpop.f32.mrf.mxu0
        %v1662 = vadd.f32 0.0, %v1661
        %v1663 = vpop.f32.mrf.mxu0
        %1664 = vmatprep.mubr.bf16.mxu0 0
        %1665 = vmatmul.mubr.bf16.gmra.mxu0 %v1482
        %v1666 = vpop.f32.mrf.mxu0
        %v1667 = vadd.f32 0.0, %v1666
        %v1668 = vpop.f32.mrf.mxu0
        %v1669 = vpop.f32.mrf.mxu0
        %v1670 = vadd.f32 0.0, %v1669
        %v1671 = vpop.f32.mrf.mxu0
        %1672 = vmatprep.mubr.bf16.mxu0 0
        %1673 = vmatmul.mubr.bf16.gmra.mxu0 %v1483
        %v1674 = vpop.f32.mrf.mxu0
        %v1675 = vadd.f32 0.0, %v1674
        %v1676 = vpop.f32.mrf.mxu0
        %v1677 = vpop.f32.mrf.mxu0
        %v1678 = vadd.f32 0.0, %v1677
        %v1679 = vpop.f32.mrf.mxu0
        %1680 = vmatprep.mubr.bf16.mxu0 0
        %1681 = vmatmul.mubr.bf16.gmra.mxu0 %v1484
        %v1682 = vpop.f32.mrf.mxu0
        %v1683 = vadd.f32 0.0, %v1682
        %v1684 = vpop.f32.mrf.mxu0
        %v1685 = vpop.f32.mrf.mxu0
        %v1686 = vadd.f32 0.0, %v1685
        %v1687 = vpop.f32.mrf.mxu0
        %1688 = vmatprep.mubr.bf16.mxu0 0
        %1689 = vmatmul.mubr.bf16.gmra.mxu0 %v1485
        %v1690 = vpop.f32.mrf.mxu0
        %v1691 = vadd.f32 0.0, %v1690
        %v1692 = vpop.f32.mrf.mxu0
        %v1693 = vpop.f32.mrf.mxu0
        %v1694 = vadd.f32 0.0, %v1693
        %v1695 = vpop.f32.mrf.mxu0
        %1696 = vmatprep.mubr.bf16.mxu0 0
        %1697 = vmatmul.mubr.bf16.gmra.mxu0 %v1486
        %v1698 = vpop.f32.mrf.mxu0
        %v1699 = vadd.f32 0.0, %v1698
        %v1700 = vpop.f32.mrf.mxu0
        %v1701 = vpop.f32.mrf.mxu0
        %v1702 = vadd.f32 0.0, %v1701
        %v1703 = vpop.f32.mrf.mxu0
        %1704 = vmatprep.mubr.bf16.mxu0 0
        %1705 = vmatmul.mubr.bf16.gmra.mxu0 %v1487
        %v1706 = vpop.f32.mrf.mxu0
        %v1707 = vadd.f32 0.0, %v1706
        %v1708 = vpop.f32.mrf.mxu0
        %v1709 = vpop.f32.mrf.mxu0
        %v1710 = vadd.f32 0.0, %v1709
        %v1711 = vpop.f32.mrf.mxu0
        %1712 = vdwg.mxu0
        %v1713 = vadd.f32 %v1134, %v1587
        %v1714 = vadd.f32 %v1137, %v1590
        %v1715 = vadd.f32 %v1142, %v1595
        %v1716 = vadd.f32 %v1145, %v1598
        %v1717 = vadd.f32 %v1150, %v1603
        %v1718 = vadd.f32 %v1153, %v1606
        %v1719 = vadd.f32 %v1158, %v1611
        %v1720 = vadd.f32 %v1161, %v1614
        %v1721 = vadd.f32 %v1166, %v1619
        %v1722 = vadd.f32 %v1169, %v1622
        %v1723 = vadd.f32 %v1174, %v1627
        %v1724 = vadd.f32 %v1177, %v1630
        %v1725 = vadd.f32 %v1182, %v1635
        %v1726 = vadd.f32 %v1185, %v1638
        %v1727 = vadd.f32 %v1190, %v1643
        %v1728 = vadd.f32 %v1193, %v1646
        %v1729 = vadd.f32 %v1198, %v1651
        %v1730 = vadd.f32 %v1201, %v1654
        %v1731 = vadd.f32 %v1206, %v1659
        %v1732 = vadd.f32 %v1209, %v1662
        %v1733 = vadd.f32 %v1214, %v1667
        %v1734 = vadd.f32 %v1217, %v1670
        %v1735 = vadd.f32 %v1222, %v1675
        %v1736 = vadd.f32 %v1225, %v1678
        %v1737 = vadd.f32 %v1230, %v1683
        %v1738 = vadd.f32 %v1233, %v1686
        %v1739 = vadd.f32 %v1238, %v1691
        %v1740 = vadd.f32 %v1241, %v1694
        %v1741 = vadd.f32 %v1246, %v1699
        %v1742 = vadd.f32 %v1249, %v1702
        %v1743 = vadd.f32 %v1254, %v1707
        %v1744 = vadd.f32 %v1257, %v1710
        %s1745 = scalar_lea.vmem %s208, 12
        %v1746 = vld [vmem:[%s1745] sm:$0xf]
        %v1747 = vld [vmem:[%s1745 + $0x4] sm:$0xf]
        %v1748 = vld [vmem:[%s1745 + $0xc] sm:$0xf]
        %v1749 = vld [vmem:[%s1745 + $0x10] sm:$0xf]
        %v1750 = vld [vmem:[%s1745 + $0x18] sm:$0xf]
        %v1751 = vld [vmem:[%s1745 + $0x1c] sm:$0xf]
        %v1752 = vld [vmem:[%s1745 + $0x24] sm:$0xf]
        %v1753 = vld [vmem:[%s1745 + $0x28] sm:$0xf]
        %v1754 = vld [vmem:[%s1745 + $0x30] sm:$0xf]
        %v1755 = vld [vmem:[%s1745 + $0x34] sm:$0xf]
        %v1756 = vld [vmem:[%s1745 + $0x3c] sm:$0xf]
        %v1757 = vld [vmem:[%s1745 + $0x40] sm:$0xf]
        %v1758 = vld [vmem:[%s1745 + $0x48] sm:$0xf]
        %v1759 = vld [vmem:[%s1745 + $0x4c] sm:$0xf]
        %v1760 = vld [vmem:[%s1745 + $0x54] sm:$0xf]
        %v1761 = vld [vmem:[%s1745 + $0x58] sm:$0xf]
        %v1762 = vld [vmem:[%s1745 + $0x60] sm:$0xf]
        %v1763 = vld [vmem:[%s1745 + $0x64] sm:$0xf]
        %v1764 = vld [vmem:[%s1745 + $0x6c] sm:$0xf]
        %v1765 = vld [vmem:[%s1745 + $0x70] sm:$0xf]
        %v1766 = vld [vmem:[%s1745 + $0x78] sm:$0xf]
        %v1767 = vld [vmem:[%s1745 + $0x7c] sm:$0xf]
        %v1768 = vld [vmem:[%s1745 + $0x84] sm:$0xf]
        %v1769 = vld [vmem:[%s1745 + $0x88] sm:$0xf]
        %v1770 = vld [vmem:[%s1745 + $0x90] sm:$0xf]
        %v1771 = vld [vmem:[%s1745 + $0x94] sm:$0xf]
        %v1772 = vld [vmem:[%s1745 + $0x9c] sm:$0xf]
        %v1773 = vld [vmem:[%s1745 + $0xa0] sm:$0xf]
        %v1774 = vld [vmem:[%s1745 + $0xa8] sm:$0xf]
        %v1775 = vld [vmem:[%s1745 + $0xac] sm:$0xf]
        %v1776 = vld [vmem:[%s1745 + $0xb4] sm:$0xf]
        %v1777 = vld [vmem:[%s1745 + $0xb8] sm:$0xf]
        %s1778 = scalar_lea.vmem %s212, 192
        %v1779 = vld [vmem:[%s1778] sm:$0xf]
        %v1780 = vld [vmem:[%s1778 + $0x4] sm:$0xf]
        %v1781 = vld [vmem:[%s1778 + $0x8] sm:$0xf]
        %v1782 = vld [vmem:[%s1778 + $0xc] sm:$0xf]
        %v1783 = vld [vmem:[%s1778 + $0x10] sm:$0xf]
        %v1784 = vld [vmem:[%s1778 + $0x14] sm:$0xf]
        %v1785 = vld [vmem:[%s1778 + $0x18] sm:$0xf]
        %v1786 = vld [vmem:[%s1778 + $0x1c] sm:$0xf]
        %v1787 = vld [vmem:[%s1778 + $0x20] sm:$0xf]
        %v1788 = vld [vmem:[%s1778 + $0x24] sm:$0xf]
        %v1789 = vld [vmem:[%s1778 + $0x28] sm:$0xf]
        %v1790 = vld [vmem:[%s1778 + $0x2c] sm:$0xf]
        %v1791 = vld [vmem:[%s1778 + $0x30] sm:$0xf]
        %v1792 = vld [vmem:[%s1778 + $0x34] sm:$0xf]
        %v1793 = vld [vmem:[%s1778 + $0x38] sm:$0xf]
        %v1794 = vld [vmem:[%s1778 + $0x3c] sm:$0xf]
        %v1827 = vunpack.c.l.b16 %v1746
        %v1828 = vunpack.c.l.b16 %v1747
        %v1829 = vunpack.c.l.b16 %v1748
        %v1830 = vunpack.c.l.b16 %v1749
        %v1831 = vunpack.c.l.b16 %v1750
        %v1832 = vunpack.c.l.b16 %v1751
        %v1833 = vunpack.c.l.b16 %v1752
        %v1834 = vunpack.c.l.b16 %v1753
        %v1835 = vunpack.c.l.b16 %v1754
        %v1836 = vunpack.c.l.b16 %v1755
        %v1837 = vunpack.c.l.b16 %v1756
        %v1838 = vunpack.c.l.b16 %v1757
        %v1839 = vunpack.c.l.b16 %v1758
        %v1840 = vunpack.c.l.b16 %v1759
        %v1841 = vunpack.c.l.b16 %v1760
        %v1842 = vunpack.c.l.b16 %v1761
        %v1843 = vunpack.c.l.b16 %v1762
        %v1844 = vunpack.c.l.b16 %v1763
        %v1845 = vunpack.c.l.b16 %v1764
        %v1846 = vunpack.c.l.b16 %v1765
        %v1847 = vunpack.c.l.b16 %v1766
        %v1848 = vunpack.c.l.b16 %v1767
        %v1849 = vunpack.c.l.b16 %v1768
        %v1850 = vunpack.c.l.b16 %v1769
        %v1851 = vunpack.c.l.b16 %v1770
        %v1852 = vunpack.c.l.b16 %v1771
        %v1853 = vunpack.c.l.b16 %v1772
        %v1854 = vunpack.c.l.b16 %v1773
        %v1855 = vunpack.c.l.b16 %v1774
        %v1856 = vunpack.c.l.b16 %v1775
        %v1857 = vunpack.c.l.b16 %v1776
        %v1858 = vunpack.c.l.b16 %v1777
        %v1859 = vpack.c.b16 %v1828, %v1827
        %v1860 = vpack.c.b16 %v1830, %v1829
        %v1861 = vpack.c.b16 %v1832, %v1831
        %v1862 = vpack.c.b16 %v1834, %v1833
        %v1863 = vpack.c.b16 %v1836, %v1835
        %v1864 = vpack.c.b16 %v1838, %v1837
        %v1865 = vpack.c.b16 %v1840, %v1839
        %v1866 = vpack.c.b16 %v1842, %v1841
        %v1867 = vpack.c.b16 %v1844, %v1843
        %v1868 = vpack.c.b16 %v1846, %v1845
        %v1869 = vpack.c.b16 %v1848, %v1847
        %v1870 = vpack.c.b16 %v1850, %v1849
        %v1871 = vpack.c.b16 %v1852, %v1851
        %v1872 = vpack.c.b16 %v1854, %v1853
        %v1873 = vpack.c.b16 %v1856, %v1855
        %v1874 = vpack.c.b16 %v1858, %v1857
        %v1907 = vunpack.c.l.b16 %v1779
        %v1908 = vunpack.c.l.b16 %v1780
        %v1909 = vunpack.c.l.b16 %v1781
        %v1910 = vunpack.c.l.b16 %v1782
        %v1911 = vunpack.c.l.b16 %v1783
        %v1912 = vunpack.c.l.b16 %v1784
        %v1913 = vunpack.c.l.b16 %v1785
        %v1914 = vunpack.c.l.b16 %v1786
        %v1915 = vunpack.c.l.b16 %v1787
        %v1916 = vunpack.c.l.b16 %v1788
        %v1917 = vunpack.c.l.b16 %v1789
        %v1918 = vunpack.c.l.b16 %v1790
        %v1919 = vunpack.c.l.b16 %v1791
        %v1920 = vunpack.c.l.b16 %v1792
        %v1921 = vunpack.c.l.b16 %v1793
        %v1922 = vunpack.c.l.b16 %v1794
        %v1923 = vpack.c.b16 %v1908, %v1907
        %v1924 = vpack.c.b16 %v1910, %v1909
        %v1925 = vpack.c.b16 %v1912, %v1911
        %v1926 = vpack.c.b16 %v1914, %v1913
        %v1927 = vpack.c.b16 %v1916, %v1915
        %v1928 = vpack.c.b16 %v1918, %v1917
        %v1929 = vpack.c.b16 %v1920, %v1919
        %v1930 = vpack.c.b16 %v1922, %v1921
        %1939 = vmatprep.subr.bf16.mxu0 0
        %1940 = vmatpush1.bf16.msra.mxu0 %v1930
        %1941 = vmatprep.subr.bf16.mxu0 0
        %1942 = vmatpush1.bf16.msra.mxu0 %v1929
        %1943 = vmatprep.subr.bf16.mxu0 0
        %1944 = vmatpush1.bf16.msra.mxu0 %v1928
        %1945 = vmatprep.subr.bf16.mxu0 0
        %1946 = vmatpush1.bf16.msra.mxu0 %v1927
        %1947 = vmatprep.subr.bf16.mxu0 0
        %1948 = vmatpush1.bf16.msra.mxu0 %v1926
        %1949 = vmatprep.subr.bf16.mxu0 0
        %1950 = vmatpush1.bf16.msra.mxu0 %v1925
        %1951 = vmatprep.subr.bf16.mxu0 0
        %1952 = vmatpush1.bf16.msra.mxu0 %v1924
        %1953 = vmatprep.subr.bf16.mxu0 0
        %1954 = vmatpush1.bf16.msra.mxu0 %v1923
        %1955 = vmatprep.subr.bf16.mxu0 0
        %1956 = vmatpush2.bf16.msra.mxu0 0
        %1957 = vmatprep.subr.bf16.mxu0 0
        %1958 = vmatpush2.bf16.msra.mxu0 0
        %1959 = vmatprep.subr.bf16.mxu0 0
        %1960 = vmatpush2.bf16.msra.mxu0 0
        %1961 = vmatprep.subr.bf16.mxu0 0
        %1962 = vmatpush2.bf16.msra.mxu0 0
        %1963 = vmatprep.subr.bf16.mxu0 0
        %1964 = vmatpush2.bf16.msra.mxu0 0
        %1965 = vmatprep.subr.bf16.mxu0 0
        %1966 = vmatpush2.bf16.msra.mxu0 0
        %1967 = vmatprep.subr.bf16.mxu0 0
        %1968 = vmatpush2.bf16.msra.mxu0 0
        %1969 = vmatprep.subr.bf16.mxu0 0
        %1970 = vmatpush2.bf16.msra.mxu0 0
        %1971 = vmatprep.mubr.bf16.mxu0 0
        %1972 = vmatmul.mubr.bf16.gmra.mxu0 %v1859
        %v1973 = vpop.f32.mrf.mxu0
        %v1974 = vadd.f32 0.0, %v1973
        %v1975 = vpop.f32.mrf.mxu0
        %v1976 = vpop.f32.mrf.mxu0
        %v1977 = vadd.f32 0.0, %v1976
        %v1978 = vpop.f32.mrf.mxu0
        %1979 = vmatprep.mubr.bf16.mxu0 0
        %1980 = vmatmul.mubr.bf16.gmra.mxu0 %v1860
        %v1981 = vpop.f32.mrf.mxu0
        %v1982 = vadd.f32 0.0, %v1981
        %v1983 = vpop.f32.mrf.mxu0
        %v1984 = vpop.f32.mrf.mxu0
        %v1985 = vadd.f32 0.0, %v1984
        %v1986 = vpop.f32.mrf.mxu0
        %1987 = vmatprep.mubr.bf16.mxu0 0
        %1988 = vmatmul.mubr.bf16.gmra.mxu0 %v1861
        %v1989 = vpop.f32.mrf.mxu0
        %v1990 = vadd.f32 0.0, %v1989
        %v1991 = vpop.f32.mrf.mxu0
        %v1992 = vpop.f32.mrf.mxu0
        %v1993 = vadd.f32 0.0, %v1992
        %v1994 = vpop.f32.mrf.mxu0
        %1995 = vmatprep.mubr.bf16.mxu0 0
        %1996 = vmatmul.mubr.bf16.gmra.mxu0 %v1862
        %v1997 = vpop.f32.mrf.mxu0
        %v1998 = vadd.f32 0.0, %v1997
        %v1999 = vpop.f32.mrf.mxu0
        %v2000 = vpop.f32.mrf.mxu0
        %v2001 = vadd.f32 0.0, %v2000
        %v2002 = vpop.f32.mrf.mxu0
        %2003 = vmatprep.mubr.bf16.mxu0 0
        %2004 = vmatmul.mubr.bf16.gmra.mxu0 %v1863
        %v2005 = vpop.f32.mrf.mxu0
        %v2006 = vadd.f32 0.0, %v2005
        %v2007 = vpop.f32.mrf.mxu0
        %v2008 = vpop.f32.mrf.mxu0
        %v2009 = vadd.f32 0.0, %v2008
        %v2010 = vpop.f32.mrf.mxu0
        %2011 = vmatprep.mubr.bf16.mxu0 0
        %2012 = vmatmul.mubr.bf16.gmra.mxu0 %v1864
        %v2013 = vpop.f32.mrf.mxu0
        %v2014 = vadd.f32 0.0, %v2013
        %v2015 = vpop.f32.mrf.mxu0
        %v2016 = vpop.f32.mrf.mxu0
        %v2017 = vadd.f32 0.0, %v2016
        %v2018 = vpop.f32.mrf.mxu0
        %2019 = vmatprep.mubr.bf16.mxu0 0
        %2020 = vmatmul.mubr.bf16.gmra.mxu0 %v1865
        %v2021 = vpop.f32.mrf.mxu0
        %v2022 = vadd.f32 0.0, %v2021
        %v2023 = vpop.f32.mrf.mxu0
        %v2024 = vpop.f32.mrf.mxu0
        %v2025 = vadd.f32 0.0, %v2024
        %v2026 = vpop.f32.mrf.mxu0
        %2027 = vmatprep.mubr.bf16.mxu0 0
        %2028 = vmatmul.mubr.bf16.gmra.mxu0 %v1866
        %v2029 = vpop.f32.mrf.mxu0
        %v2030 = vadd.f32 0.0, %v2029
        %v2031 = vpop.f32.mrf.mxu0
        %v2032 = vpop.f32.mrf.mxu0
        %v2033 = vadd.f32 0.0, %v2032
        %v2034 = vpop.f32.mrf.mxu0
        %2035 = vmatprep.mubr.bf16.mxu0 0
        %2036 = vmatmul.mubr.bf16.gmra.mxu0 %v1867
        %v2037 = vpop.f32.mrf.mxu0
        %v2038 = vadd.f32 0.0, %v2037
        %v2039 = vpop.f32.mrf.mxu0
        %v2040 = vpop.f32.mrf.mxu0
        %v2041 = vadd.f32 0.0, %v2040
        %v2042 = vpop.f32.mrf.mxu0
        %2043 = vmatprep.mubr.bf16.mxu0 0
        %2044 = vmatmul.mubr.bf16.gmra.mxu0 %v1868
        %v2045 = vpop.f32.mrf.mxu0
        %v2046 = vadd.f32 0.0, %v2045
        %v2047 = vpop.f32.mrf.mxu0
        %v2048 = vpop.f32.mrf.mxu0
        %v2049 = vadd.f32 0.0, %v2048
        %v2050 = vpop.f32.mrf.mxu0
        %2051 = vmatprep.mubr.bf16.mxu0 0
        %2052 = vmatmul.mubr.bf16.gmra.mxu0 %v1869
        %v2053 = vpop.f32.mrf.mxu0
        %v2054 = vadd.f32 0.0, %v2053
        %v2055 = vpop.f32.mrf.mxu0
        %v2056 = vpop.f32.mrf.mxu0
        %v2057 = vadd.f32 0.0, %v2056
        %v2058 = vpop.f32.mrf.mxu0
        %2059 = vmatprep.mubr.bf16.mxu0 0
        %2060 = vmatmul.mubr.bf16.gmra.mxu0 %v1870
        %v2061 = vpop.f32.mrf.mxu0
        %v2062 = vadd.f32 0.0, %v2061
        %v2063 = vpop.f32.mrf.mxu0
        %v2064 = vpop.f32.mrf.mxu0
        %v2065 = vadd.f32 0.0, %v2064
        %v2066 = vpop.f32.mrf.mxu0
        %2067 = vmatprep.mubr.bf16.mxu0 0
        %2068 = vmatmul.mubr.bf16.gmra.mxu0 %v1871
        %v2069 = vpop.f32.mrf.mxu0
        %v2070 = vadd.f32 0.0, %v2069
        %v2071 = vpop.f32.mrf.mxu0
        %v2072 = vpop.f32.mrf.mxu0
        %v2073 = vadd.f32 0.0, %v2072
        %v2074 = vpop.f32.mrf.mxu0
        %2075 = vmatprep.mubr.bf16.mxu0 0
        %2076 = vmatmul.mubr.bf16.gmra.mxu0 %v1872
        %v2077 = vpop.f32.mrf.mxu0
        %v2078 = vadd.f32 0.0, %v2077
        %v2079 = vpop.f32.mrf.mxu0
        %v2080 = vpop.f32.mrf.mxu0
        %v2081 = vadd.f32 0.0, %v2080
        %v2082 = vpop.f32.mrf.mxu0
        %2083 = vmatprep.mubr.bf16.mxu0 0
        %2084 = vmatmul.mubr.bf16.gmra.mxu0 %v1873
        %v2085 = vpop.f32.mrf.mxu0
        %v2086 = vadd.f32 0.0, %v2085
        %v2087 = vpop.f32.mrf.mxu0
        %v2088 = vpop.f32.mrf.mxu0
        %v2089 = vadd.f32 0.0, %v2088
        %v2090 = vpop.f32.mrf.mxu0
        %2091 = vmatprep.mubr.bf16.mxu0 0
        %2092 = vmatmul.mubr.bf16.gmra.mxu0 %v1874
        %v2093 = vpop.f32.mrf.mxu0
        %v2094 = vadd.f32 0.0, %v2093
        %v2095 = vpop.f32.mrf.mxu0
        %v2096 = vpop.f32.mrf.mxu0
        %v2097 = vadd.f32 0.0, %v2096
        %v2098 = vpop.f32.mrf.mxu0
        %2099 = vdwg.mxu0
        %v2100 = vadd.f32 %v1713, %v1974
        %v2101 = vadd.f32 %v1714, %v1977
        %v2102 = vadd.f32 %v1715, %v1982
        %v2103 = vadd.f32 %v1716, %v1985
        %v2104 = vadd.f32 %v1717, %v1990
        %v2105 = vadd.f32 %v1718, %v1993
        %v2106 = vadd.f32 %v1719, %v1998
        %v2107 = vadd.f32 %v1720, %v2001
        %v2108 = vadd.f32 %v1721, %v2006
        %v2109 = vadd.f32 %v1722, %v2009
        %v2110 = vadd.f32 %v1723, %v2014
        %v2111 = vadd.f32 %v1724, %v2017
        %v2112 = vadd.f32 %v1725, %v2022
        %v2113 = vadd.f32 %v1726, %v2025
        %v2114 = vadd.f32 %v1727, %v2030
        %v2115 = vadd.f32 %v1728, %v2033
        %v2116 = vadd.f32 %v1729, %v2038
        %v2117 = vadd.f32 %v1730, %v2041
        %v2118 = vadd.f32 %v1731, %v2046
        %v2119 = vadd.f32 %v1732, %v2049
        %v2120 = vadd.f32 %v1733, %v2054
        %v2121 = vadd.f32 %v1734, %v2057
        %v2122 = vadd.f32 %v1735, %v2062
        %v2123 = vadd.f32 %v1736, %v2065
        %v2124 = vadd.f32 %v1737, %v2070
        %v2125 = vadd.f32 %v1738, %v2073
        %v2126 = vadd.f32 %v1739, %v2078
        %v2127 = vadd.f32 %v1740, %v2081
        %v2128 = vadd.f32 %v1741, %v2086
        %v2129 = vadd.f32 %v1742, %v2089
        %v2130 = vadd.f32 %v1743, %v2094
        %v2131 = vadd.f32 %v1744, %v2097
        %v2132 = vld [vmem:[%s1745] sm:$0xf]
        %v2133 = vld [vmem:[%s1745 + $0x4] sm:$0xf]
        %v2134 = vld [vmem:[%s1745 + $0x8] sm:$0x1]
        %v2135 = vld [vmem:[%s1745 + $0xc] sm:$0xf]
        %v2136 = vld [vmem:[%s1745 + $0x10] sm:$0xf]
        %v2137 = vld [vmem:[%s1745 + $0x14] sm:$0x1]
        %v2138 = vld [vmem:[%s1745 + $0x18] sm:$0xf]
        %v2139 = vld [vmem:[%s1745 + $0x1c] sm:$0xf]
        %v2140 = vld [vmem:[%s1745 + $0x20] sm:$0x1]
        %v2141 = vld [vmem:[%s1745 + $0x24] sm:$0xf]
        %v2142 = vld [vmem:[%s1745 + $0x28] sm:$0xf]
        %v2143 = vld [vmem:[%s1745 + $0x2c] sm:$0x1]
        %v2144 = vld [vmem:[%s1745 + $0x30] sm:$0xf]
        %v2145 = vld [vmem:[%s1745 + $0x34] sm:$0xf]
        %v2146 = vld [vmem:[%s1745 + $0x38] sm:$0x1]
        %v2147 = vld [vmem:[%s1745 + $0x3c] sm:$0xf]
        %v2148 = vld [vmem:[%s1745 + $0x40] sm:$0xf]
        %v2149 = vld [vmem:[%s1745 + $0x44] sm:$0x1]
        %v2150 = vld [vmem:[%s1745 + $0x48] sm:$0xf]
        %v2151 = vld [vmem:[%s1745 + $0x4c] sm:$0xf]
        %v2152 = vld [vmem:[%s1745 + $0x50] sm:$0x1]
        %v2153 = vld [vmem:[%s1745 + $0x54] sm:$0xf]
        %v2154 = vld [vmem:[%s1745 + $0x58] sm:$0xf]
        %v2155 = vld [vmem:[%s1745 + $0x5c] sm:$0x1]
        %v2156 = vld [vmem:[%s1745 + $0x60] sm:$0xf]
        %v2157 = vld [vmem:[%s1745 + $0x64] sm:$0xf]
        %v2158 = vld [vmem:[%s1745 + $0x68] sm:$0x1]
        %v2159 = vld [vmem:[%s1745 + $0x6c] sm:$0xf]
        %v2160 = vld [vmem:[%s1745 + $0x70] sm:$0xf]
        %v2161 = vld [vmem:[%s1745 + $0x74] sm:$0x1]
        %v2162 = vld [vmem:[%s1745 + $0x78] sm:$0xf]
        %v2163 = vld [vmem:[%s1745 + $0x7c] sm:$0xf]
        %v2164 = vld [vmem:[%s1745 + $0x80] sm:$0x1]
        %v2165 = vld [vmem:[%s1745 + $0x84] sm:$0xf]
        %v2166 = vld [vmem:[%s1745 + $0x88] sm:$0xf]
        %v2167 = vld [vmem:[%s1745 + $0x8c] sm:$0x1]
        %v2168 = vld [vmem:[%s1745 + $0x90] sm:$0xf]
        %v2169 = vld [vmem:[%s1745 + $0x94] sm:$0xf]
        %v2170 = vld [vmem:[%s1745 + $0x98] sm:$0x1]
        %v2171 = vld [vmem:[%s1745 + $0x9c] sm:$0xf]
        %v2172 = vld [vmem:[%s1745 + $0xa0] sm:$0xf]
        %v2173 = vld [vmem:[%s1745 + $0xa4] sm:$0x1]
        %v2174 = vld [vmem:[%s1745 + $0xa8] sm:$0xf]
        %v2175 = vld [vmem:[%s1745 + $0xac] sm:$0xf]
        %v2176 = vld [vmem:[%s1745 + $0xb0] sm:$0x1]
        %v2177 = vld [vmem:[%s1745 + $0xb4] sm:$0xf]
        %v2178 = vld [vmem:[%s1745 + $0xb8] sm:$0xf]
        %v2179 = vld [vmem:[%s1745 + $0xbc] sm:$0x1]
        %v2181 = vshrl.u32 %v2132, 16
        %v2183 = vrot.slane %v2181, 4
        %v2184 = vshll.u32 %v2132, 16
        %v2186 = vrot.slane %v2184, 5
        %v2187 = vor.u32 %v2183, %v2186
        %v2188 = vrot.slane %v2187, 4
        %v2190 = vshll.u32 %v2133, 16
        %v2192 = vrot.slane %v2190, 5
        %v2193 = vsel %vm280, %v2188, %v2192
        %v2194 = vshrl.u32 %v2133, 16
        %v2196 = vrot.slane %v2194, 4
        %v2197 = vor.u32 %v2196, %v2192
        %v2198 = vrot.slane %v2197, 4
        %v2200 = vshll.u32 %v2134, 16
        %v2202 = vrot.slane %v2200, 5
        %v2203 = vsel %vm280, %v2198, %v2202
        %v2205 = vshrl.u32 %v2135, 16
        %v2207 = vrot.slane %v2205, 4
        %v2208 = vshll.u32 %v2135, 16
        %v2210 = vrot.slane %v2208, 5
        %v2211 = vor.u32 %v2207, %v2210
        %v2212 = vrot.slane %v2211, 4
        %v2214 = vshll.u32 %v2136, 16
        %v2216 = vrot.slane %v2214, 5
        %v2217 = vsel %vm280, %v2212, %v2216
        %v2218 = vshrl.u32 %v2136, 16
        %v2220 = vrot.slane %v2218, 4
        %v2221 = vor.u32 %v2220, %v2216
        %v2222 = vrot.slane %v2221, 4
        %v2224 = vshll.u32 %v2137, 16
        %v2226 = vrot.slane %v2224, 5
        %v2227 = vsel %vm280, %v2222, %v2226
        %v2229 = vshrl.u32 %v2138, 16
        %v2231 = vrot.slane %v2229, 4
        %v2232 = vshll.u32 %v2138, 16
        %v2234 = vrot.slane %v2232, 5
        %v2235 = vor.u32 %v2231, %v2234
        %v2236 = vrot.slane %v2235, 4
        %v2238 = vshll.u32 %v2139, 16
        %v2240 = vrot.slane %v2238, 5
        %v2241 = vsel %vm280, %v2236, %v2240
        %v2242 = vshrl.u32 %v2139, 16
        %v2244 = vrot.slane %v2242, 4
        %v2245 = vor.u32 %v2244, %v2240
        %v2246 = vrot.slane %v2245, 4
        %v2248 = vshll.u32 %v2140, 16
        %v2250 = vrot.slane %v2248, 5
        %v2251 = vsel %vm280, %v2246, %v2250
        %v2253 = vshrl.u32 %v2141, 16
        %v2255 = vrot.slane %v2253, 4
        %v2256 = vshll.u32 %v2141, 16
        %v2258 = vrot.slane %v2256, 5
        %v2259 = vor.u32 %v2255, %v2258
        %v2260 = vrot.slane %v2259, 4
        %v2262 = vshll.u32 %v2142, 16
        %v2264 = vrot.slane %v2262, 5
        %v2265 = vsel %vm280, %v2260, %v2264
        %v2266 = vshrl.u32 %v2142, 16
        %v2268 = vrot.slane %v2266, 4
        %v2269 = vor.u32 %v2268, %v2264
        %v2270 = vrot.slane %v2269, 4
        %v2272 = vshll.u32 %v2143, 16
        %v2274 = vrot.slane %v2272, 5
        %v2275 = vsel %vm280, %v2270, %v2274
        %v2277 = vshrl.u32 %v2144, 16
        %v2279 = vrot.slane %v2277, 4
        %v2280 = vshll.u32 %v2144, 16
        %v2282 = vrot.slane %v2280, 5
        %v2283 = vor.u32 %v2279, %v2282
        %v2284 = vrot.slane %v2283, 4
        %v2286 = vshll.u32 %v2145, 16
        %v2288 = vrot.slane %v2286, 5
        %v2289 = vsel %vm280, %v2284, %v2288
        %v2290 = vshrl.u32 %v2145, 16
        %v2292 = vrot.slane %v2290, 4
        %v2293 = vor.u32 %v2292, %v2288
        %v2294 = vrot.slane %v2293, 4
        %v2296 = vshll.u32 %v2146, 16
        %v2298 = vrot.slane %v2296, 5
        %v2299 = vsel %vm280, %v2294, %v2298
        %v2301 = vshrl.u32 %v2147, 16
        %v2303 = vrot.slane %v2301, 4
        %v2304 = vshll.u32 %v2147, 16
        %v2306 = vrot.slane %v2304, 5
        %v2307 = vor.u32 %v2303, %v2306
        %v2308 = vrot.slane %v2307, 4
        %v2310 = vshll.u32 %v2148, 16
        %v2312 = vrot.slane %v2310, 5
        %v2313 = vsel %vm280, %v2308, %v2312
        %v2314 = vshrl.u32 %v2148, 16
        %v2316 = vrot.slane %v2314, 4
        %v2317 = vor.u32 %v2316, %v2312
        %v2318 = vrot.slane %v2317, 4
        %v2320 = vshll.u32 %v2149, 16
        %v2322 = vrot.slane %v2320, 5
        %v2323 = vsel %vm280, %v2318, %v2322
        %v2325 = vshrl.u32 %v2150, 16
        %v2327 = vrot.slane %v2325, 4
        %v2328 = vshll.u32 %v2150, 16
        %v2330 = vrot.slane %v2328, 5
        %v2331 = vor.u32 %v2327, %v2330
        %v2332 = vrot.slane %v2331, 4
        %v2334 = vshll.u32 %v2151, 16
        %v2336 = vrot.slane %v2334, 5
        %v2337 = vsel %vm280, %v2332, %v2336
        %v2338 = vshrl.u32 %v2151, 16
        %v2340 = vrot.slane %v2338, 4
        %v2341 = vor.u32 %v2340, %v2336
        %v2342 = vrot.slane %v2341, 4
        %v2344 = vshll.u32 %v2152, 16
        %v2346 = vrot.slane %v2344, 5
        %v2347 = vsel %vm280, %v2342, %v2346
        %v2349 = vshrl.u32 %v2153, 16
        %v2351 = vrot.slane %v2349, 4
        %v2352 = vshll.u32 %v2153, 16
        %v2354 = vrot.slane %v2352, 5
        %v2355 = vor.u32 %v2351, %v2354
        %v2356 = vrot.slane %v2355, 4
        %v2358 = vshll.u32 %v2154, 16
        %v2360 = vrot.slane %v2358, 5
        %v2361 = vsel %vm280, %v2356, %v2360
        %v2362 = vshrl.u32 %v2154, 16
        %v2364 = vrot.slane %v2362, 4
        %v2365 = vor.u32 %v2364, %v2360
        %v2366 = vrot.slane %v2365, 4
        %v2368 = vshll.u32 %v2155, 16
        %v2370 = vrot.slane %v2368, 5
        %v2371 = vsel %vm280, %v2366, %v2370
        %v2373 = vshrl.u32 %v2156, 16
        %v2375 = vrot.slane %v2373, 4
        %v2376 = vshll.u32 %v2156, 16
        %v2378 = vrot.slane %v2376, 5
        %v2379 = vor.u32 %v2375, %v2378
        %v2380 = vrot.slane %v2379, 4
        %v2382 = vshll.u32 %v2157, 16
        %v2384 = vrot.slane %v2382, 5
        %v2385 = vsel %vm280, %v2380, %v2384
        %v2386 = vshrl.u32 %v2157, 16
        %v2388 = vrot.slane %v2386, 4
        %v2389 = vor.u32 %v2388, %v2384
        %v2390 = vrot.slane %v2389, 4
        %v2392 = vshll.u32 %v2158, 16
        %v2394 = vrot.slane %v2392, 5
        %v2395 = vsel %vm280, %v2390, %v2394
        %v2397 = vshrl.u32 %v2159, 16
        %v2399 = vrot.slane %v2397, 4
        %v2400 = vshll.u32 %v2159, 16
        %v2402 = vrot.slane %v2400, 5
        %v2403 = vor.u32 %v2399, %v2402
        %v2404 = vrot.slane %v2403, 4
        %v2406 = vshll.u32 %v2160, 16
        %v2408 = vrot.slane %v2406, 5
        %v2409 = vsel %vm280, %v2404, %v2408
        %v2410 = vshrl.u32 %v2160, 16
        %v2412 = vrot.slane %v2410, 4
        %v2413 = vor.u32 %v2412, %v2408
        %v2414 = vrot.slane %v2413, 4
        %v2416 = vshll.u32 %v2161, 16
        %v2418 = vrot.slane %v2416, 5
        %v2419 = vsel %vm280, %v2414, %v2418
        %v2421 = vshrl.u32 %v2162, 16
        %v2423 = vrot.slane %v2421, 4
        %v2424 = vshll.u32 %v2162, 16
        %v2426 = vrot.slane %v2424, 5
        %v2427 = vor.u32 %v2423, %v2426
        %v2428 = vrot.slane %v2427, 4
        %v2430 = vshll.u32 %v2163, 16
        %v2432 = vrot.slane %v2430, 5
        %v2433 = vsel %vm280, %v2428, %v2432
        %v2434 = vshrl.u32 %v2163, 16
        %v2436 = vrot.slane %v2434, 4
        %v2437 = vor.u32 %v2436, %v2432
        %v2438 = vrot.slane %v2437, 4
        %v2440 = vshll.u32 %v2164, 16
        %v2442 = vrot.slane %v2440, 5
        %v2443 = vsel %vm280, %v2438, %v2442
        %v2445 = vshrl.u32 %v2165, 16
        %v2447 = vrot.slane %v2445, 4
        %v2448 = vshll.u32 %v2165, 16
        %v2450 = vrot.slane %v2448, 5
        %v2451 = vor.u32 %v2447, %v2450
        %v2452 = vrot.slane %v2451, 4
        %v2454 = vshll.u32 %v2166, 16
        %v2456 = vrot.slane %v2454, 5
        %v2457 = vsel %vm280, %v2452, %v2456
        %v2458 = vshrl.u32 %v2166, 16
        %v2460 = vrot.slane %v2458, 4
        %v2461 = vor.u32 %v2460, %v2456
        %v2462 = vrot.slane %v2461, 4
        %v2464 = vshll.u32 %v2167, 16
        %v2466 = vrot.slane %v2464, 5
        %v2467 = vsel %vm280, %v2462, %v2466
        %v2469 = vshrl.u32 %v2168, 16
        %v2471 = vrot.slane %v2469, 4
        %v2472 = vshll.u32 %v2168, 16
        %v2474 = vrot.slane %v2472, 5
        %v2475 = vor.u32 %v2471, %v2474
        %v2476 = vrot.slane %v2475, 4
        %v2478 = vshll.u32 %v2169, 16
        %v2480 = vrot.slane %v2478, 5
        %v2481 = vsel %vm280, %v2476, %v2480
        %v2482 = vshrl.u32 %v2169, 16
        %v2484 = vrot.slane %v2482, 4
        %v2485 = vor.u32 %v2484, %v2480
        %v2486 = vrot.slane %v2485, 4
        %v2488 = vshll.u32 %v2170, 16
        %v2490 = vrot.slane %v2488, 5
        %v2491 = vsel %vm280, %v2486, %v2490
        %v2493 = vshrl.u32 %v2171, 16
        %v2495 = vrot.slane %v2493, 4
        %v2496 = vshll.u32 %v2171, 16
        %v2498 = vrot.slane %v2496, 5
        %v2499 = vor.u32 %v2495, %v2498
        %v2500 = vrot.slane %v2499, 4
        %v2502 = vshll.u32 %v2172, 16
        %v2504 = vrot.slane %v2502, 5
        %v2505 = vsel %vm280, %v2500, %v2504
        %v2506 = vshrl.u32 %v2172, 16
        %v2508 = vrot.slane %v2506, 4
        %v2509 = vor.u32 %v2508, %v2504
        %v2510 = vrot.slane %v2509, 4
        %v2512 = vshll.u32 %v2173, 16
        %v2514 = vrot.slane %v2512, 5
        %v2515 = vsel %vm280, %v2510, %v2514
        %v2517 = vshrl.u32 %v2174, 16
        %v2519 = vrot.slane %v2517, 4
        %v2520 = vshll.u32 %v2174, 16
        %v2522 = vrot.slane %v2520, 5
        %v2523 = vor.u32 %v2519, %v2522
        %v2524 = vrot.slane %v2523, 4
        %v2526 = vshll.u32 %v2175, 16
        %v2528 = vrot.slane %v2526, 5
        %v2529 = vsel %vm280, %v2524, %v2528
        %v2530 = vshrl.u32 %v2175, 16
        %v2532 = vrot.slane %v2530, 4
        %v2533 = vor.u32 %v2532, %v2528
        %v2534 = vrot.slane %v2533, 4
        %v2536 = vshll.u32 %v2176, 16
        %v2538 = vrot.slane %v2536, 5
        %v2539 = vsel %vm280, %v2534, %v2538
        %v2541 = vshrl.u32 %v2177, 16
        %v2543 = vrot.slane %v2541, 4
        %v2544 = vshll.u32 %v2177, 16
        %v2546 = vrot.slane %v2544, 5
        %v2547 = vor.u32 %v2543, %v2546
        %v2548 = vrot.slane %v2547, 4
        %v2550 = vshll.u32 %v2178, 16
        %v2552 = vrot.slane %v2550, 5
        %v2553 = vsel %vm280, %v2548, %v2552
        %v2554 = vshrl.u32 %v2178, 16
        %v2556 = vrot.slane %v2554, 4
        %v2557 = vor.u32 %v2556, %v2552
        %v2558 = vrot.slane %v2557, 4
        %v2560 = vshll.u32 %v2179, 16
        %v2562 = vrot.slane %v2560, 5
        %v2563 = vsel %vm280, %v2558, %v2562
        %s2564 = scalar_lea.vmem %s212, 256
        %v2565 = vld [vmem:[%s2564] sm:$0xf]
        %v2566 = vld [vmem:[%s2564 + $0x4] sm:$0xf]
        %v2567 = vld [vmem:[%s2564 + $0x8] sm:$0xf]
        %v2568 = vld [vmem:[%s2564 + $0xc] sm:$0xf]
        %v2569 = vld [vmem:[%s2564 + $0x10] sm:$0xf]
        %v2570 = vld [vmem:[%s2564 + $0x14] sm:$0xf]
        %v2571 = vld [vmem:[%s2564 + $0x18] sm:$0xf]
        %v2572 = vld [vmem:[%s2564 + $0x1c] sm:$0xf]
        %v2573 = vld [vmem:[%s2564 + $0x20] sm:$0xf]
        %v2574 = vld [vmem:[%s2564 + $0x24] sm:$0xf]
        %v2575 = vld [vmem:[%s2564 + $0x28] sm:$0xf]
        %v2576 = vld [vmem:[%s2564 + $0x2c] sm:$0xf]
        %v2577 = vld [vmem:[%s2564 + $0x30] sm:$0xf]
        %v2578 = vld [vmem:[%s2564 + $0x34] sm:$0xf]
        %v2579 = vld [vmem:[%s2564 + $0x38] sm:$0xf]
        %v2580 = vld [vmem:[%s2564 + $0x3c] sm:$0xf]
        %v2581 = vunpack.c.l.b16 %v2193
        %v2582 = vunpack.c.l.b16 %v2203
        %v2583 = vunpack.c.l.b16 %v2217
        %v2584 = vunpack.c.l.b16 %v2227
        %v2585 = vunpack.c.l.b16 %v2241
        %v2586 = vunpack.c.l.b16 %v2251
        %v2587 = vunpack.c.l.b16 %v2265
        %v2588 = vunpack.c.l.b16 %v2275
        %v2589 = vunpack.c.l.b16 %v2289
        %v2590 = vunpack.c.l.b16 %v2299
        %v2591 = vunpack.c.l.b16 %v2313
        %v2592 = vunpack.c.l.b16 %v2323
        %v2593 = vunpack.c.l.b16 %v2337
        %v2594 = vunpack.c.l.b16 %v2347
        %v2595 = vunpack.c.l.b16 %v2361
        %v2596 = vunpack.c.l.b16 %v2371
        %v2597 = vunpack.c.l.b16 %v2385
        %v2598 = vunpack.c.l.b16 %v2395
        %v2599 = vunpack.c.l.b16 %v2409
        %v2600 = vunpack.c.l.b16 %v2419
        %v2601 = vunpack.c.l.b16 %v2433
        %v2602 = vunpack.c.l.b16 %v2443
        %v2603 = vunpack.c.l.b16 %v2457
        %v2604 = vunpack.c.l.b16 %v2467
        %v2605 = vunpack.c.l.b16 %v2481
        %v2606 = vunpack.c.l.b16 %v2491
        %v2607 = vunpack.c.l.b16 %v2505
        %v2608 = vunpack.c.l.b16 %v2515
        %v2609 = vunpack.c.l.b16 %v2529
        %v2610 = vunpack.c.l.b16 %v2539
        %v2611 = vunpack.c.l.b16 %v2553
        %v2612 = vunpack.c.l.b16 %v2563
        %v2613 = vpack.c.b16 %v2582, %v2581
        %v2614 = vpack.c.b16 %v2584, %v2583
        %v2615 = vpack.c.b16 %v2586, %v2585
        %v2616 = vpack.c.b16 %v2588, %v2587
        %v2617 = vpack.c.b16 %v2590, %v2589
        %v2618 = vpack.c.b16 %v2592, %v2591
        %v2619 = vpack.c.b16 %v2594, %v2593
        %v2620 = vpack.c.b16 %v2596, %v2595
        %v2621 = vpack.c.b16 %v2598, %v2597
        %v2622 = vpack.c.b16 %v2600, %v2599
        %v2623 = vpack.c.b16 %v2602, %v2601
        %v2624 = vpack.c.b16 %v2604, %v2603
        %v2625 = vpack.c.b16 %v2606, %v2605
        %v2626 = vpack.c.b16 %v2608, %v2607
        %v2627 = vpack.c.b16 %v2610, %v2609
        %v2628 = vpack.c.b16 %v2612, %v2611
        %v2661 = vunpack.c.l.b16 %v2565
        %v2662 = vunpack.c.l.b16 %v2566
        %v2663 = vunpack.c.l.b16 %v2567
        %v2664 = vunpack.c.l.b16 %v2568
        %v2665 = vunpack.c.l.b16 %v2569
        %v2666 = vunpack.c.l.b16 %v2570
        %v2667 = vunpack.c.l.b16 %v2571
        %v2668 = vunpack.c.l.b16 %v2572
        %v2669 = vunpack.c.l.b16 %v2573
        %v2670 = vunpack.c.l.b16 %v2574
        %v2671 = vunpack.c.l.b16 %v2575
        %v2672 = vunpack.c.l.b16 %v2576
        %v2673 = vunpack.c.l.b16 %v2577
        %v2674 = vunpack.c.l.b16 %v2578
        %v2675 = vunpack.c.l.b16 %v2579
        %v2676 = vunpack.c.l.b16 %v2580
        %v2677 = vpack.c.b16 %v2662, %v2661
        %v2678 = vpack.c.b16 %v2664, %v2663
        %v2679 = vpack.c.b16 %v2666, %v2665
        %v2680 = vpack.c.b16 %v2668, %v2667
        %v2681 = vpack.c.b16 %v2670, %v2669
        %v2682 = vpack.c.b16 %v2672, %v2671
        %v2683 = vpack.c.b16 %v2674, %v2673
        %v2684 = vpack.c.b16 %v2676, %v2675
        %2693 = vmatprep.subr.bf16.mxu0 0
        %2694 = vmatpush1.bf16.msra.mxu0 %v2684
        %2695 = vmatprep.subr.bf16.mxu0 0
        %2696 = vmatpush1.bf16.msra.mxu0 %v2683
        %2697 = vmatprep.subr.bf16.mxu0 0
        %2698 = vmatpush1.bf16.msra.mxu0 %v2682
        %2699 = vmatprep.subr.bf16.mxu0 0
        %2700 = vmatpush1.bf16.msra.mxu0 %v2681
        %2701 = vmatprep.subr.bf16.mxu0 0
        %2702 = vmatpush1.bf16.msra.mxu0 %v2680
        %2703 = vmatprep.subr.bf16.mxu0 0
        %2704 = vmatpush1.bf16.msra.mxu0 %v2679
        %2705 = vmatprep.subr.bf16.mxu0 0
        %2706 = vmatpush1.bf16.msra.mxu0 %v2678
        %2707 = vmatprep.subr.bf16.mxu0 0
        %2708 = vmatpush1.bf16.msra.mxu0 %v2677
        %2709 = vmatprep.subr.bf16.mxu0 0
        %2710 = vmatpush2.bf16.msra.mxu0 0
        %2711 = vmatprep.subr.bf16.mxu0 0
        %2712 = vmatpush2.bf16.msra.mxu0 0
        %2713 = vmatprep.subr.bf16.mxu0 0
        %2714 = vmatpush2.bf16.msra.mxu0 0
        %2715 = vmatprep.subr.bf16.mxu0 0
        %2716 = vmatpush2.bf16.msra.mxu0 0
        %2717 = vmatprep.subr.bf16.mxu0 0
        %2718 = vmatpush2.bf16.msra.mxu0 0
        %2719 = vmatprep.subr.bf16.mxu0 0
        %2720 = vmatpush2.bf16.msra.mxu0 0
        %2721 = vmatprep.subr.bf16.mxu0 0
        %2722 = vmatpush2.bf16.msra.mxu0 0
        %2723 = vmatprep.subr.bf16.mxu0 0
        %2724 = vmatpush2.bf16.msra.mxu0 0
        %2725 = vmatprep.mubr.bf16.mxu0 0
        %2726 = vmatmul.mubr.bf16.gmra.mxu0 %v2613
        %v2727 = vpop.f32.mrf.mxu0
        %v2728 = vadd.f32 0.0, %v2727
        %v2729 = vpop.f32.mrf.mxu0
        %v2730 = vpop.f32.mrf.mxu0
        %v2731 = vadd.f32 0.0, %v2730
        %v2732 = vpop.f32.mrf.mxu0
        %2733 = vmatprep.mubr.bf16.mxu0 0
        %2734 = vmatmul.mubr.bf16.gmra.mxu0 %v2614
        %v2735 = vpop.f32.mrf.mxu0
        %v2736 = vadd.f32 0.0, %v2735
        %v2737 = vpop.f32.mrf.mxu0
        %v2738 = vpop.f32.mrf.mxu0
        %v2739 = vadd.f32 0.0, %v2738
        %v2740 = vpop.f32.mrf.mxu0
        %2741 = vmatprep.mubr.bf16.mxu0 0
        %2742 = vmatmul.mubr.bf16.gmra.mxu0 %v2615
        %v2743 = vpop.f32.mrf.mxu0
        %v2744 = vadd.f32 0.0, %v2743
        %v2745 = vpop.f32.mrf.mxu0
        %v2746 = vpop.f32.mrf.mxu0
        %v2747 = vadd.f32 0.0, %v2746
        %v2748 = vpop.f32.mrf.mxu0
        %2749 = vmatprep.mubr.bf16.mxu0 0
        %2750 = vmatmul.mubr.bf16.gmra.mxu0 %v2616
        %v2751 = vpop.f32.mrf.mxu0
        %v2752 = vadd.f32 0.0, %v2751
        %v2753 = vpop.f32.mrf.mxu0
        %v2754 = vpop.f32.mrf.mxu0
        %v2755 = vadd.f32 0.0, %v2754
        %v2756 = vpop.f32.mrf.mxu0
        %2757 = vmatprep.mubr.bf16.mxu0 0
        %2758 = vmatmul.mubr.bf16.gmra.mxu0 %v2617
        %v2759 = vpop.f32.mrf.mxu0
        %v2760 = vadd.f32 0.0, %v2759
        %v2761 = vpop.f32.mrf.mxu0
        %v2762 = vpop.f32.mrf.mxu0
        %v2763 = vadd.f32 0.0, %v2762
        %v2764 = vpop.f32.mrf.mxu0
        %2765 = vmatprep.mubr.bf16.mxu0 0
        %2766 = vmatmul.mubr.bf16.gmra.mxu0 %v2618
        %v2767 = vpop.f32.mrf.mxu0
        %v2768 = vadd.f32 0.0, %v2767
        %v2769 = vpop.f32.mrf.mxu0
        %v2770 = vpop.f32.mrf.mxu0
        %v2771 = vadd.f32 0.0, %v2770
        %v2772 = vpop.f32.mrf.mxu0
        %2773 = vmatprep.mubr.bf16.mxu0 0
        %2774 = vmatmul.mubr.bf16.gmra.mxu0 %v2619
        %v2775 = vpop.f32.mrf.mxu0
        %v2776 = vadd.f32 0.0, %v2775
        %v2777 = vpop.f32.mrf.mxu0
        %v2778 = vpop.f32.mrf.mxu0
        %v2779 = vadd.f32 0.0, %v2778
        %v2780 = vpop.f32.mrf.mxu0
        %2781 = vmatprep.mubr.bf16.mxu0 0
        %2782 = vmatmul.mubr.bf16.gmra.mxu0 %v2620
        %v2783 = vpop.f32.mrf.mxu0
        %v2784 = vadd.f32 0.0, %v2783
        %v2785 = vpop.f32.mrf.mxu0
        %v2786 = vpop.f32.mrf.mxu0
        %v2787 = vadd.f32 0.0, %v2786
        %v2788 = vpop.f32.mrf.mxu0
        %2789 = vmatprep.mubr.bf16.mxu0 0
        %2790 = vmatmul.mubr.bf16.gmra.mxu0 %v2621
        %v2791 = vpop.f32.mrf.mxu0
        %v2792 = vadd.f32 0.0, %v2791
        %v2793 = vpop.f32.mrf.mxu0
        %v2794 = vpop.f32.mrf.mxu0
        %v2795 = vadd.f32 0.0, %v2794
        %v2796 = vpop.f32.mrf.mxu0
        %2797 = vmatprep.mubr.bf16.mxu0 0
        %2798 = vmatmul.mubr.bf16.gmra.mxu0 %v2622
        %v2799 = vpop.f32.mrf.mxu0
        %v2800 = vadd.f32 0.0, %v2799
        %v2801 = vpop.f32.mrf.mxu0
        %v2802 = vpop.f32.mrf.mxu0
        %v2803 = vadd.f32 0.0, %v2802
        %v2804 = vpop.f32.mrf.mxu0
        %2805 = vmatprep.mubr.bf16.mxu0 0
        %2806 = vmatmul.mubr.bf16.gmra.mxu0 %v2623
        %v2807 = vpop.f32.mrf.mxu0
        %v2808 = vadd.f32 0.0, %v2807
        %v2809 = vpop.f32.mrf.mxu0
        %v2810 = vpop.f32.mrf.mxu0
        %v2811 = vadd.f32 0.0, %v2810
        %v2812 = vpop.f32.mrf.mxu0
        %2813 = vmatprep.mubr.bf16.mxu0 0
        %2814 = vmatmul.mubr.bf16.gmra.mxu0 %v2624
        %v2815 = vpop.f32.mrf.mxu0
        %v2816 = vadd.f32 0.0, %v2815
        %v2817 = vpop.f32.mrf.mxu0
        %v2818 = vpop.f32.mrf.mxu0
        %v2819 = vadd.f32 0.0, %v2818
        %v2820 = vpop.f32.mrf.mxu0
        %2821 = vmatprep.mubr.bf16.mxu0 0
        %2822 = vmatmul.mubr.bf16.gmra.mxu0 %v2625
        %v2823 = vpop.f32.mrf.mxu0
        %v2824 = vadd.f32 0.0, %v2823
        %v2825 = vpop.f32.mrf.mxu0
        %v2826 = vpop.f32.mrf.mxu0
        %v2827 = vadd.f32 0.0, %v2826
        %v2828 = vpop.f32.mrf.mxu0
        %2829 = vmatprep.mubr.bf16.mxu0 0
        %2830 = vmatmul.mubr.bf16.gmra.mxu0 %v2626
        %v2831 = vpop.f32.mrf.mxu0
        %v2832 = vadd.f32 0.0, %v2831
        %v2833 = vpop.f32.mrf.mxu0
        %v2834 = vpop.f32.mrf.mxu0
        %v2835 = vadd.f32 0.0, %v2834
        %v2836 = vpop.f32.mrf.mxu0
        %2837 = vmatprep.mubr.bf16.mxu0 0
        %2838 = vmatmul.mubr.bf16.gmra.mxu0 %v2627
        %v2839 = vpop.f32.mrf.mxu0
        %v2840 = vadd.f32 0.0, %v2839
        %v2841 = vpop.f32.mrf.mxu0
        %v2842 = vpop.f32.mrf.mxu0
        %v2843 = vadd.f32 0.0, %v2842
        %v2844 = vpop.f32.mrf.mxu0
        %2845 = vmatprep.mubr.bf16.mxu0 0
        %2846 = vmatmul.mubr.bf16.gmra.mxu0 %v2628
        %v2847 = vpop.f32.mrf.mxu0
        %v2848 = vadd.f32 0.0, %v2847
        %v2849 = vpop.f32.mrf.mxu0
        %v2850 = vpop.f32.mrf.mxu0
        %v2851 = vadd.f32 0.0, %v2850
        %v2852 = vpop.f32.mrf.mxu0
        %2853 = vdwg.mxu0
        %v2854 = vadd.f32 %v2100, %v2728
        %v2855 = vadd.f32 %v2101, %v2731
        %v2856 = vadd.f32 %v2102, %v2736
        %v2857 = vadd.f32 %v2103, %v2739
        %v2858 = vadd.f32 %v2104, %v2744
        %v2859 = vadd.f32 %v2105, %v2747
        %v2860 = vadd.f32 %v2106, %v2752
        %v2861 = vadd.f32 %v2107, %v2755
        %v2862 = vadd.f32 %v2108, %v2760
        %v2863 = vadd.f32 %v2109, %v2763
        %v2864 = vadd.f32 %v2110, %v2768
        %v2865 = vadd.f32 %v2111, %v2771
        %v2866 = vadd.f32 %v2112, %v2776
        %v2867 = vadd.f32 %v2113, %v2779
        %v2868 = vadd.f32 %v2114, %v2784
        %v2869 = vadd.f32 %v2115, %v2787
        %v2870 = vadd.f32 %v2116, %v2792
        %v2871 = vadd.f32 %v2117, %v2795
        %v2872 = vadd.f32 %v2118, %v2800
        %v2873 = vadd.f32 %v2119, %v2803
        %v2874 = vadd.f32 %v2120, %v2808
        %v2875 = vadd.f32 %v2121, %v2811
        %v2876 = vadd.f32 %v2122, %v2816
        %v2877 = vadd.f32 %v2123, %v2819
        %v2878 = vadd.f32 %v2124, %v2824
        %v2879 = vadd.f32 %v2125, %v2827
        %v2880 = vadd.f32 %v2126, %v2832
        %v2881 = vadd.f32 %v2127, %v2835
        %v2882 = vadd.f32 %v2128, %v2840
        %v2883 = vadd.f32 %v2129, %v2843
        %v2884 = vadd.f32 %v2130, %v2848
        %v2885 = vadd.f32 %v2131, %v2851
        %v2886 = vld [vmem:[%s1745] sm:$0xe]
        %v2887 = vld [vmem:[%s1745 + $0xc] sm:$0xe]
        %v2888 = vld [vmem:[%s1745 + $0x18] sm:$0xe]
        %v2889 = vld [vmem:[%s1745 + $0x24] sm:$0xe]
        %v2890 = vld [vmem:[%s1745 + $0x30] sm:$0xe]
        %v2891 = vld [vmem:[%s1745 + $0x3c] sm:$0xe]
        %v2892 = vld [vmem:[%s1745 + $0x48] sm:$0xe]
        %v2893 = vld [vmem:[%s1745 + $0x54] sm:$0xe]
        %v2894 = vld [vmem:[%s1745 + $0x60] sm:$0xe]
        %v2895 = vld [vmem:[%s1745 + $0x6c] sm:$0xe]
        %v2896 = vld [vmem:[%s1745 + $0x78] sm:$0xe]
        %v2897 = vld [vmem:[%s1745 + $0x84] sm:$0xe]
        %v2898 = vld [vmem:[%s1745 + $0x90] sm:$0xe]
        %v2899 = vld [vmem:[%s1745 + $0x9c] sm:$0xe]
        %v2900 = vld [vmem:[%s1745 + $0xa8] sm:$0xe]
        %v2901 = vld [vmem:[%s1745 + $0xb4] sm:$0xe]
        %v2950 = vrot.slane %v2886, 5
        %v2951 = vrot.slane %v2950, 4
        %v2952 = vrot.slane %v2133, 5
        %v2953 = vsel %vm1310, %v2951, %v2952
        %v2954 = vrot.slane %v2952, 4
        %v2955 = vrot.slane %v2134, 5
        %v2956 = vsel %vm1310, %v2954, %v2955
        %v2957 = vrot.slane %v2887, 5
        %v2958 = vrot.slane %v2957, 4
        %v2959 = vrot.slane %v2136, 5
        %v2960 = vsel %vm1310, %v2958, %v2959
        %v2961 = vrot.slane %v2959, 4
        %v2962 = vrot.slane %v2137, 5
        %v2963 = vsel %vm1310, %v2961, %v2962
        %v2964 = vrot.slane %v2888, 5
        %v2965 = vrot.slane %v2964, 4
        %v2966 = vrot.slane %v2139, 5
        %v2967 = vsel %vm1310, %v2965, %v2966
        %v2968 = vrot.slane %v2966, 4
        %v2969 = vrot.slane %v2140, 5
        %v2970 = vsel %vm1310, %v2968, %v2969
        %v2971 = vrot.slane %v2889, 5
        %v2972 = vrot.slane %v2971, 4
        %v2973 = vrot.slane %v2142, 5
        %v2974 = vsel %vm1310, %v2972, %v2973
        %v2975 = vrot.slane %v2973, 4
        %v2976 = vrot.slane %v2143, 5
        %v2977 = vsel %vm1310, %v2975, %v2976
        %v2978 = vrot.slane %v2890, 5
        %v2979 = vrot.slane %v2978, 4
        %v2980 = vrot.slane %v2145, 5
        %v2981 = vsel %vm1310, %v2979, %v2980
        %v2982 = vrot.slane %v2980, 4
        %v2983 = vrot.slane %v2146, 5
        %v2984 = vsel %vm1310, %v2982, %v2983
        %v2985 = vrot.slane %v2891, 5
        %v2986 = vrot.slane %v2985, 4
        %v2987 = vrot.slane %v2148, 5
        %v2988 = vsel %vm1310, %v2986, %v2987
        %v2989 = vrot.slane %v2987, 4
        %v2990 = vrot.slane %v2149, 5
        %v2991 = vsel %vm1310, %v2989, %v2990
        %v2992 = vrot.slane %v2892, 5
        %v2993 = vrot.slane %v2992, 4
        %v2994 = vrot.slane %v2151, 5
        %v2995 = vsel %vm1310, %v2993, %v2994
        %v2996 = vrot.slane %v2994, 4
        %v2997 = vrot.slane %v2152, 5
        %v2998 = vsel %vm1310, %v2996, %v2997
        %v2999 = vrot.slane %v2893, 5
        %v3000 = vrot.slane %v2999, 4
        %v3001 = vrot.slane %v2154, 5
        %v3002 = vsel %vm1310, %v3000, %v3001
        %v3003 = vrot.slane %v3001, 4
        %v3004 = vrot.slane %v2155, 5
        %v3005 = vsel %vm1310, %v3003, %v3004
        %v3006 = vrot.slane %v2894, 5
        %v3007 = vrot.slane %v3006, 4
        %v3008 = vrot.slane %v2157, 5
        %v3009 = vsel %vm1310, %v3007, %v3008
        %v3010 = vrot.slane %v3008, 4
        %v3011 = vrot.slane %v2158, 5
        %v3012 = vsel %vm1310, %v3010, %v3011
        %v3013 = vrot.slane %v2895, 5
        %v3014 = vrot.slane %v3013, 4
        %v3015 = vrot.slane %v2160, 5
        %v3016 = vsel %vm1310, %v3014, %v3015
        %v3017 = vrot.slane %v3015, 4
        %v3018 = vrot.slane %v2161, 5
        %v3019 = vsel %vm1310, %v3017, %v3018
        %v3020 = vrot.slane %v2896, 5
        %v3021 = vrot.slane %v3020, 4
        %v3022 = vrot.slane %v2163, 5
        %v3023 = vsel %vm1310, %v3021, %v3022
        %v3024 = vrot.slane %v3022, 4
        %v3025 = vrot.slane %v2164, 5
        %v3026 = vsel %vm1310, %v3024, %v3025
        %v3027 = vrot.slane %v2897, 5
        %v3028 = vrot.slane %v3027, 4
        %v3029 = vrot.slane %v2166, 5
        %v3030 = vsel %vm1310, %v3028, %v3029
        %v3031 = vrot.slane %v3029, 4
        %v3032 = vrot.slane %v2167, 5
        %v3033 = vsel %vm1310, %v3031, %v3032
        %v3034 = vrot.slane %v2898, 5
        %v3035 = vrot.slane %v3034, 4
        %v3036 = vrot.slane %v2169, 5
        %v3037 = vsel %vm1310, %v3035, %v3036
        %v3038 = vrot.slane %v3036, 4
        %v3039 = vrot.slane %v2170, 5
        %v3040 = vsel %vm1310, %v3038, %v3039
        %v3041 = vrot.slane %v2899, 5
        %v3042 = vrot.slane %v3041, 4
        %v3043 = vrot.slane %v2172, 5
        %v3044 = vsel %vm1310, %v3042, %v3043
        %v3045 = vrot.slane %v3043, 4
        %v3046 = vrot.slane %v2173, 5
        %v3047 = vsel %vm1310, %v3045, %v3046
        %v3048 = vrot.slane %v2900, 5
        %v3049 = vrot.slane %v3048, 4
        %v3050 = vrot.slane %v2175, 5
        %v3051 = vsel %vm1310, %v3049, %v3050
        %v3052 = vrot.slane %v3050, 4
        %v3053 = vrot.slane %v2176, 5
        %v3054 = vsel %vm1310, %v3052, %v3053
        %v3055 = vrot.slane %v2901, 5
        %v3056 = vrot.slane %v3055, 4
        %v3057 = vrot.slane %v2178, 5
        %v3058 = vsel %vm1310, %v3056, %v3057
        %v3059 = vrot.slane %v3057, 4
        %v3060 = vrot.slane %v2179, 5
        %v3061 = vsel %vm1310, %v3059, %v3060
        %s3062 = scalar_lea.vmem %s212, 320
        %v3063 = vld [vmem:[%s3062] sm:$0xf]
        %v3064 = vld [vmem:[%s3062 + $0x4] sm:$0xf]
        %v3065 = vld [vmem:[%s3062 + $0x8] sm:$0xf]
        %v3066 = vld [vmem:[%s3062 + $0xc] sm:$0xf]
        %v3067 = vld [vmem:[%s3062 + $0x10] sm:$0xf]
        %v3068 = vld [vmem:[%s3062 + $0x14] sm:$0xf]
        %v3069 = vld [vmem:[%s3062 + $0x18] sm:$0xf]
        %v3070 = vld [vmem:[%s3062 + $0x1c] sm:$0xf]
        %v3071 = vld [vmem:[%s3062 + $0x20] sm:$0xf]
        %v3072 = vld [vmem:[%s3062 + $0x24] sm:$0xf]
        %v3073 = vld [vmem:[%s3062 + $0x28] sm:$0xf]
        %v3074 = vld [vmem:[%s3062 + $0x2c] sm:$0xf]
        %v3075 = vld [vmem:[%s3062 + $0x30] sm:$0xf]
        %v3076 = vld [vmem:[%s3062 + $0x34] sm:$0xf]
        %v3077 = vld [vmem:[%s3062 + $0x38] sm:$0xf]
        %v3078 = vld [vmem:[%s3062 + $0x3c] sm:$0xf]
        %v3079 = vunpack.c.l.b16 %v2953
        %v3080 = vunpack.c.l.b16 %v2956
        %v3081 = vunpack.c.l.b16 %v2960
        %v3082 = vunpack.c.l.b16 %v2963
        %v3083 = vunpack.c.l.b16 %v2967
        %v3084 = vunpack.c.l.b16 %v2970
        %v3085 = vunpack.c.l.b16 %v2974
        %v3086 = vunpack.c.l.b16 %v2977
        %v3087 = vunpack.c.l.b16 %v2981
        %v3088 = vunpack.c.l.b16 %v2984
        %v3089 = vunpack.c.l.b16 %v2988
        %v3090 = vunpack.c.l.b16 %v2991
        %v3091 = vunpack.c.l.b16 %v2995
        %v3092 = vunpack.c.l.b16 %v2998
        %v3093 = vunpack.c.l.b16 %v3002
        %v3094 = vunpack.c.l.b16 %v3005
        %v3095 = vunpack.c.l.b16 %v3009
        %v3096 = vunpack.c.l.b16 %v3012
        %v3097 = vunpack.c.l.b16 %v3016
        %v3098 = vunpack.c.l.b16 %v3019
        %v3099 = vunpack.c.l.b16 %v3023
        %v3100 = vunpack.c.l.b16 %v3026
        %v3101 = vunpack.c.l.b16 %v3030
        %v3102 = vunpack.c.l.b16 %v3033
        %v3103 = vunpack.c.l.b16 %v3037
        %v3104 = vunpack.c.l.b16 %v3040
        %v3105 = vunpack.c.l.b16 %v3044
        %v3106 = vunpack.c.l.b16 %v3047
        %v3107 = vunpack.c.l.b16 %v3051
        %v3108 = vunpack.c.l.b16 %v3054
        %v3109 = vunpack.c.l.b16 %v3058
        %v3110 = vunpack.c.l.b16 %v3061
        %v3111 = vpack.c.b16 %v3080, %v3079
        %v3112 = vpack.c.b16 %v3082, %v3081
        %v3113 = vpack.c.b16 %v3084, %v3083
        %v3114 = vpack.c.b16 %v3086, %v3085
        %v3115 = vpack.c.b16 %v3088, %v3087
        %v3116 = vpack.c.b16 %v3090, %v3089
        %v3117 = vpack.c.b16 %v3092, %v3091
        %v3118 = vpack.c.b16 %v3094, %v3093
        %v3119 = vpack.c.b16 %v3096, %v3095
        %v3120 = vpack.c.b16 %v3098, %v3097
        %v3121 = vpack.c.b16 %v3100, %v3099
        %v3122 = vpack.c.b16 %v3102, %v3101
        %v3123 = vpack.c.b16 %v3104, %v3103
        %v3124 = vpack.c.b16 %v3106, %v3105
        %v3125 = vpack.c.b16 %v3108, %v3107
        %v3126 = vpack.c.b16 %v3110, %v3109
        %v3159 = vunpack.c.l.b16 %v3063
        %v3160 = vunpack.c.l.b16 %v3064
        %v3161 = vunpack.c.l.b16 %v3065
        %v3162 = vunpack.c.l.b16 %v3066
        %v3163 = vunpack.c.l.b16 %v3067
        %v3164 = vunpack.c.l.b16 %v3068
        %v3165 = vunpack.c.l.b16 %v3069
        %v3166 = vunpack.c.l.b16 %v3070
        %v3167 = vunpack.c.l.b16 %v3071
        %v3168 = vunpack.c.l.b16 %v3072
        %v3169 = vunpack.c.l.b16 %v3073
        %v3170 = vunpack.c.l.b16 %v3074
        %v3171 = vunpack.c.l.b16 %v3075
        %v3172 = vunpack.c.l.b16 %v3076
        %v3173 = vunpack.c.l.b16 %v3077
        %v3174 = vunpack.c.l.b16 %v3078
        %v3175 = vpack.c.b16 %v3160, %v3159
        %v3176 = vpack.c.b16 %v3162, %v3161
        %v3177 = vpack.c.b16 %v3164, %v3163
        %v3178 = vpack.c.b16 %v3166, %v3165
        %v3179 = vpack.c.b16 %v3168, %v3167
        %v3180 = vpack.c.b16 %v3170, %v3169
        %v3181 = vpack.c.b16 %v3172, %v3171
        %v3182 = vpack.c.b16 %v3174, %v3173
        %3191 = vmatprep.subr.bf16.mxu0 0
        %3192 = vmatpush1.bf16.msra.mxu0 %v3182
        %3193 = vmatprep.subr.bf16.mxu0 0
        %3194 = vmatpush1.bf16.msra.mxu0 %v3181
        %3195 = vmatprep.subr.bf16.mxu0 0
        %3196 = vmatpush1.bf16.msra.mxu0 %v3180
        %3197 = vmatprep.subr.bf16.mxu0 0
        %3198 = vmatpush1.bf16.msra.mxu0 %v3179
        %3199 = vmatprep.subr.bf16.mxu0 0
        %3200 = vmatpush1.bf16.msra.mxu0 %v3178
        %3201 = vmatprep.subr.bf16.mxu0 0
        %3202 = vmatpush1.bf16.msra.mxu0 %v3177
        %3203 = vmatprep.subr.bf16.mxu0 0
        %3204 = vmatpush1.bf16.msra.mxu0 %v3176
        %3205 = vmatprep.subr.bf16.mxu0 0
        %3206 = vmatpush1.bf16.msra.mxu0 %v3175
        %3207 = vmatprep.subr.bf16.mxu0 0
        %3208 = vmatpush2.bf16.msra.mxu0 0
        %3209 = vmatprep.subr.bf16.mxu0 0
        %3210 = vmatpush2.bf16.msra.mxu0 0
        %3211 = vmatprep.subr.bf16.mxu0 0
        %3212 = vmatpush2.bf16.msra.mxu0 0
        %3213 = vmatprep.subr.bf16.mxu0 0
        %3214 = vmatpush2.bf16.msra.mxu0 0
        %3215 = vmatprep.subr.bf16.mxu0 0
        %3216 = vmatpush2.bf16.msra.mxu0 0
        %3217 = vmatprep.subr.bf16.mxu0 0
        %3218 = vmatpush2.bf16.msra.mxu0 0
        %3219 = vmatprep.subr.bf16.mxu0 0
        %3220 = vmatpush2.bf16.msra.mxu0 0
        %3221 = vmatprep.subr.bf16.mxu0 0
        %3222 = vmatpush2.bf16.msra.mxu0 0
        %3223 = vmatprep.mubr.bf16.mxu0 0
        %3224 = vmatmul.mubr.bf16.gmra.mxu0 %v3111
        %v3225 = vpop.f32.mrf.mxu0
        %v3226 = vadd.f32 0.0, %v3225
        %v3227 = vpop.f32.mrf.mxu0
        %v3228 = vpop.f32.mrf.mxu0
        %v3229 = vadd.f32 0.0, %v3228
        %v3230 = vpop.f32.mrf.mxu0
        %3231 = vmatprep.mubr.bf16.mxu0 0
        %3232 = vmatmul.mubr.bf16.gmra.mxu0 %v3112
        %v3233 = vpop.f32.mrf.mxu0
        %v3234 = vadd.f32 0.0, %v3233
        %v3235 = vpop.f32.mrf.mxu0
        %v3236 = vpop.f32.mrf.mxu0
        %v3237 = vadd.f32 0.0, %v3236
        %v3238 = vpop.f32.mrf.mxu0
        %3239 = vmatprep.mubr.bf16.mxu0 0
        %3240 = vmatmul.mubr.bf16.gmra.mxu0 %v3113
        %v3241 = vpop.f32.mrf.mxu0
        %v3242 = vadd.f32 0.0, %v3241
        %v3243 = vpop.f32.mrf.mxu0
        %v3244 = vpop.f32.mrf.mxu0
        %v3245 = vadd.f32 0.0, %v3244
        %v3246 = vpop.f32.mrf.mxu0
        %3247 = vmatprep.mubr.bf16.mxu0 0
        %3248 = vmatmul.mubr.bf16.gmra.mxu0 %v3114
        %v3249 = vpop.f32.mrf.mxu0
        %v3250 = vadd.f32 0.0, %v3249
        %v3251 = vpop.f32.mrf.mxu0
        %v3252 = vpop.f32.mrf.mxu0
        %v3253 = vadd.f32 0.0, %v3252
        %v3254 = vpop.f32.mrf.mxu0
        %3255 = vmatprep.mubr.bf16.mxu0 0
        %3256 = vmatmul.mubr.bf16.gmra.mxu0 %v3115
        %v3257 = vpop.f32.mrf.mxu0
        %v3258 = vadd.f32 0.0, %v3257
        %v3259 = vpop.f32.mrf.mxu0
        %v3260 = vpop.f32.mrf.mxu0
        %v3261 = vadd.f32 0.0, %v3260
        %v3262 = vpop.f32.mrf.mxu0
        %3263 = vmatprep.mubr.bf16.mxu0 0
        %3264 = vmatmul.mubr.bf16.gmra.mxu0 %v3116
        %v3265 = vpop.f32.mrf.mxu0
        %v3266 = vadd.f32 0.0, %v3265
        %v3267 = vpop.f32.mrf.mxu0
        %v3268 = vpop.f32.mrf.mxu0
        %v3269 = vadd.f32 0.0, %v3268
        %v3270 = vpop.f32.mrf.mxu0
        %3271 = vmatprep.mubr.bf16.mxu0 0
        %3272 = vmatmul.mubr.bf16.gmra.mxu0 %v3117
        %v3273 = vpop.f32.mrf.mxu0
        %v3274 = vadd.f32 0.0, %v3273
        %v3275 = vpop.f32.mrf.mxu0
        %v3276 = vpop.f32.mrf.mxu0
        %v3277 = vadd.f32 0.0, %v3276
        %v3278 = vpop.f32.mrf.mxu0
        %3279 = vmatprep.mubr.bf16.mxu0 0
        %3280 = vmatmul.mubr.bf16.gmra.mxu0 %v3118
        %v3281 = vpop.f32.mrf.mxu0
        %v3282 = vadd.f32 0.0, %v3281
        %v3283 = vpop.f32.mrf.mxu0
        %v3284 = vpop.f32.mrf.mxu0
        %v3285 = vadd.f32 0.0, %v3284
        %v3286 = vpop.f32.mrf.mxu0
        %3287 = vmatprep.mubr.bf16.mxu0 0
        %3288 = vmatmul.mubr.bf16.gmra.mxu0 %v3119
        %v3289 = vpop.f32.mrf.mxu0
        %v3290 = vadd.f32 0.0, %v3289
        %v3291 = vpop.f32.mrf.mxu0
        %v3292 = vpop.f32.mrf.mxu0
        %v3293 = vadd.f32 0.0, %v3292
        %v3294 = vpop.f32.mrf.mxu0
        %3295 = vmatprep.mubr.bf16.mxu0 0
        %3296 = vmatmul.mubr.bf16.gmra.mxu0 %v3120
        %v3297 = vpop.f32.mrf.mxu0
        %v3298 = vadd.f32 0.0, %v3297
        %v3299 = vpop.f32.mrf.mxu0
        %v3300 = vpop.f32.mrf.mxu0
        %v3301 = vadd.f32 0.0, %v3300
        %v3302 = vpop.f32.mrf.mxu0
        %3303 = vmatprep.mubr.bf16.mxu0 0
        %3304 = vmatmul.mubr.bf16.gmra.mxu0 %v3121
        %v3305 = vpop.f32.mrf.mxu0
        %v3306 = vadd.f32 0.0, %v3305
        %v3307 = vpop.f32.mrf.mxu0
        %v3308 = vpop.f32.mrf.mxu0
        %v3309 = vadd.f32 0.0, %v3308
        %v3310 = vpop.f32.mrf.mxu0
        %3311 = vmatprep.mubr.bf16.mxu0 0
        %3312 = vmatmul.mubr.bf16.gmra.mxu0 %v3122
        %v3313 = vpop.f32.mrf.mxu0
        %v3314 = vadd.f32 0.0, %v3313
        %v3315 = vpop.f32.mrf.mxu0
        %v3316 = vpop.f32.mrf.mxu0
        %v3317 = vadd.f32 0.0, %v3316
        %v3318 = vpop.f32.mrf.mxu0
        %3319 = vmatprep.mubr.bf16.mxu0 0
        %3320 = vmatmul.mubr.bf16.gmra.mxu0 %v3123
        %v3321 = vpop.f32.mrf.mxu0
        %v3322 = vadd.f32 0.0, %v3321
        %v3323 = vpop.f32.mrf.mxu0
        %v3324 = vpop.f32.mrf.mxu0
        %v3325 = vadd.f32 0.0, %v3324
        %v3326 = vpop.f32.mrf.mxu0
        %3327 = vmatprep.mubr.bf16.mxu0 0
        %3328 = vmatmul.mubr.bf16.gmra.mxu0 %v3124
        %v3329 = vpop.f32.mrf.mxu0
        %v3330 = vadd.f32 0.0, %v3329
        %v3331 = vpop.f32.mrf.mxu0
        %v3332 = vpop.f32.mrf.mxu0
        %v3333 = vadd.f32 0.0, %v3332
        %v3334 = vpop.f32.mrf.mxu0
        %3335 = vmatprep.mubr.bf16.mxu0 0
        %3336 = vmatmul.mubr.bf16.gmra.mxu0 %v3125
        %v3337 = vpop.f32.mrf.mxu0
        %v3338 = vadd.f32 0.0, %v3337
        %v3339 = vpop.f32.mrf.mxu0
        %v3340 = vpop.f32.mrf.mxu0
        %v3341 = vadd.f32 0.0, %v3340
        %v3342 = vpop.f32.mrf.mxu0
        %3343 = vmatprep.mubr.bf16.mxu0 0
        %3344 = vmatmul.mubr.bf16.gmra.mxu0 %v3126
        %v3345 = vpop.f32.mrf.mxu0
        %v3346 = vadd.f32 0.0, %v3345
        %v3347 = vpop.f32.mrf.mxu0
        %v3348 = vpop.f32.mrf.mxu0
        %v3349 = vadd.f32 0.0, %v3348
        %v3350 = vpop.f32.mrf.mxu0
        %3351 = vdwg.mxu0
        %v3352 = vadd.f32 %v2854, %v3226
        %v3353 = vadd.f32 %v2855, %v3229
        %v3354 = vadd.f32 %v2856, %v3234
        %v3355 = vadd.f32 %v2857, %v3237
        %v3356 = vadd.f32 %v2858, %v3242
        %v3357 = vadd.f32 %v2859, %v3245
        %v3358 = vadd.f32 %v2860, %v3250
        %v3359 = vadd.f32 %v2861, %v3253
        %v3360 = vadd.f32 %v2862, %v3258
        %v3361 = vadd.f32 %v2863, %v3261
        %v3362 = vadd.f32 %v2864, %v3266
        %v3363 = vadd.f32 %v2865, %v3269
        %v3364 = vadd.f32 %v2866, %v3274
        %v3365 = vadd.f32 %v2867, %v3277
        %v3366 = vadd.f32 %v2868, %v3282
        %v3367 = vadd.f32 %v2869, %v3285
        %v3368 = vadd.f32 %v2870, %v3290
        %v3369 = vadd.f32 %v2871, %v3293
        %v3370 = vadd.f32 %v2872, %v3298
        %v3371 = vadd.f32 %v2873, %v3301
        %v3372 = vadd.f32 %v2874, %v3306
        %v3373 = vadd.f32 %v2875, %v3309
        %v3374 = vadd.f32 %v2876, %v3314
        %v3375 = vadd.f32 %v2877, %v3317
        %v3376 = vadd.f32 %v2878, %v3322
        %v3377 = vadd.f32 %v2879, %v3325
        %v3378 = vadd.f32 %v2880, %v3330
        %v3379 = vadd.f32 %v2881, %v3333
        %v3380 = vadd.f32 %v2882, %v3338
        %v3381 = vadd.f32 %v2883, %v3341
        %v3382 = vadd.f32 %v2884, %v3346
        %v3383 = vadd.f32 %v2885, %v3349
        %s3384 = scalar_lea.vmem %s208, 24
        %v3385 = vld [vmem:[%s3384] sm:$0xf]
        %v3386 = vld [vmem:[%s3384 + $0x4] sm:$0xf]
        %v3387 = vld [vmem:[%s3384 + $0xc] sm:$0xf]
        %v3388 = vld [vmem:[%s3384 + $0x10] sm:$0xf]
        %v3389 = vld [vmem:[%s3384 + $0x18] sm:$0xf]
        %v3390 = vld [vmem:[%s3384 + $0x1c] sm:$0xf]
        %v3391 = vld [vmem:[%s3384 + $0x24] sm:$0xf]
        %v3392 = vld [vmem:[%s3384 + $0x28] sm:$0xf]
        %v3393 = vld [vmem:[%s3384 + $0x30] sm:$0xf]
        %v3394 = vld [vmem:[%s3384 + $0x34] sm:$0xf]
        %v3395 = vld [vmem:[%s3384 + $0x3c] sm:$0xf]
        %v3396 = vld [vmem:[%s3384 + $0x40] sm:$0xf]
        %v3397 = vld [vmem:[%s3384 + $0x48] sm:$0xf]
        %v3398 = vld [vmem:[%s3384 + $0x4c] sm:$0xf]
        %v3399 = vld [vmem:[%s3384 + $0x54] sm:$0xf]
        %v3400 = vld [vmem:[%s3384 + $0x58] sm:$0xf]
        %v3401 = vld [vmem:[%s3384 + $0x60] sm:$0xf]
        %v3402 = vld [vmem:[%s3384 + $0x64] sm:$0xf]
        %v3403 = vld [vmem:[%s3384 + $0x6c] sm:$0xf]
        %v3404 = vld [vmem:[%s3384 + $0x70] sm:$0xf]
        %v3405 = vld [vmem:[%s3384 + $0x78] sm:$0xf]
        %v3406 = vld [vmem:[%s3384 + $0x7c] sm:$0xf]
        %v3407 = vld [vmem:[%s3384 + $0x84] sm:$0xf]
        %v3408 = vld [vmem:[%s3384 + $0x88] sm:$0xf]
        %v3409 = vld [vmem:[%s3384 + $0x90] sm:$0xf]
        %v3410 = vld [vmem:[%s3384 + $0x94] sm:$0xf]
        %v3411 = vld [vmem:[%s3384 + $0x9c] sm:$0xf]
        %v3412 = vld [vmem:[%s3384 + $0xa0] sm:$0xf]
        %v3413 = vld [vmem:[%s3384 + $0xa8] sm:$0xf]
        %v3414 = vld [vmem:[%s3384 + $0xac] sm:$0xf]
        %v3415 = vld [vmem:[%s3384 + $0xb4] sm:$0xf]
        %v3416 = vld [vmem:[%s3384 + $0xb8] sm:$0xf]
        %s3417 = scalar_lea.vmem %s212, 384
        %v3418 = vld [vmem:[%s3417] sm:$0xf]
        %v3419 = vld [vmem:[%s3417 + $0x4] sm:$0xf]
        %v3420 = vld [vmem:[%s3417 + $0x8] sm:$0xf]
        %v3421 = vld [vmem:[%s3417 + $0xc] sm:$0xf]
        %v3422 = vld [vmem:[%s3417 + $0x10] sm:$0xf]
        %v3423 = vld [vmem:[%s3417 + $0x14] sm:$0xf]
        %v3424 = vld [vmem:[%s3417 + $0x18] sm:$0xf]
        %v3425 = vld [vmem:[%s3417 + $0x1c] sm:$0xf]
        %v3426 = vld [vmem:[%s3417 + $0x20] sm:$0xf]
        %v3427 = vld [vmem:[%s3417 + $0x24] sm:$0xf]
        %v3428 = vld [vmem:[%s3417 + $0x28] sm:$0xf]
        %v3429 = vld [vmem:[%s3417 + $0x2c] sm:$0xf]
        %v3430 = vld [vmem:[%s3417 + $0x30] sm:$0xf]
        %v3431 = vld [vmem:[%s3417 + $0x34] sm:$0xf]
        %v3432 = vld [vmem:[%s3417 + $0x38] sm:$0xf]
        %v3433 = vld [vmem:[%s3417 + $0x3c] sm:$0xf]
        %v3466 = vunpack.c.l.b16 %v3385
        %v3467 = vunpack.c.l.b16 %v3386
        %v3468 = vunpack.c.l.b16 %v3387
        %v3469 = vunpack.c.l.b16 %v3388
        %v3470 = vunpack.c.l.b16 %v3389
        %v3471 = vunpack.c.l.b16 %v3390
        %v3472 = vunpack.c.l.b16 %v3391
        %v3473 = vunpack.c.l.b16 %v3392
        %v3474 = vunpack.c.l.b16 %v3393
        %v3475 = vunpack.c.l.b16 %v3394
        %v3476 = vunpack.c.l.b16 %v3395
        %v3477 = vunpack.c.l.b16 %v3396
        %v3478 = vunpack.c.l.b16 %v3397
        %v3479 = vunpack.c.l.b16 %v3398
        %v3480 = vunpack.c.l.b16 %v3399
        %v3481 = vunpack.c.l.b16 %v3400
        %v3482 = vunpack.c.l.b16 %v3401
        %v3483 = vunpack.c.l.b16 %v3402
        %v3484 = vunpack.c.l.b16 %v3403
        %v3485 = vunpack.c.l.b16 %v3404
        %v3486 = vunpack.c.l.b16 %v3405
        %v3487 = vunpack.c.l.b16 %v3406
        %v3488 = vunpack.c.l.b16 %v3407
        %v3489 = vunpack.c.l.b16 %v3408
        %v3490 = vunpack.c.l.b16 %v3409
        %v3491 = vunpack.c.l.b16 %v3410
        %v3492 = vunpack.c.l.b16 %v3411
        %v3493 = vunpack.c.l.b16 %v3412
        %v3494 = vunpack.c.l.b16 %v3413
        %v3495 = vunpack.c.l.b16 %v3414
        %v3496 = vunpack.c.l.b16 %v3415
        %v3497 = vunpack.c.l.b16 %v3416
        %v3498 = vpack.c.b16 %v3467, %v3466
        %v3499 = vpack.c.b16 %v3469, %v3468
        %v3500 = vpack.c.b16 %v3471, %v3470
        %v3501 = vpack.c.b16 %v3473, %v3472
        %v3502 = vpack.c.b16 %v3475, %v3474
        %v3503 = vpack.c.b16 %v3477, %v3476
        %v3504 = vpack.c.b16 %v3479, %v3478
        %v3505 = vpack.c.b16 %v3481, %v3480
        %v3506 = vpack.c.b16 %v3483, %v3482
        %v3507 = vpack.c.b16 %v3485, %v3484
        %v3508 = vpack.c.b16 %v3487, %v3486
        %v3509 = vpack.c.b16 %v3489, %v3488
        %v3510 = vpack.c.b16 %v3491, %v3490
        %v3511 = vpack.c.b16 %v3493, %v3492
        %v3512 = vpack.c.b16 %v3495, %v3494
        %v3513 = vpack.c.b16 %v3497, %v3496
        %v3546 = vunpack.c.l.b16 %v3418
        %v3547 = vunpack.c.l.b16 %v3419
        %v3548 = vunpack.c.l.b16 %v3420
        %v3549 = vunpack.c.l.b16 %v3421
        %v3550 = vunpack.c.l.b16 %v3422
        %v3551 = vunpack.c.l.b16 %v3423
        %v3552 = vunpack.c.l.b16 %v3424
        %v3553 = vunpack.c.l.b16 %v3425
        %v3554 = vunpack.c.l.b16 %v3426
        %v3555 = vunpack.c.l.b16 %v3427
        %v3556 = vunpack.c.l.b16 %v3428
        %v3557 = vunpack.c.l.b16 %v3429
        %v3558 = vunpack.c.l.b16 %v3430
        %v3559 = vunpack.c.l.b16 %v3431
        %v3560 = vunpack.c.l.b16 %v3432
        %v3561 = vunpack.c.l.b16 %v3433
        %v3562 = vpack.c.b16 %v3547, %v3546
        %v3563 = vpack.c.b16 %v3549, %v3548
        %v3564 = vpack.c.b16 %v3551, %v3550
        %v3565 = vpack.c.b16 %v3553, %v3552
        %v3566 = vpack.c.b16 %v3555, %v3554
        %v3567 = vpack.c.b16 %v3557, %v3556
        %v3568 = vpack.c.b16 %v3559, %v3558
        %v3569 = vpack.c.b16 %v3561, %v3560
        %3578 = vmatprep.subr.bf16.mxu0 0
        %3579 = vmatpush1.bf16.msra.mxu0 %v3569
        %3580 = vmatprep.subr.bf16.mxu0 0
        %3581 = vmatpush1.bf16.msra.mxu0 %v3568
        %3582 = vmatprep.subr.bf16.mxu0 0
        %3583 = vmatpush1.bf16.msra.mxu0 %v3567
        %3584 = vmatprep.subr.bf16.mxu0 0
        %3585 = vmatpush1.bf16.msra.mxu0 %v3566
        %3586 = vmatprep.subr.bf16.mxu0 0
        %3587 = vmatpush1.bf16.msra.mxu0 %v3565
        %3588 = vmatprep.subr.bf16.mxu0 0
        %3589 = vmatpush1.bf16.msra.mxu0 %v3564
        %3590 = vmatprep.subr.bf16.mxu0 0
        %3591 = vmatpush1.bf16.msra.mxu0 %v3563
        %3592 = vmatprep.subr.bf16.mxu0 0
        %3593 = vmatpush1.bf16.msra.mxu0 %v3562
        %3594 = vmatprep.subr.bf16.mxu0 0
        %3595 = vmatpush2.bf16.msra.mxu0 0
        %3596 = vmatprep.subr.bf16.mxu0 0
        %3597 = vmatpush2.bf16.msra.mxu0 0
        %3598 = vmatprep.subr.bf16.mxu0 0
        %3599 = vmatpush2.bf16.msra.mxu0 0
        %3600 = vmatprep.subr.bf16.mxu0 0
        %3601 = vmatpush2.bf16.msra.mxu0 0
        %3602 = vmatprep.subr.bf16.mxu0 0
        %3603 = vmatpush2.bf16.msra.mxu0 0
        %3604 = vmatprep.subr.bf16.mxu0 0
        %3605 = vmatpush2.bf16.msra.mxu0 0
        %3606 = vmatprep.subr.bf16.mxu0 0
        %3607 = vmatpush2.bf16.msra.mxu0 0
        %3608 = vmatprep.subr.bf16.mxu0 0
        %3609 = vmatpush2.bf16.msra.mxu0 0
        %3610 = vmatprep.mubr.bf16.mxu0 0
        %3611 = vmatmul.mubr.bf16.gmra.mxu0 %v3498
        %v3612 = vpop.f32.mrf.mxu0
        %v3613 = vadd.f32 0.0, %v3612
        %v3614 = vpop.f32.mrf.mxu0
        %v3615 = vpop.f32.mrf.mxu0
        %v3616 = vadd.f32 0.0, %v3615
        %v3617 = vpop.f32.mrf.mxu0
        %3618 = vmatprep.mubr.bf16.mxu0 0
        %3619 = vmatmul.mubr.bf16.gmra.mxu0 %v3499
        %v3620 = vpop.f32.mrf.mxu0
        %v3621 = vadd.f32 0.0, %v3620
        %v3622 = vpop.f32.mrf.mxu0
        %v3623 = vpop.f32.mrf.mxu0
        %v3624 = vadd.f32 0.0, %v3623
        %v3625 = vpop.f32.mrf.mxu0
        %3626 = vmatprep.mubr.bf16.mxu0 0
        %3627 = vmatmul.mubr.bf16.gmra.mxu0 %v3500
        %v3628 = vpop.f32.mrf.mxu0
        %v3629 = vadd.f32 0.0, %v3628
        %v3630 = vpop.f32.mrf.mxu0
        %v3631 = vpop.f32.mrf.mxu0
        %v3632 = vadd.f32 0.0, %v3631
        %v3633 = vpop.f32.mrf.mxu0
        %3634 = vmatprep.mubr.bf16.mxu0 0
        %3635 = vmatmul.mubr.bf16.gmra.mxu0 %v3501
        %v3636 = vpop.f32.mrf.mxu0
        %v3637 = vadd.f32 0.0, %v3636
        %v3638 = vpop.f32.mrf.mxu0
        %v3639 = vpop.f32.mrf.mxu0
        %v3640 = vadd.f32 0.0, %v3639
        %v3641 = vpop.f32.mrf.mxu0
        %3642 = vmatprep.mubr.bf16.mxu0 0
        %3643 = vmatmul.mubr.bf16.gmra.mxu0 %v3502
        %v3644 = vpop.f32.mrf.mxu0
        %v3645 = vadd.f32 0.0, %v3644
        %v3646 = vpop.f32.mrf.mxu0
        %v3647 = vpop.f32.mrf.mxu0
        %v3648 = vadd.f32 0.0, %v3647
        %v3649 = vpop.f32.mrf.mxu0
        %3650 = vmatprep.mubr.bf16.mxu0 0
        %3651 = vmatmul.mubr.bf16.gmra.mxu0 %v3503
        %v3652 = vpop.f32.mrf.mxu0
        %v3653 = vadd.f32 0.0, %v3652
        %v3654 = vpop.f32.mrf.mxu0
        %v3655 = vpop.f32.mrf.mxu0
        %v3656 = vadd.f32 0.0, %v3655
        %v3657 = vpop.f32.mrf.mxu0
        %3658 = vmatprep.mubr.bf16.mxu0 0
        %3659 = vmatmul.mubr.bf16.gmra.mxu0 %v3504
        %v3660 = vpop.f32.mrf.mxu0
        %v3661 = vadd.f32 0.0, %v3660
        %v3662 = vpop.f32.mrf.mxu0
        %v3663 = vpop.f32.mrf.mxu0
        %v3664 = vadd.f32 0.0, %v3663
        %v3665 = vpop.f32.mrf.mxu0
        %3666 = vmatprep.mubr.bf16.mxu0 0
        %3667 = vmatmul.mubr.bf16.gmra.mxu0 %v3505
        %v3668 = vpop.f32.mrf.mxu0
        %v3669 = vadd.f32 0.0, %v3668
        %v3670 = vpop.f32.mrf.mxu0
        %v3671 = vpop.f32.mrf.mxu0
        %v3672 = vadd.f32 0.0, %v3671
        %v3673 = vpop.f32.mrf.mxu0
        %3674 = vmatprep.mubr.bf16.mxu0 0
        %3675 = vmatmul.mubr.bf16.gmra.mxu0 %v3506
        %v3676 = vpop.f32.mrf.mxu0
        %v3677 = vadd.f32 0.0, %v3676
        %v3678 = vpop.f32.mrf.mxu0
        %v3679 = vpop.f32.mrf.mxu0
        %v3680 = vadd.f32 0.0, %v3679
        %v3681 = vpop.f32.mrf.mxu0
        %3682 = vmatprep.mubr.bf16.mxu0 0
        %3683 = vmatmul.mubr.bf16.gmra.mxu0 %v3507
        %v3684 = vpop.f32.mrf.mxu0
        %v3685 = vadd.f32 0.0, %v3684
        %v3686 = vpop.f32.mrf.mxu0
        %v3687 = vpop.f32.mrf.mxu0
        %v3688 = vadd.f32 0.0, %v3687
        %v3689 = vpop.f32.mrf.mxu0
        %3690 = vmatprep.mubr.bf16.mxu0 0
        %3691 = vmatmul.mubr.bf16.gmra.mxu0 %v3508
        %v3692 = vpop.f32.mrf.mxu0
        %v3693 = vadd.f32 0.0, %v3692
        %v3694 = vpop.f32.mrf.mxu0
        %v3695 = vpop.f32.mrf.mxu0
        %v3696 = vadd.f32 0.0, %v3695
        %v3697 = vpop.f32.mrf.mxu0
        %3698 = vmatprep.mubr.bf16.mxu0 0
        %3699 = vmatmul.mubr.bf16.gmra.mxu0 %v3509
        %v3700 = vpop.f32.mrf.mxu0
        %v3701 = vadd.f32 0.0, %v3700
        %v3702 = vpop.f32.mrf.mxu0
        %v3703 = vpop.f32.mrf.mxu0
        %v3704 = vadd.f32 0.0, %v3703
        %v3705 = vpop.f32.mrf.mxu0
        %3706 = vmatprep.mubr.bf16.mxu0 0
        %3707 = vmatmul.mubr.bf16.gmra.mxu0 %v3510
        %v3708 = vpop.f32.mrf.mxu0
        %v3709 = vadd.f32 0.0, %v3708
        %v3710 = vpop.f32.mrf.mxu0
        %v3711 = vpop.f32.mrf.mxu0
        %v3712 = vadd.f32 0.0, %v3711
        %v3713 = vpop.f32.mrf.mxu0
        %3714 = vmatprep.mubr.bf16.mxu0 0
        %3715 = vmatmul.mubr.bf16.gmra.mxu0 %v3511
        %v3716 = vpop.f32.mrf.mxu0
        %v3717 = vadd.f32 0.0, %v3716
        %v3718 = vpop.f32.mrf.mxu0
        %v3719 = vpop.f32.mrf.mxu0
        %v3720 = vadd.f32 0.0, %v3719
        %v3721 = vpop.f32.mrf.mxu0
        %3722 = vmatprep.mubr.bf16.mxu0 0
        %3723 = vmatmul.mubr.bf16.gmra.mxu0 %v3512
        %v3724 = vpop.f32.mrf.mxu0
        %v3725 = vadd.f32 0.0, %v3724
        %v3726 = vpop.f32.mrf.mxu0
        %v3727 = vpop.f32.mrf.mxu0
        %v3728 = vadd.f32 0.0, %v3727
        %v3729 = vpop.f32.mrf.mxu0
        %3730 = vmatprep.mubr.bf16.mxu0 0
        %3731 = vmatmul.mubr.bf16.gmra.mxu0 %v3513
        %v3732 = vpop.f32.mrf.mxu0
        %v3733 = vadd.f32 0.0, %v3732
        %v3734 = vpop.f32.mrf.mxu0
        %v3735 = vpop.f32.mrf.mxu0
        %v3736 = vadd.f32 0.0, %v3735
        %v3737 = vpop.f32.mrf.mxu0
        %3738 = vdwg.mxu0
        %v3739 = vadd.f32 %v3352, %v3613
        %v3740 = vadd.f32 %v3353, %v3616
        %v3741 = vadd.f32 %v3354, %v3621
        %v3742 = vadd.f32 %v3355, %v3624
        %v3743 = vadd.f32 %v3356, %v3629
        %v3744 = vadd.f32 %v3357, %v3632
        %v3745 = vadd.f32 %v3358, %v3637
        %v3746 = vadd.f32 %v3359, %v3640
        %v3747 = vadd.f32 %v3360, %v3645
        %v3748 = vadd.f32 %v3361, %v3648
        %v3749 = vadd.f32 %v3362, %v3653
        %v3750 = vadd.f32 %v3363, %v3656
        %v3751 = vadd.f32 %v3364, %v3661
        %v3752 = vadd.f32 %v3365, %v3664
        %v3753 = vadd.f32 %v3366, %v3669
        %v3754 = vadd.f32 %v3367, %v3672
        %v3755 = vadd.f32 %v3368, %v3677
        %v3756 = vadd.f32 %v3369, %v3680
        %v3757 = vadd.f32 %v3370, %v3685
        %v3758 = vadd.f32 %v3371, %v3688
        %v3759 = vadd.f32 %v3372, %v3693
        %v3760 = vadd.f32 %v3373, %v3696
        %v3761 = vadd.f32 %v3374, %v3701
        %v3762 = vadd.f32 %v3375, %v3704
        %v3763 = vadd.f32 %v3376, %v3709
        %v3764 = vadd.f32 %v3377, %v3712
        %v3765 = vadd.f32 %v3378, %v3717
        %v3766 = vadd.f32 %v3379, %v3720
        %v3767 = vadd.f32 %v3380, %v3725
        %v3768 = vadd.f32 %v3381, %v3728
        %v3769 = vadd.f32 %v3382, %v3733
        %v3770 = vadd.f32 %v3383, %v3736
        %v3771 = vld [vmem:[%s3384] sm:$0xf]
        %v3772 = vld [vmem:[%s3384 + $0x4] sm:$0xf]
        %v3773 = vld [vmem:[%s3384 + $0x8] sm:$0x1]
        %v3774 = vld [vmem:[%s3384 + $0xc] sm:$0xf]
        %v3775 = vld [vmem:[%s3384 + $0x10] sm:$0xf]
        %v3776 = vld [vmem:[%s3384 + $0x14] sm:$0x1]
        %v3777 = vld [vmem:[%s3384 + $0x18] sm:$0xf]
        %v3778 = vld [vmem:[%s3384 + $0x1c] sm:$0xf]
        %v3779 = vld [vmem:[%s3384 + $0x20] sm:$0x1]
        %v3780 = vld [vmem:[%s3384 + $0x24] sm:$0xf]
        %v3781 = vld [vmem:[%s3384 + $0x28] sm:$0xf]
        %v3782 = vld [vmem:[%s3384 + $0x2c] sm:$0x1]
        %v3783 = vld [vmem:[%s3384 + $0x30] sm:$0xf]
        %v3784 = vld [vmem:[%s3384 + $0x34] sm:$0xf]
        %v3785 = vld [vmem:[%s3384 + $0x38] sm:$0x1]
        %v3786 = vld [vmem:[%s3384 + $0x3c] sm:$0xf]
        %v3787 = vld [vmem:[%s3384 + $0x40] sm:$0xf]
        %v3788 = vld [vmem:[%s3384 + $0x44] sm:$0x1]
        %v3789 = vld [vmem:[%s3384 + $0x48] sm:$0xf]
        %v3790 = vld [vmem:[%s3384 + $0x4c] sm:$0xf]
        %v3791 = vld [vmem:[%s3384 + $0x50] sm:$0x1]
        %v3792 = vld [vmem:[%s3384 + $0x54] sm:$0xf]
        %v3793 = vld [vmem:[%s3384 + $0x58] sm:$0xf]
        %v3794 = vld [vmem:[%s3384 + $0x5c] sm:$0x1]
        %v3795 = vld [vmem:[%s3384 + $0x60] sm:$0xf]
        %v3796 = vld [vmem:[%s3384 + $0x64] sm:$0xf]
        %v3797 = vld [vmem:[%s3384 + $0x68] sm:$0x1]
        %v3798 = vld [vmem:[%s3384 + $0x6c] sm:$0xf]
        %v3799 = vld [vmem:[%s3384 + $0x70] sm:$0xf]
        %v3800 = vld [vmem:[%s3384 + $0x74] sm:$0x1]
        %v3801 = vld [vmem:[%s3384 + $0x78] sm:$0xf]
        %v3802 = vld [vmem:[%s3384 + $0x7c] sm:$0xf]
        %v3803 = vld [vmem:[%s3384 + $0x80] sm:$0x1]
        %v3804 = vld [vmem:[%s3384 + $0x84] sm:$0xf]
        %v3805 = vld [vmem:[%s3384 + $0x88] sm:$0xf]
        %v3806 = vld [vmem:[%s3384 + $0x8c] sm:$0x1]
        %v3807 = vld [vmem:[%s3384 + $0x90] sm:$0xf]
        %v3808 = vld [vmem:[%s3384 + $0x94] sm:$0xf]
        %v3809 = vld [vmem:[%s3384 + $0x98] sm:$0x1]
        %v3810 = vld [vmem:[%s3384 + $0x9c] sm:$0xf]
        %v3811 = vld [vmem:[%s3384 + $0xa0] sm:$0xf]
        %v3812 = vld [vmem:[%s3384 + $0xa4] sm:$0x1]
        %v3813 = vld [vmem:[%s3384 + $0xa8] sm:$0xf]
        %v3814 = vld [vmem:[%s3384 + $0xac] sm:$0xf]
        %v3815 = vld [vmem:[%s3384 + $0xb0] sm:$0x1]
        %v3816 = vld [vmem:[%s3384 + $0xb4] sm:$0xf]
        %v3817 = vld [vmem:[%s3384 + $0xb8] sm:$0xf]
        %v3818 = vld [vmem:[%s3384 + $0xbc] sm:$0x1]
        %v3820 = vshrl.u32 %v3771, 16
        %v3822 = vrot.slane %v3820, 4
        %v3823 = vshll.u32 %v3771, 16
        %v3825 = vrot.slane %v3823, 5
        %v3826 = vor.u32 %v3822, %v3825
        %v3827 = vrot.slane %v3826, 4
        %v3829 = vshll.u32 %v3772, 16
        %v3831 = vrot.slane %v3829, 5
        %v3832 = vsel %vm280, %v3827, %v3831
        %v3833 = vshrl.u32 %v3772, 16
        %v3835 = vrot.slane %v3833, 4
        %v3836 = vor.u32 %v3835, %v3831
        %v3837 = vrot.slane %v3836, 4
        %v3839 = vshll.u32 %v3773, 16
        %v3841 = vrot.slane %v3839, 5
        %v3842 = vsel %vm280, %v3837, %v3841
        %v3844 = vshrl.u32 %v3774, 16
        %v3846 = vrot.slane %v3844, 4
        %v3847 = vshll.u32 %v3774, 16
        %v3849 = vrot.slane %v3847, 5
        %v3850 = vor.u32 %v3846, %v3849
        %v3851 = vrot.slane %v3850, 4
        %v3853 = vshll.u32 %v3775, 16
        %v3855 = vrot.slane %v3853, 5
        %v3856 = vsel %vm280, %v3851, %v3855
        %v3857 = vshrl.u32 %v3775, 16
        %v3859 = vrot.slane %v3857, 4
        %v3860 = vor.u32 %v3859, %v3855
        %v3861 = vrot.slane %v3860, 4
        %v3863 = vshll.u32 %v3776, 16
        %v3865 = vrot.slane %v3863, 5
        %v3866 = vsel %vm280, %v3861, %v3865
        %v3868 = vshrl.u32 %v3777, 16
        %v3870 = vrot.slane %v3868, 4
        %v3871 = vshll.u32 %v3777, 16
        %v3873 = vrot.slane %v3871, 5
        %v3874 = vor.u32 %v3870, %v3873
        %v3875 = vrot.slane %v3874, 4
        %v3877 = vshll.u32 %v3778, 16
        %v3879 = vrot.slane %v3877, 5
        %v3880 = vsel %vm280, %v3875, %v3879
        %v3881 = vshrl.u32 %v3778, 16
        %v3883 = vrot.slane %v3881, 4
        %v3884 = vor.u32 %v3883, %v3879
        %v3885 = vrot.slane %v3884, 4
        %v3887 = vshll.u32 %v3779, 16
        %v3889 = vrot.slane %v3887, 5
        %v3890 = vsel %vm280, %v3885, %v3889
        %v3892 = vshrl.u32 %v3780, 16
        %v3894 = vrot.slane %v3892, 4
        %v3895 = vshll.u32 %v3780, 16
        %v3897 = vrot.slane %v3895, 5
        %v3898 = vor.u32 %v3894, %v3897
        %v3899 = vrot.slane %v3898, 4
        %v3901 = vshll.u32 %v3781, 16
        %v3903 = vrot.slane %v3901, 5
        %v3904 = vsel %vm280, %v3899, %v3903
        %v3905 = vshrl.u32 %v3781, 16
        %v3907 = vrot.slane %v3905, 4
        %v3908 = vor.u32 %v3907, %v3903
        %v3909 = vrot.slane %v3908, 4
        %v3911 = vshll.u32 %v3782, 16
        %v3913 = vrot.slane %v3911, 5
        %v3914 = vsel %vm280, %v3909, %v3913
        %v3916 = vshrl.u32 %v3783, 16
        %v3918 = vrot.slane %v3916, 4
        %v3919 = vshll.u32 %v3783, 16
        %v3921 = vrot.slane %v3919, 5
        %v3922 = vor.u32 %v3918, %v3921
        %v3923 = vrot.slane %v3922, 4
        %v3925 = vshll.u32 %v3784, 16
        %v3927 = vrot.slane %v3925, 5
        %v3928 = vsel %vm280, %v3923, %v3927
        %v3929 = vshrl.u32 %v3784, 16
        %v3931 = vrot.slane %v3929, 4
        %v3932 = vor.u32 %v3931, %v3927
        %v3933 = vrot.slane %v3932, 4
        %v3935 = vshll.u32 %v3785, 16
        %v3937 = vrot.slane %v3935, 5
        %v3938 = vsel %vm280, %v3933, %v3937
        %v3940 = vshrl.u32 %v3786, 16
        %v3942 = vrot.slane %v3940, 4
        %v3943 = vshll.u32 %v3786, 16
        %v3945 = vrot.slane %v3943, 5
        %v3946 = vor.u32 %v3942, %v3945
        %v3947 = vrot.slane %v3946, 4
        %v3949 = vshll.u32 %v3787, 16
        %v3951 = vrot.slane %v3949, 5
        %v3952 = vsel %vm280, %v3947, %v3951
        %v3953 = vshrl.u32 %v3787, 16
        %v3955 = vrot.slane %v3953, 4
        %v3956 = vor.u32 %v3955, %v3951
        %v3957 = vrot.slane %v3956, 4
        %v3959 = vshll.u32 %v3788, 16
        %v3961 = vrot.slane %v3959, 5
        %v3962 = vsel %vm280, %v3957, %v3961
        %v3964 = vshrl.u32 %v3789, 16
        %v3966 = vrot.slane %v3964, 4
        %v3967 = vshll.u32 %v3789, 16
        %v3969 = vrot.slane %v3967, 5
        %v3970 = vor.u32 %v3966, %v3969
        %v3971 = vrot.slane %v3970, 4
        %v3973 = vshll.u32 %v3790, 16
        %v3975 = vrot.slane %v3973, 5
        %v3976 = vsel %vm280, %v3971, %v3975
        %v3977 = vshrl.u32 %v3790, 16
        %v3979 = vrot.slane %v3977, 4
        %v3980 = vor.u32 %v3979, %v3975
        %v3981 = vrot.slane %v3980, 4
        %v3983 = vshll.u32 %v3791, 16
        %v3985 = vrot.slane %v3983, 5
        %v3986 = vsel %vm280, %v3981, %v3985
        %v3988 = vshrl.u32 %v3792, 16
        %v3990 = vrot.slane %v3988, 4
        %v3991 = vshll.u32 %v3792, 16
        %v3993 = vrot.slane %v3991, 5
        %v3994 = vor.u32 %v3990, %v3993
        %v3995 = vrot.slane %v3994, 4
        %v3997 = vshll.u32 %v3793, 16
        %v3999 = vrot.slane %v3997, 5
        %v4000 = vsel %vm280, %v3995, %v3999
        %v4001 = vshrl.u32 %v3793, 16
        %v4003 = vrot.slane %v4001, 4
        %v4004 = vor.u32 %v4003, %v3999
        %v4005 = vrot.slane %v4004, 4
        %v4007 = vshll.u32 %v3794, 16
        %v4009 = vrot.slane %v4007, 5
        %v4010 = vsel %vm280, %v4005, %v4009
        %v4012 = vshrl.u32 %v3795, 16
        %v4014 = vrot.slane %v4012, 4
        %v4015 = vshll.u32 %v3795, 16
        %v4017 = vrot.slane %v4015, 5
        %v4018 = vor.u32 %v4014, %v4017
        %v4019 = vrot.slane %v4018, 4
        %v4021 = vshll.u32 %v3796, 16
        %v4023 = vrot.slane %v4021, 5
        %v4024 = vsel %vm280, %v4019, %v4023
        %v4025 = vshrl.u32 %v3796, 16
        %v4027 = vrot.slane %v4025, 4
        %v4028 = vor.u32 %v4027, %v4023
        %v4029 = vrot.slane %v4028, 4
        %v4031 = vshll.u32 %v3797, 16
        %v4033 = vrot.slane %v4031, 5
        %v4034 = vsel %vm280, %v4029, %v4033
        %v4036 = vshrl.u32 %v3798, 16
        %v4038 = vrot.slane %v4036, 4
        %v4039 = vshll.u32 %v3798, 16
        %v4041 = vrot.slane %v4039, 5
        %v4042 = vor.u32 %v4038, %v4041
        %v4043 = vrot.slane %v4042, 4
        %v4045 = vshll.u32 %v3799, 16
        %v4047 = vrot.slane %v4045, 5
        %v4048 = vsel %vm280, %v4043, %v4047
        %v4049 = vshrl.u32 %v3799, 16
        %v4051 = vrot.slane %v4049, 4
        %v4052 = vor.u32 %v4051, %v4047
        %v4053 = vrot.slane %v4052, 4
        %v4055 = vshll.u32 %v3800, 16
        %v4057 = vrot.slane %v4055, 5
        %v4058 = vsel %vm280, %v4053, %v4057
        %v4060 = vshrl.u32 %v3801, 16
        %v4062 = vrot.slane %v4060, 4
        %v4063 = vshll.u32 %v3801, 16
        %v4065 = vrot.slane %v4063, 5
        %v4066 = vor.u32 %v4062, %v4065
        %v4067 = vrot.slane %v4066, 4
        %v4069 = vshll.u32 %v3802, 16
        %v4071 = vrot.slane %v4069, 5
        %v4072 = vsel %vm280, %v4067, %v4071
        %v4073 = vshrl.u32 %v3802, 16
        %v4075 = vrot.slane %v4073, 4
        %v4076 = vor.u32 %v4075, %v4071
        %v4077 = vrot.slane %v4076, 4
        %v4079 = vshll.u32 %v3803, 16
        %v4081 = vrot.slane %v4079, 5
        %v4082 = vsel %vm280, %v4077, %v4081
        %v4084 = vshrl.u32 %v3804, 16
        %v4086 = vrot.slane %v4084, 4
        %v4087 = vshll.u32 %v3804, 16
        %v4089 = vrot.slane %v4087, 5
        %v4090 = vor.u32 %v4086, %v4089
        %v4091 = vrot.slane %v4090, 4
        %v4093 = vshll.u32 %v3805, 16
        %v4095 = vrot.slane %v4093, 5
        %v4096 = vsel %vm280, %v4091, %v4095
        %v4097 = vshrl.u32 %v3805, 16
        %v4099 = vrot.slane %v4097, 4
        %v4100 = vor.u32 %v4099, %v4095
        %v4101 = vrot.slane %v4100, 4
        %v4103 = vshll.u32 %v3806, 16
        %v4105 = vrot.slane %v4103, 5
        %v4106 = vsel %vm280, %v4101, %v4105
        %v4108 = vshrl.u32 %v3807, 16
        %v4110 = vrot.slane %v4108, 4
        %v4111 = vshll.u32 %v3807, 16
        %v4113 = vrot.slane %v4111, 5
        %v4114 = vor.u32 %v4110, %v4113
        %v4115 = vrot.slane %v4114, 4
        %v4117 = vshll.u32 %v3808, 16
        %v4119 = vrot.slane %v4117, 5
        %v4120 = vsel %vm280, %v4115, %v4119
        %v4121 = vshrl.u32 %v3808, 16
        %v4123 = vrot.slane %v4121, 4
        %v4124 = vor.u32 %v4123, %v4119
        %v4125 = vrot.slane %v4124, 4
        %v4127 = vshll.u32 %v3809, 16
        %v4129 = vrot.slane %v4127, 5
        %v4130 = vsel %vm280, %v4125, %v4129
        %v4132 = vshrl.u32 %v3810, 16
        %v4134 = vrot.slane %v4132, 4
        %v4135 = vshll.u32 %v3810, 16
        %v4137 = vrot.slane %v4135, 5
        %v4138 = vor.u32 %v4134, %v4137
        %v4139 = vrot.slane %v4138, 4
        %v4141 = vshll.u32 %v3811, 16
        %v4143 = vrot.slane %v4141, 5
        %v4144 = vsel %vm280, %v4139, %v4143
        %v4145 = vshrl.u32 %v3811, 16
        %v4147 = vrot.slane %v4145, 4
        %v4148 = vor.u32 %v4147, %v4143
        %v4149 = vrot.slane %v4148, 4
        %v4151 = vshll.u32 %v3812, 16
        %v4153 = vrot.slane %v4151, 5
        %v4154 = vsel %vm280, %v4149, %v4153
        %v4156 = vshrl.u32 %v3813, 16
        %v4158 = vrot.slane %v4156, 4
        %v4159 = vshll.u32 %v3813, 16
        %v4161 = vrot.slane %v4159, 5
        %v4162 = vor.u32 %v4158, %v4161
        %v4163 = vrot.slane %v4162, 4
        %v4165 = vshll.u32 %v3814, 16
        %v4167 = vrot.slane %v4165, 5
        %v4168 = vsel %vm280, %v4163, %v4167
        %v4169 = vshrl.u32 %v3814, 16
        %v4171 = vrot.slane %v4169, 4
        %v4172 = vor.u32 %v4171, %v4167
        %v4173 = vrot.slane %v4172, 4
        %v4175 = vshll.u32 %v3815, 16
        %v4177 = vrot.slane %v4175, 5
        %v4178 = vsel %vm280, %v4173, %v4177
        %v4180 = vshrl.u32 %v3816, 16
        %v4182 = vrot.slane %v4180, 4
        %v4183 = vshll.u32 %v3816, 16
        %v4185 = vrot.slane %v4183, 5
        %v4186 = vor.u32 %v4182, %v4185
        %v4187 = vrot.slane %v4186, 4
        %v4189 = vshll.u32 %v3817, 16
        %v4191 = vrot.slane %v4189, 5
        %v4192 = vsel %vm280, %v4187, %v4191
        %v4193 = vshrl.u32 %v3817, 16
        %v4195 = vrot.slane %v4193, 4
        %v4196 = vor.u32 %v4195, %v4191
        %v4197 = vrot.slane %v4196, 4
        %v4199 = vshll.u32 %v3818, 16
        %v4201 = vrot.slane %v4199, 5
        %v4202 = vsel %vm280, %v4197, %v4201
        %s4203 = scalar_lea.vmem %s212, 448
        %v4204 = vld [vmem:[%s4203] sm:$0xf]
        %v4205 = vld [vmem:[%s4203 + $0x4] sm:$0xf]
        %v4206 = vld [vmem:[%s4203 + $0x8] sm:$0xf]
        %v4207 = vld [vmem:[%s4203 + $0xc] sm:$0xf]
        %v4208 = vld [vmem:[%s4203 + $0x10] sm:$0xf]
        %v4209 = vld [vmem:[%s4203 + $0x14] sm:$0xf]
        %v4210 = vld [vmem:[%s4203 + $0x18] sm:$0xf]
        %v4211 = vld [vmem:[%s4203 + $0x1c] sm:$0xf]
        %v4212 = vld [vmem:[%s4203 + $0x20] sm:$0xf]
        %v4213 = vld [vmem:[%s4203 + $0x24] sm:$0xf]
        %v4214 = vld [vmem:[%s4203 + $0x28] sm:$0xf]
        %v4215 = vld [vmem:[%s4203 + $0x2c] sm:$0xf]
        %v4216 = vld [vmem:[%s4203 + $0x30] sm:$0xf]
        %v4217 = vld [vmem:[%s4203 + $0x34] sm:$0xf]
        %v4218 = vld [vmem:[%s4203 + $0x38] sm:$0xf]
        %v4219 = vld [vmem:[%s4203 + $0x3c] sm:$0xf]
        %v4220 = vunpack.c.l.b16 %v3832
        %v4221 = vunpack.c.l.b16 %v3842
        %v4222 = vunpack.c.l.b16 %v3856
        %v4223 = vunpack.c.l.b16 %v3866
        %v4224 = vunpack.c.l.b16 %v3880
        %v4225 = vunpack.c.l.b16 %v3890
        %v4226 = vunpack.c.l.b16 %v3904
        %v4227 = vunpack.c.l.b16 %v3914
        %v4228 = vunpack.c.l.b16 %v3928
        %v4229 = vunpack.c.l.b16 %v3938
        %v4230 = vunpack.c.l.b16 %v3952
        %v4231 = vunpack.c.l.b16 %v3962
        %v4232 = vunpack.c.l.b16 %v3976
        %v4233 = vunpack.c.l.b16 %v3986
        %v4234 = vunpack.c.l.b16 %v4000
        %v4235 = vunpack.c.l.b16 %v4010
        %v4236 = vunpack.c.l.b16 %v4024
        %v4237 = vunpack.c.l.b16 %v4034
        %v4238 = vunpack.c.l.b16 %v4048
        %v4239 = vunpack.c.l.b16 %v4058
        %v4240 = vunpack.c.l.b16 %v4072
        %v4241 = vunpack.c.l.b16 %v4082
        %v4242 = vunpack.c.l.b16 %v4096
        %v4243 = vunpack.c.l.b16 %v4106
        %v4244 = vunpack.c.l.b16 %v4120
        %v4245 = vunpack.c.l.b16 %v4130
        %v4246 = vunpack.c.l.b16 %v4144
        %v4247 = vunpack.c.l.b16 %v4154
        %v4248 = vunpack.c.l.b16 %v4168
        %v4249 = vunpack.c.l.b16 %v4178
        %v4250 = vunpack.c.l.b16 %v4192
        %v4251 = vunpack.c.l.b16 %v4202
        %v4252 = vpack.c.b16 %v4221, %v4220
        %v4253 = vpack.c.b16 %v4223, %v4222
        %v4254 = vpack.c.b16 %v4225, %v4224
        %v4255 = vpack.c.b16 %v4227, %v4226
        %v4256 = vpack.c.b16 %v4229, %v4228
        %v4257 = vpack.c.b16 %v4231, %v4230
        %v4258 = vpack.c.b16 %v4233, %v4232
        %v4259 = vpack.c.b16 %v4235, %v4234
        %v4260 = vpack.c.b16 %v4237, %v4236
        %v4261 = vpack.c.b16 %v4239, %v4238
        %v4262 = vpack.c.b16 %v4241, %v4240
        %v4263 = vpack.c.b16 %v4243, %v4242
        %v4264 = vpack.c.b16 %v4245, %v4244
        %v4265 = vpack.c.b16 %v4247, %v4246
        %v4266 = vpack.c.b16 %v4249, %v4248
        %v4267 = vpack.c.b16 %v4251, %v4250
        %v4300 = vunpack.c.l.b16 %v4204
        %v4301 = vunpack.c.l.b16 %v4205
        %v4302 = vunpack.c.l.b16 %v4206
        %v4303 = vunpack.c.l.b16 %v4207
        %v4304 = vunpack.c.l.b16 %v4208
        %v4305 = vunpack.c.l.b16 %v4209
        %v4306 = vunpack.c.l.b16 %v4210
        %v4307 = vunpack.c.l.b16 %v4211
        %v4308 = vunpack.c.l.b16 %v4212
        %v4309 = vunpack.c.l.b16 %v4213
        %v4310 = vunpack.c.l.b16 %v4214
        %v4311 = vunpack.c.l.b16 %v4215
        %v4312 = vunpack.c.l.b16 %v4216
        %v4313 = vunpack.c.l.b16 %v4217
        %v4314 = vunpack.c.l.b16 %v4218
        %v4315 = vunpack.c.l.b16 %v4219
        %v4316 = vpack.c.b16 %v4301, %v4300
        %v4317 = vpack.c.b16 %v4303, %v4302
        %v4318 = vpack.c.b16 %v4305, %v4304
        %v4319 = vpack.c.b16 %v4307, %v4306
        %v4320 = vpack.c.b16 %v4309, %v4308
        %v4321 = vpack.c.b16 %v4311, %v4310
        %v4322 = vpack.c.b16 %v4313, %v4312
        %v4323 = vpack.c.b16 %v4315, %v4314
        %4332 = vmatprep.subr.bf16.mxu0 0
        %4333 = vmatpush1.bf16.msra.mxu0 %v4323
        %4334 = vmatprep.subr.bf16.mxu0 0
        %4335 = vmatpush1.bf16.msra.mxu0 %v4322
        %4336 = vmatprep.subr.bf16.mxu0 0
        %4337 = vmatpush1.bf16.msra.mxu0 %v4321
        %4338 = vmatprep.subr.bf16.mxu0 0
        %4339 = vmatpush1.bf16.msra.mxu0 %v4320
        %4340 = vmatprep.subr.bf16.mxu0 0
        %4341 = vmatpush1.bf16.msra.mxu0 %v4319
        %4342 = vmatprep.subr.bf16.mxu0 0
        %4343 = vmatpush1.bf16.msra.mxu0 %v4318
        %4344 = vmatprep.subr.bf16.mxu0 0
        %4345 = vmatpush1.bf16.msra.mxu0 %v4317
        %4346 = vmatprep.subr.bf16.mxu0 0
        %4347 = vmatpush1.bf16.msra.mxu0 %v4316
        %4348 = vmatprep.subr.bf16.mxu0 0
        %4349 = vmatpush2.bf16.msra.mxu0 0
        %4350 = vmatprep.subr.bf16.mxu0 0
        %4351 = vmatpush2.bf16.msra.mxu0 0
        %4352 = vmatprep.subr.bf16.mxu0 0
        %4353 = vmatpush2.bf16.msra.mxu0 0
        %4354 = vmatprep.subr.bf16.mxu0 0
        %4355 = vmatpush2.bf16.msra.mxu0 0
        %4356 = vmatprep.subr.bf16.mxu0 0
        %4357 = vmatpush2.bf16.msra.mxu0 0
        %4358 = vmatprep.subr.bf16.mxu0 0
        %4359 = vmatpush2.bf16.msra.mxu0 0
        %4360 = vmatprep.subr.bf16.mxu0 0
        %4361 = vmatpush2.bf16.msra.mxu0 0
        %4362 = vmatprep.subr.bf16.mxu0 0
        %4363 = vmatpush2.bf16.msra.mxu0 0
        %4364 = vmatprep.mubr.bf16.mxu0 0
        %4365 = vmatmul.mubr.bf16.gmra.mxu0 %v4252
        %v4366 = vpop.f32.mrf.mxu0
        %v4367 = vadd.f32 0.0, %v4366
        %v4368 = vpop.f32.mrf.mxu0
        %v4369 = vpop.f32.mrf.mxu0
        %v4370 = vadd.f32 0.0, %v4369
        %v4371 = vpop.f32.mrf.mxu0
        %4372 = vmatprep.mubr.bf16.mxu0 0
        %4373 = vmatmul.mubr.bf16.gmra.mxu0 %v4253
        %v4374 = vpop.f32.mrf.mxu0
        %v4375 = vadd.f32 0.0, %v4374
        %v4376 = vpop.f32.mrf.mxu0
        %v4377 = vpop.f32.mrf.mxu0
        %v4378 = vadd.f32 0.0, %v4377
        %v4379 = vpop.f32.mrf.mxu0
        %4380 = vmatprep.mubr.bf16.mxu0 0
        %4381 = vmatmul.mubr.bf16.gmra.mxu0 %v4254
        %v4382 = vpop.f32.mrf.mxu0
        %v4383 = vadd.f32 0.0, %v4382
        %v4384 = vpop.f32.mrf.mxu0
        %v4385 = vpop.f32.mrf.mxu0
        %v4386 = vadd.f32 0.0, %v4385
        %v4387 = vpop.f32.mrf.mxu0
        %4388 = vmatprep.mubr.bf16.mxu0 0
        %4389 = vmatmul.mubr.bf16.gmra.mxu0 %v4255
        %v4390 = vpop.f32.mrf.mxu0
        %v4391 = vadd.f32 0.0, %v4390
        %v4392 = vpop.f32.mrf.mxu0
        %v4393 = vpop.f32.mrf.mxu0
        %v4394 = vadd.f32 0.0, %v4393
        %v4395 = vpop.f32.mrf.mxu0
        %4396 = vmatprep.mubr.bf16.mxu0 0
        %4397 = vmatmul.mubr.bf16.gmra.mxu0 %v4256
        %v4398 = vpop.f32.mrf.mxu0
        %v4399 = vadd.f32 0.0, %v4398
        %v4400 = vpop.f32.mrf.mxu0
        %v4401 = vpop.f32.mrf.mxu0
        %v4402 = vadd.f32 0.0, %v4401
        %v4403 = vpop.f32.mrf.mxu0
        %4404 = vmatprep.mubr.bf16.mxu0 0
        %4405 = vmatmul.mubr.bf16.gmra.mxu0 %v4257
        %v4406 = vpop.f32.mrf.mxu0
        %v4407 = vadd.f32 0.0, %v4406
        %v4408 = vpop.f32.mrf.mxu0
        %v4409 = vpop.f32.mrf.mxu0
        %v4410 = vadd.f32 0.0, %v4409
        %v4411 = vpop.f32.mrf.mxu0
        %4412 = vmatprep.mubr.bf16.mxu0 0
        %4413 = vmatmul.mubr.bf16.gmra.mxu0 %v4258
        %v4414 = vpop.f32.mrf.mxu0
        %v4415 = vadd.f32 0.0, %v4414
        %v4416 = vpop.f32.mrf.mxu0
        %v4417 = vpop.f32.mrf.mxu0
        %v4418 = vadd.f32 0.0, %v4417
        %v4419 = vpop.f32.mrf.mxu0
        %4420 = vmatprep.mubr.bf16.mxu0 0
        %4421 = vmatmul.mubr.bf16.gmra.mxu0 %v4259
        %v4422 = vpop.f32.mrf.mxu0
        %v4423 = vadd.f32 0.0, %v4422
        %v4424 = vpop.f32.mrf.mxu0
        %v4425 = vpop.f32.mrf.mxu0
        %v4426 = vadd.f32 0.0, %v4425
        %v4427 = vpop.f32.mrf.mxu0
        %4428 = vmatprep.mubr.bf16.mxu0 0
        %4429 = vmatmul.mubr.bf16.gmra.mxu0 %v4260
        %v4430 = vpop.f32.mrf.mxu0
        %v4431 = vadd.f32 0.0, %v4430
        %v4432 = vpop.f32.mrf.mxu0
        %v4433 = vpop.f32.mrf.mxu0
        %v4434 = vadd.f32 0.0, %v4433
        %v4435 = vpop.f32.mrf.mxu0
        %4436 = vmatprep.mubr.bf16.mxu0 0
        %4437 = vmatmul.mubr.bf16.gmra.mxu0 %v4261
        %v4438 = vpop.f32.mrf.mxu0
        %v4439 = vadd.f32 0.0, %v4438
        %v4440 = vpop.f32.mrf.mxu0
        %v4441 = vpop.f32.mrf.mxu0
        %v4442 = vadd.f32 0.0, %v4441
        %v4443 = vpop.f32.mrf.mxu0
        %4444 = vmatprep.mubr.bf16.mxu0 0
        %4445 = vmatmul.mubr.bf16.gmra.mxu0 %v4262
        %v4446 = vpop.f32.mrf.mxu0
        %v4447 = vadd.f32 0.0, %v4446
        %v4448 = vpop.f32.mrf.mxu0
        %v4449 = vpop.f32.mrf.mxu0
        %v4450 = vadd.f32 0.0, %v4449
        %v4451 = vpop.f32.mrf.mxu0
        %4452 = vmatprep.mubr.bf16.mxu0 0
        %4453 = vmatmul.mubr.bf16.gmra.mxu0 %v4263
        %v4454 = vpop.f32.mrf.mxu0
        %v4455 = vadd.f32 0.0, %v4454
        %v4456 = vpop.f32.mrf.mxu0
        %v4457 = vpop.f32.mrf.mxu0
        %v4458 = vadd.f32 0.0, %v4457
        %v4459 = vpop.f32.mrf.mxu0
        %4460 = vmatprep.mubr.bf16.mxu0 0
        %4461 = vmatmul.mubr.bf16.gmra.mxu0 %v4264
        %v4462 = vpop.f32.mrf.mxu0
        %v4463 = vadd.f32 0.0, %v4462
        %v4464 = vpop.f32.mrf.mxu0
        %v4465 = vpop.f32.mrf.mxu0
        %v4466 = vadd.f32 0.0, %v4465
        %v4467 = vpop.f32.mrf.mxu0
        %4468 = vmatprep.mubr.bf16.mxu0 0
        %4469 = vmatmul.mubr.bf16.gmra.mxu0 %v4265
        %v4470 = vpop.f32.mrf.mxu0
        %v4471 = vadd.f32 0.0, %v4470
        %v4472 = vpop.f32.mrf.mxu0
        %v4473 = vpop.f32.mrf.mxu0
        %v4474 = vadd.f32 0.0, %v4473
        %v4475 = vpop.f32.mrf.mxu0
        %4476 = vmatprep.mubr.bf16.mxu0 0
        %4477 = vmatmul.mubr.bf16.gmra.mxu0 %v4266
        %v4478 = vpop.f32.mrf.mxu0
        %v4479 = vadd.f32 0.0, %v4478
        %v4480 = vpop.f32.mrf.mxu0
        %v4481 = vpop.f32.mrf.mxu0
        %v4482 = vadd.f32 0.0, %v4481
        %v4483 = vpop.f32.mrf.mxu0
        %4484 = vmatprep.mubr.bf16.mxu0 0
        %4485 = vmatmul.mubr.bf16.gmra.mxu0 %v4267
        %v4486 = vpop.f32.mrf.mxu0
        %v4487 = vadd.f32 0.0, %v4486
        %v4488 = vpop.f32.mrf.mxu0
        %v4489 = vpop.f32.mrf.mxu0
        %v4490 = vadd.f32 0.0, %v4489
        %v4491 = vpop.f32.mrf.mxu0
        %4492 = vdwg.mxu0
        %v4493 = vadd.f32 %v3739, %v4367
        %v4494 = vadd.f32 %v3740, %v4370
        %v4495 = vadd.f32 %v3741, %v4375
        %v4496 = vadd.f32 %v3742, %v4378
        %v4497 = vadd.f32 %v3743, %v4383
        %v4498 = vadd.f32 %v3744, %v4386
        %v4499 = vadd.f32 %v3745, %v4391
        %v4500 = vadd.f32 %v3746, %v4394
        %v4501 = vadd.f32 %v3747, %v4399
        %v4502 = vadd.f32 %v3748, %v4402
        %v4503 = vadd.f32 %v3749, %v4407
        %v4504 = vadd.f32 %v3750, %v4410
        %v4505 = vadd.f32 %v3751, %v4415
        %v4506 = vadd.f32 %v3752, %v4418
        %v4507 = vadd.f32 %v3753, %v4423
        %v4508 = vadd.f32 %v3754, %v4426
        %v4509 = vadd.f32 %v3755, %v4431
        %v4510 = vadd.f32 %v3756, %v4434
        %v4511 = vadd.f32 %v3757, %v4439
        %v4512 = vadd.f32 %v3758, %v4442
        %v4513 = vadd.f32 %v3759, %v4447
        %v4514 = vadd.f32 %v3760, %v4450
        %v4515 = vadd.f32 %v3761, %v4455
        %v4516 = vadd.f32 %v3762, %v4458
        %v4517 = vadd.f32 %v3763, %v4463
        %v4518 = vadd.f32 %v3764, %v4466
        %v4519 = vadd.f32 %v3765, %v4471
        %v4520 = vadd.f32 %v3766, %v4474
        %v4521 = vadd.f32 %v3767, %v4479
        %v4522 = vadd.f32 %v3768, %v4482
        %v4523 = vadd.f32 %v3769, %v4487
        %v4524 = vadd.f32 %v3770, %v4490
        %v4525 = vld [vmem:[%s3384] sm:$0xe]
        %v4526 = vld [vmem:[%s3384 + $0xc] sm:$0xe]
        %v4527 = vld [vmem:[%s3384 + $0x18] sm:$0xe]
        %v4528 = vld [vmem:[%s3384 + $0x24] sm:$0xe]
        %v4529 = vld [vmem:[%s3384 + $0x30] sm:$0xe]
        %v4530 = vld [vmem:[%s3384 + $0x3c] sm:$0xe]
        %v4531 = vld [vmem:[%s3384 + $0x48] sm:$0xe]
        %v4532 = vld [vmem:[%s3384 + $0x54] sm:$0xe]
        %v4533 = vld [vmem:[%s3384 + $0x60] sm:$0xe]
        %v4534 = vld [vmem:[%s3384 + $0x6c] sm:$0xe]
        %v4535 = vld [vmem:[%s3384 + $0x78] sm:$0xe]
        %v4536 = vld [vmem:[%s3384 + $0x84] sm:$0xe]
        %v4537 = vld [vmem:[%s3384 + $0x90] sm:$0xe]
        %v4538 = vld [vmem:[%s3384 + $0x9c] sm:$0xe]
        %v4539 = vld [vmem:[%s3384 + $0xa8] sm:$0xe]
        %v4540 = vld [vmem:[%s3384 + $0xb4] sm:$0xe]
        %v4589 = vrot.slane %v4525, 5
        %v4590 = vrot.slane %v4589, 4
        %v4591 = vrot.slane %v3772, 5
        %v4592 = vsel %vm1310, %v4590, %v4591
        %v4593 = vrot.slane %v4591, 4
        %v4594 = vrot.slane %v3773, 5
        %v4595 = vsel %vm1310, %v4593, %v4594
        %v4596 = vrot.slane %v4526, 5
        %v4597 = vrot.slane %v4596, 4
        %v4598 = vrot.slane %v3775, 5
        %v4599 = vsel %vm1310, %v4597, %v4598
        %v4600 = vrot.slane %v4598, 4
        %v4601 = vrot.slane %v3776, 5
        %v4602 = vsel %vm1310, %v4600, %v4601
        %v4603 = vrot.slane %v4527, 5
        %v4604 = vrot.slane %v4603, 4
        %v4605 = vrot.slane %v3778, 5
        %v4606 = vsel %vm1310, %v4604, %v4605
        %v4607 = vrot.slane %v4605, 4
        %v4608 = vrot.slane %v3779, 5
        %v4609 = vsel %vm1310, %v4607, %v4608
        %v4610 = vrot.slane %v4528, 5
        %v4611 = vrot.slane %v4610, 4
        %v4612 = vrot.slane %v3781, 5
        %v4613 = vsel %vm1310, %v4611, %v4612
        %v4614 = vrot.slane %v4612, 4
        %v4615 = vrot.slane %v3782, 5
        %v4616 = vsel %vm1310, %v4614, %v4615
        %v4617 = vrot.slane %v4529, 5
        %v4618 = vrot.slane %v4617, 4
        %v4619 = vrot.slane %v3784, 5
        %v4620 = vsel %vm1310, %v4618, %v4619
        %v4621 = vrot.slane %v4619, 4
        %v4622 = vrot.slane %v3785, 5
        %v4623 = vsel %vm1310, %v4621, %v4622
        %v4624 = vrot.slane %v4530, 5
        %v4625 = vrot.slane %v4624, 4
        %v4626 = vrot.slane %v3787, 5
        %v4627 = vsel %vm1310, %v4625, %v4626
        %v4628 = vrot.slane %v4626, 4
        %v4629 = vrot.slane %v3788, 5
        %v4630 = vsel %vm1310, %v4628, %v4629
        %v4631 = vrot.slane %v4531, 5
        %v4632 = vrot.slane %v4631, 4
        %v4633 = vrot.slane %v3790, 5
        %v4634 = vsel %vm1310, %v4632, %v4633
        %v4635 = vrot.slane %v4633, 4
        %v4636 = vrot.slane %v3791, 5
        %v4637 = vsel %vm1310, %v4635, %v4636
        %v4638 = vrot.slane %v4532, 5
        %v4639 = vrot.slane %v4638, 4
        %v4640 = vrot.slane %v3793, 5
        %v4641 = vsel %vm1310, %v4639, %v4640
        %v4642 = vrot.slane %v4640, 4
        %v4643 = vrot.slane %v3794, 5
        %v4644 = vsel %vm1310, %v4642, %v4643
        %v4645 = vrot.slane %v4533, 5
        %v4646 = vrot.slane %v4645, 4
        %v4647 = vrot.slane %v3796, 5
        %v4648 = vsel %vm1310, %v4646, %v4647
        %v4649 = vrot.slane %v4647, 4
        %v4650 = vrot.slane %v3797, 5
        %v4651 = vsel %vm1310, %v4649, %v4650
        %v4652 = vrot.slane %v4534, 5
        %v4653 = vrot.slane %v4652, 4
        %v4654 = vrot.slane %v3799, 5
        %v4655 = vsel %vm1310, %v4653, %v4654
        %v4656 = vrot.slane %v4654, 4
        %v4657 = vrot.slane %v3800, 5
        %v4658 = vsel %vm1310, %v4656, %v4657
        %v4659 = vrot.slane %v4535, 5
        %v4660 = vrot.slane %v4659, 4
        %v4661 = vrot.slane %v3802, 5
        %v4662 = vsel %vm1310, %v4660, %v4661
        %v4663 = vrot.slane %v4661, 4
        %v4664 = vrot.slane %v3803, 5
        %v4665 = vsel %vm1310, %v4663, %v4664
        %v4666 = vrot.slane %v4536, 5
        %v4667 = vrot.slane %v4666, 4
        %v4668 = vrot.slane %v3805, 5
        %v4669 = vsel %vm1310, %v4667, %v4668
        %v4670 = vrot.slane %v4668, 4
        %v4671 = vrot.slane %v3806, 5
        %v4672 = vsel %vm1310, %v4670, %v4671
        %v4673 = vrot.slane %v4537, 5
        %v4674 = vrot.slane %v4673, 4
        %v4675 = vrot.slane %v3808, 5
        %v4676 = vsel %vm1310, %v4674, %v4675
        %v4677 = vrot.slane %v4675, 4
        %v4678 = vrot.slane %v3809, 5
        %v4679 = vsel %vm1310, %v4677, %v4678
        %v4680 = vrot.slane %v4538, 5
        %v4681 = vrot.slane %v4680, 4
        %v4682 = vrot.slane %v3811, 5
        %v4683 = vsel %vm1310, %v4681, %v4682
        %v4684 = vrot.slane %v4682, 4
        %v4685 = vrot.slane %v3812, 5
        %v4686 = vsel %vm1310, %v4684, %v4685
        %v4687 = vrot.slane %v4539, 5
        %v4688 = vrot.slane %v4687, 4
        %v4689 = vrot.slane %v3814, 5
        %v4690 = vsel %vm1310, %v4688, %v4689
        %v4691 = vrot.slane %v4689, 4
        %v4692 = vrot.slane %v3815, 5
        %v4693 = vsel %vm1310, %v4691, %v4692
        %v4694 = vrot.slane %v4540, 5
        %v4695 = vrot.slane %v4694, 4
        %v4696 = vrot.slane %v3817, 5
        %v4697 = vsel %vm1310, %v4695, %v4696
        %v4698 = vrot.slane %v4696, 4
        %v4699 = vrot.slane %v3818, 5
        %v4700 = vsel %vm1310, %v4698, %v4699
        %s4701 = scalar_lea.vmem %s212, 512
        %v4702 = vld [vmem:[%s4701] sm:$0xf]
        %v4703 = vld [vmem:[%s4701 + $0x4] sm:$0xf]
        %v4704 = vld [vmem:[%s4701 + $0x8] sm:$0xf]
        %v4705 = vld [vmem:[%s4701 + $0xc] sm:$0xf]
        %v4706 = vld [vmem:[%s4701 + $0x10] sm:$0xf]
        %v4707 = vld [vmem:[%s4701 + $0x14] sm:$0xf]
        %v4708 = vld [vmem:[%s4701 + $0x18] sm:$0xf]
        %v4709 = vld [vmem:[%s4701 + $0x1c] sm:$0xf]
        %v4710 = vld [vmem:[%s4701 + $0x20] sm:$0xf]
        %v4711 = vld [vmem:[%s4701 + $0x24] sm:$0xf]
        %v4712 = vld [vmem:[%s4701 + $0x28] sm:$0xf]
        %v4713 = vld [vmem:[%s4701 + $0x2c] sm:$0xf]
        %v4714 = vld [vmem:[%s4701 + $0x30] sm:$0xf]
        %v4715 = vld [vmem:[%s4701 + $0x34] sm:$0xf]
        %v4716 = vld [vmem:[%s4701 + $0x38] sm:$0xf]
        %v4717 = vld [vmem:[%s4701 + $0x3c] sm:$0xf]
        %v4718 = vunpack.c.l.b16 %v4592
        %v4719 = vunpack.c.l.b16 %v4595
        %v4720 = vunpack.c.l.b16 %v4599
        %v4721 = vunpack.c.l.b16 %v4602
        %v4722 = vunpack.c.l.b16 %v4606
        %v4723 = vunpack.c.l.b16 %v4609
        %v4724 = vunpack.c.l.b16 %v4613
        %v4725 = vunpack.c.l.b16 %v4616
        %v4726 = vunpack.c.l.b16 %v4620
        %v4727 = vunpack.c.l.b16 %v4623
        %v4728 = vunpack.c.l.b16 %v4627
        %v4729 = vunpack.c.l.b16 %v4630
        %v4730 = vunpack.c.l.b16 %v4634
        %v4731 = vunpack.c.l.b16 %v4637
        %v4732 = vunpack.c.l.b16 %v4641
        %v4733 = vunpack.c.l.b16 %v4644
        %v4734 = vunpack.c.l.b16 %v4648
        %v4735 = vunpack.c.l.b16 %v4651
        %v4736 = vunpack.c.l.b16 %v4655
        %v4737 = vunpack.c.l.b16 %v4658
        %v4738 = vunpack.c.l.b16 %v4662
        %v4739 = vunpack.c.l.b16 %v4665
        %v4740 = vunpack.c.l.b16 %v4669
        %v4741 = vunpack.c.l.b16 %v4672
        %v4742 = vunpack.c.l.b16 %v4676
        %v4743 = vunpack.c.l.b16 %v4679
        %v4744 = vunpack.c.l.b16 %v4683
        %v4745 = vunpack.c.l.b16 %v4686
        %v4746 = vunpack.c.l.b16 %v4690
        %v4747 = vunpack.c.l.b16 %v4693
        %v4748 = vunpack.c.l.b16 %v4697
        %v4749 = vunpack.c.l.b16 %v4700
        %v4750 = vpack.c.b16 %v4719, %v4718
        %v4751 = vpack.c.b16 %v4721, %v4720
        %v4752 = vpack.c.b16 %v4723, %v4722
        %v4753 = vpack.c.b16 %v4725, %v4724
        %v4754 = vpack.c.b16 %v4727, %v4726
        %v4755 = vpack.c.b16 %v4729, %v4728
        %v4756 = vpack.c.b16 %v4731, %v4730
        %v4757 = vpack.c.b16 %v4733, %v4732
        %v4758 = vpack.c.b16 %v4735, %v4734
        %v4759 = vpack.c.b16 %v4737, %v4736
        %v4760 = vpack.c.b16 %v4739, %v4738
        %v4761 = vpack.c.b16 %v4741, %v4740
        %v4762 = vpack.c.b16 %v4743, %v4742
        %v4763 = vpack.c.b16 %v4745, %v4744
        %v4764 = vpack.c.b16 %v4747, %v4746
        %v4765 = vpack.c.b16 %v4749, %v4748
        %v4798 = vunpack.c.l.b16 %v4702
        %v4799 = vunpack.c.l.b16 %v4703
        %v4800 = vunpack.c.l.b16 %v4704
        %v4801 = vunpack.c.l.b16 %v4705
        %v4802 = vunpack.c.l.b16 %v4706
        %v4803 = vunpack.c.l.b16 %v4707
        %v4804 = vunpack.c.l.b16 %v4708
        %v4805 = vunpack.c.l.b16 %v4709
        %v4806 = vunpack.c.l.b16 %v4710
        %v4807 = vunpack.c.l.b16 %v4711
        %v4808 = vunpack.c.l.b16 %v4712
        %v4809 = vunpack.c.l.b16 %v4713
        %v4810 = vunpack.c.l.b16 %v4714
        %v4811 = vunpack.c.l.b16 %v4715
        %v4812 = vunpack.c.l.b16 %v4716
        %v4813 = vunpack.c.l.b16 %v4717
        %v4814 = vpack.c.b16 %v4799, %v4798
        %v4815 = vpack.c.b16 %v4801, %v4800
        %v4816 = vpack.c.b16 %v4803, %v4802
        %v4817 = vpack.c.b16 %v4805, %v4804
        %v4818 = vpack.c.b16 %v4807, %v4806
        %v4819 = vpack.c.b16 %v4809, %v4808
        %v4820 = vpack.c.b16 %v4811, %v4810
        %v4821 = vpack.c.b16 %v4813, %v4812
        %4830 = vmatprep.subr.bf16.mxu0 0
        %4831 = vmatpush1.bf16.msra.mxu0 %v4821
        %4832 = vmatprep.subr.bf16.mxu0 0
        %4833 = vmatpush1.bf16.msra.mxu0 %v4820
        %4834 = vmatprep.subr.bf16.mxu0 0
        %4835 = vmatpush1.bf16.msra.mxu0 %v4819
        %4836 = vmatprep.subr.bf16.mxu0 0
        %4837 = vmatpush1.bf16.msra.mxu0 %v4818
        %4838 = vmatprep.subr.bf16.mxu0 0
        %4839 = vmatpush1.bf16.msra.mxu0 %v4817
        %4840 = vmatprep.subr.bf16.mxu0 0
        %4841 = vmatpush1.bf16.msra.mxu0 %v4816
        %4842 = vmatprep.subr.bf16.mxu0 0
        %4843 = vmatpush1.bf16.msra.mxu0 %v4815
        %4844 = vmatprep.subr.bf16.mxu0 0
        %4845 = vmatpush1.bf16.msra.mxu0 %v4814
        %4846 = vmatprep.subr.bf16.mxu0 0
        %4847 = vmatpush2.bf16.msra.mxu0 0
        %4848 = vmatprep.subr.bf16.mxu0 0
        %4849 = vmatpush2.bf16.msra.mxu0 0
        %4850 = vmatprep.subr.bf16.mxu0 0
        %4851 = vmatpush2.bf16.msra.mxu0 0
        %4852 = vmatprep.subr.bf16.mxu0 0
        %4853 = vmatpush2.bf16.msra.mxu0 0
        %4854 = vmatprep.subr.bf16.mxu0 0
        %4855 = vmatpush2.bf16.msra.mxu0 0
        %4856 = vmatprep.subr.bf16.mxu0 0
        %4857 = vmatpush2.bf16.msra.mxu0 0
        %4858 = vmatprep.subr.bf16.mxu0 0
        %4859 = vmatpush2.bf16.msra.mxu0 0
        %4860 = vmatprep.subr.bf16.mxu0 0
        %4861 = vmatpush2.bf16.msra.mxu0 0
        %4862 = vmatprep.mubr.bf16.mxu0 0
        %4863 = vmatmul.mubr.bf16.gmra.mxu0 %v4750
        %v4864 = vpop.f32.mrf.mxu0
        %v4865 = vadd.f32 0.0, %v4864
        %v4866 = vpop.f32.mrf.mxu0
        %v4867 = vpop.f32.mrf.mxu0
        %v4868 = vadd.f32 0.0, %v4867
        %v4869 = vpop.f32.mrf.mxu0
        %4870 = vmatprep.mubr.bf16.mxu0 0
        %4871 = vmatmul.mubr.bf16.gmra.mxu0 %v4751
        %v4872 = vpop.f32.mrf.mxu0
        %v4873 = vadd.f32 0.0, %v4872
        %v4874 = vpop.f32.mrf.mxu0
        %v4875 = vpop.f32.mrf.mxu0
        %v4876 = vadd.f32 0.0, %v4875
        %v4877 = vpop.f32.mrf.mxu0
        %4878 = vmatprep.mubr.bf16.mxu0 0
        %4879 = vmatmul.mubr.bf16.gmra.mxu0 %v4752
        %v4880 = vpop.f32.mrf.mxu0
        %v4881 = vadd.f32 0.0, %v4880
        %v4882 = vpop.f32.mrf.mxu0
        %v4883 = vpop.f32.mrf.mxu0
        %v4884 = vadd.f32 0.0, %v4883
        %v4885 = vpop.f32.mrf.mxu0
        %4886 = vmatprep.mubr.bf16.mxu0 0
        %4887 = vmatmul.mubr.bf16.gmra.mxu0 %v4753
        %v4888 = vpop.f32.mrf.mxu0
        %v4889 = vadd.f32 0.0, %v4888
        %v4890 = vpop.f32.mrf.mxu0
        %v4891 = vpop.f32.mrf.mxu0
        %v4892 = vadd.f32 0.0, %v4891
        %v4893 = vpop.f32.mrf.mxu0
        %4894 = vmatprep.mubr.bf16.mxu0 0
        %4895 = vmatmul.mubr.bf16.gmra.mxu0 %v4754
        %v4896 = vpop.f32.mrf.mxu0
        %v4897 = vadd.f32 0.0, %v4896
        %v4898 = vpop.f32.mrf.mxu0
        %v4899 = vpop.f32.mrf.mxu0
        %v4900 = vadd.f32 0.0, %v4899
        %v4901 = vpop.f32.mrf.mxu0
        %4902 = vmatprep.mubr.bf16.mxu0 0
        %4903 = vmatmul.mubr.bf16.gmra.mxu0 %v4755
        %v4904 = vpop.f32.mrf.mxu0
        %v4905 = vadd.f32 0.0, %v4904
        %v4906 = vpop.f32.mrf.mxu0
        %v4907 = vpop.f32.mrf.mxu0
        %v4908 = vadd.f32 0.0, %v4907
        %v4909 = vpop.f32.mrf.mxu0
        %4910 = vmatprep.mubr.bf16.mxu0 0
        %4911 = vmatmul.mubr.bf16.gmra.mxu0 %v4756
        %v4912 = vpop.f32.mrf.mxu0
        %v4913 = vadd.f32 0.0, %v4912
        %v4914 = vpop.f32.mrf.mxu0
        %v4915 = vpop.f32.mrf.mxu0
        %v4916 = vadd.f32 0.0, %v4915
        %v4917 = vpop.f32.mrf.mxu0
        %4918 = vmatprep.mubr.bf16.mxu0 0
        %4919 = vmatmul.mubr.bf16.gmra.mxu0 %v4757
        %v4920 = vpop.f32.mrf.mxu0
        %v4921 = vadd.f32 0.0, %v4920
        %v4922 = vpop.f32.mrf.mxu0
        %v4923 = vpop.f32.mrf.mxu0
        %v4924 = vadd.f32 0.0, %v4923
        %v4925 = vpop.f32.mrf.mxu0
        %4926 = vmatprep.mubr.bf16.mxu0 0
        %4927 = vmatmul.mubr.bf16.gmra.mxu0 %v4758
        %v4928 = vpop.f32.mrf.mxu0
        %v4929 = vadd.f32 0.0, %v4928
        %v4930 = vpop.f32.mrf.mxu0
        %v4931 = vpop.f32.mrf.mxu0
        %v4932 = vadd.f32 0.0, %v4931
        %v4933 = vpop.f32.mrf.mxu0
        %4934 = vmatprep.mubr.bf16.mxu0 0
        %4935 = vmatmul.mubr.bf16.gmra.mxu0 %v4759
        %v4936 = vpop.f32.mrf.mxu0
        %v4937 = vadd.f32 0.0, %v4936
        %v4938 = vpop.f32.mrf.mxu0
        %v4939 = vpop.f32.mrf.mxu0
        %v4940 = vadd.f32 0.0, %v4939
        %v4941 = vpop.f32.mrf.mxu0
        %4942 = vmatprep.mubr.bf16.mxu0 0
        %4943 = vmatmul.mubr.bf16.gmra.mxu0 %v4760
        %v4944 = vpop.f32.mrf.mxu0
        %v4945 = vadd.f32 0.0, %v4944
        %v4946 = vpop.f32.mrf.mxu0
        %v4947 = vpop.f32.mrf.mxu0
        %v4948 = vadd.f32 0.0, %v4947
        %v4949 = vpop.f32.mrf.mxu0
        %4950 = vmatprep.mubr.bf16.mxu0 0
        %4951 = vmatmul.mubr.bf16.gmra.mxu0 %v4761
        %v4952 = vpop.f32.mrf.mxu0
        %v4953 = vadd.f32 0.0, %v4952
        %v4954 = vpop.f32.mrf.mxu0
        %v4955 = vpop.f32.mrf.mxu0
        %v4956 = vadd.f32 0.0, %v4955
        %v4957 = vpop.f32.mrf.mxu0
        %4958 = vmatprep.mubr.bf16.mxu0 0
        %4959 = vmatmul.mubr.bf16.gmra.mxu0 %v4762
        %v4960 = vpop.f32.mrf.mxu0
        %v4961 = vadd.f32 0.0, %v4960
        %v4962 = vpop.f32.mrf.mxu0
        %v4963 = vpop.f32.mrf.mxu0
        %v4964 = vadd.f32 0.0, %v4963
        %v4965 = vpop.f32.mrf.mxu0
        %4966 = vmatprep.mubr.bf16.mxu0 0
        %4967 = vmatmul.mubr.bf16.gmra.mxu0 %v4763
        %v4968 = vpop.f32.mrf.mxu0
        %v4969 = vadd.f32 0.0, %v4968
        %v4970 = vpop.f32.mrf.mxu0
        %v4971 = vpop.f32.mrf.mxu0
        %v4972 = vadd.f32 0.0, %v4971
        %v4973 = vpop.f32.mrf.mxu0
        %4974 = vmatprep.mubr.bf16.mxu0 0
        %4975 = vmatmul.mubr.bf16.gmra.mxu0 %v4764
        %v4976 = vpop.f32.mrf.mxu0
        %v4977 = vadd.f32 0.0, %v4976
        %v4978 = vpop.f32.mrf.mxu0
        %v4979 = vpop.f32.mrf.mxu0
        %v4980 = vadd.f32 0.0, %v4979
        %v4981 = vpop.f32.mrf.mxu0
        %4982 = vmatprep.mubr.bf16.mxu0 0
        %4983 = vmatmul.mubr.bf16.gmra.mxu0 %v4765
        %v4984 = vpop.f32.mrf.mxu0
        %v4985 = vadd.f32 0.0, %v4984
        %v4986 = vpop.f32.mrf.mxu0
        %v4987 = vpop.f32.mrf.mxu0
        %v4988 = vadd.f32 0.0, %v4987
        %v4989 = vpop.f32.mrf.mxu0
        %4990 = vdwg.mxu0
        %v4991 = vadd.f32 %v4493, %v4865
        %v4992 = vadd.f32 %v4494, %v4868
        %v4993 = vadd.f32 %v4495, %v4873
        %v4994 = vadd.f32 %v4496, %v4876
        %v4995 = vadd.f32 %v4497, %v4881
        %v4996 = vadd.f32 %v4498, %v4884
        %v4997 = vadd.f32 %v4499, %v4889
        %v4998 = vadd.f32 %v4500, %v4892
        %v4999 = vadd.f32 %v4501, %v4897
        %v5000 = vadd.f32 %v4502, %v4900
        %v5001 = vadd.f32 %v4503, %v4905
        %v5002 = vadd.f32 %v4504, %v4908
        %v5003 = vadd.f32 %v4505, %v4913
        %v5004 = vadd.f32 %v4506, %v4916
        %v5005 = vadd.f32 %v4507, %v4921
        %v5006 = vadd.f32 %v4508, %v4924
        %v5007 = vadd.f32 %v4509, %v4929
        %v5008 = vadd.f32 %v4510, %v4932
        %v5009 = vadd.f32 %v4511, %v4937
        %v5010 = vadd.f32 %v4512, %v4940
        %v5011 = vadd.f32 %v4513, %v4945
        %v5012 = vadd.f32 %v4514, %v4948
        %v5013 = vadd.f32 %v4515, %v4953
        %v5014 = vadd.f32 %v4516, %v4956
        %v5015 = vadd.f32 %v4517, %v4961
        %v5016 = vadd.f32 %v4518, %v4964
        %v5017 = vadd.f32 %v4519, %v4969
        %v5018 = vadd.f32 %v4520, %v4972
        %v5019 = vadd.f32 %v4521, %v4977
        %v5020 = vadd.f32 %v4522, %v4980
        %v5021 = vadd.f32 %v4523, %v4985
        %v5022 = vadd.f32 %v4524, %v4988
        %5023 = vst [vmem:[%s196] sm:$0xff] %v4991
        %5024 = vst [vmem:[%s196 + $0x8] sm:$0xff] %v4992
        %5025 = vst [vmem:[%s196 + $0x10] sm:$0xff] %v4993
        %5026 = vst [vmem:[%s196 + $0x18] sm:$0xff] %v4994
        %5027 = vst [vmem:[%s196 + $0x20] sm:$0xff] %v4995
        %5028 = vst [vmem:[%s196 + $0x28] sm:$0xff] %v4996
        %5029 = vst [vmem:[%s196 + $0x30] sm:$0xff] %v4997
        %5030 = vst [vmem:[%s196 + $0x38] sm:$0xff] %v4998
        %5031 = vst [vmem:[%s196 + $0x40] sm:$0xff] %v4999
        %5032 = vst [vmem:[%s196 + $0x48] sm:$0xff] %v5000
        %5033 = vst [vmem:[%s196 + $0x50] sm:$0xff] %v5001
        %5034 = vst [vmem:[%s196 + $0x58] sm:$0xff] %v5002
        %5035 = vst [vmem:[%s196 + $0x60] sm:$0xff] %v5003
        %5036 = vst [vmem:[%s196 + $0x68] sm:$0xff] %v5004
        %5037 = vst [vmem:[%s196 + $0x70] sm:$0xff] %v5005
        %5038 = vst [vmem:[%s196 + $0x78] sm:$0xff] %v5006
        %5039 = vst [vmem:[%s196 + $0x80] sm:$0xff] %v5007
        %5040 = vst [vmem:[%s196 + $0x88] sm:$0xff] %v5008
        %5041 = vst [vmem:[%s196 + $0x90] sm:$0xff] %v5009
        %5042 = vst [vmem:[%s196 + $0x98] sm:$0xff] %v5010
        %5043 = vst [vmem:[%s196 + $0xa0] sm:$0xff] %v5011
        %5044 = vst [vmem:[%s196 + $0xa8] sm:$0xff] %v5012
        %5045 = vst [vmem:[%s196 + $0xb0] sm:$0xff] %v5013
        %5046 = vst [vmem:[%s196 + $0xb8] sm:$0xff] %v5014
        %5047 = vst [vmem:[%s196 + $0xc0] sm:$0xff] %v5015
        %5048 = vst [vmem:[%s196 + $0xc8] sm:$0xff] %v5016
        %5049 = vst [vmem:[%s196 + $0xd0] sm:$0xff] %v5017
        %5050 = vst [vmem:[%s196 + $0xd8] sm:$0xff] %v5018
        %5051 = vst [vmem:[%s196 + $0xe0] sm:$0xff] %v5019
        %5052 = vst [vmem:[%s196 + $0xe8] sm:$0xff] %v5020
        %5053 = vst [vmem:[%s196 + $0xf0] sm:$0xff] %v5021
        %5054 = vst [vmem:[%s196 + $0xf8] sm:$0xff] %v5022
        %v5055 = vadd.f32 %v4991, %v4992
        %v5056 = vadd.f32 %v5055, %v4993
        %v5057 = vadd.f32 %v5056, %v4994
        %v5058 = vadd.f32 %v5057, %v4995
        %v5059 = vadd.f32 %v5058, %v4996
        %v5060 = vadd.f32 %v5059, %v4997
        %v5061 = vadd.f32 %v5060, %v4998
        %v5062 = vadd.f32 %v5061, %v4999
        %v5063 = vadd.f32 %v5062, %v5000
        %v5064 = vadd.f32 %v5063, %v5001
        %v5065 = vadd.f32 %v5064, %v5002
        %v5066 = vadd.f32 %v5065, %v5003
        %v5067 = vadd.f32 %v5066, %v5004
        %v5068 = vadd.f32 %v5067, %v5005
        %v5069 = vadd.f32 %v5068, %v5006
        %v5070 = vadd.f32 %v5069, %v5007
        %v5071 = vadd.f32 %v5070, %v5008
        %v5072 = vadd.f32 %v5071, %v5009
        %v5073 = vadd.f32 %v5072, %v5010
        %v5074 = vadd.f32 %v5073, %v5011
        %v5075 = vadd.f32 %v5074, %v5012
        %v5076 = vadd.f32 %v5075, %v5013
        %v5077 = vadd.f32 %v5076, %v5014
        %v5078 = vadd.f32 %v5077, %v5015
        %v5079 = vadd.f32 %v5078, %v5016
        %v5080 = vadd.f32 %v5079, %v5017
        %v5081 = vadd.f32 %v5080, %v5018
        %v5082 = vadd.f32 %v5081, %v5019
        %v5083 = vadd.f32 %v5082, %v5020
        %v5084 = vadd.f32 %v5083, %v5021
        %v5085 = vadd.f32 %v5084, %v5022
        %v5086 = vrot.slane %v5085, 4
        %v5087 = vadd.f32 %v5085, %v5086
        %v5088 = vrot.slane %v5087, 2
        %v5089 = vadd.f32 %v5087, %v5088
        %v5090 = vrot.slane %v5089, 1
        %v5091 = vadd.f32 %v5089, %v5090
        %v5092 = vmul.f32 %v4991, %v4991
        %v5093 = vmul.f32 %v4992, %v4992
        %v5094 = vmul.f32 %v4993, %v4993
        %v5095 = vmul.f32 %v4994, %v4994
        %v5096 = vmul.f32 %v4995, %v4995
        %v5097 = vmul.f32 %v4996, %v4996
        %v5098 = vmul.f32 %v4997, %v4997
        %v5099 = vmul.f32 %v4998, %v4998
        %v5100 = vmul.f32 %v4999, %v4999
        %v5101 = vmul.f32 %v5000, %v5000
        %v5102 = vmul.f32 %v5001, %v5001
        %v5103 = vmul.f32 %v5002, %v5002
        %v5104 = vmul.f32 %v5003, %v5003
        %v5105 = vmul.f32 %v5004, %v5004
        %v5106 = vmul.f32 %v5005, %v5005
        %v5107 = vmul.f32 %v5006, %v5006
        %v5108 = vmul.f32 %v5007, %v5007
        %v5109 = vmul.f32 %v5008, %v5008
        %v5110 = vmul.f32 %v5009, %v5009
        %v5111 = vmul.f32 %v5010, %v5010
        %v5112 = vmul.f32 %v5011, %v5011
        %v5113 = vmul.f32 %v5012, %v5012
        %v5114 = vmul.f32 %v5013, %v5013
        %v5115 = vmul.f32 %v5014, %v5014
        %v5116 = vmul.f32 %v5015, %v5015
        %v5117 = vmul.f32 %v5016, %v5016
        %v5118 = vmul.f32 %v5017, %v5017
        %v5119 = vmul.f32 %v5018, %v5018
        %v5120 = vmul.f32 %v5019, %v5019
        %v5121 = vmul.f32 %v5020, %v5020
        %v5122 = vmul.f32 %v5021, %v5021
        %v5123 = vmul.f32 %v5022, %v5022
        %v5124 = vadd.f32 %v5092, %v5093
        %v5125 = vadd.f32 %v5124, %v5094
        %v5126 = vadd.f32 %v5125, %v5095
        %v5127 = vadd.f32 %v5126, %v5096
        %v5128 = vadd.f32 %v5127, %v5097
        %v5129 = vadd.f32 %v5128, %v5098
        %v5130 = vadd.f32 %v5129, %v5099
        %v5131 = vadd.f32 %v5130, %v5100
        %v5132 = vadd.f32 %v5131, %v5101
        %v5133 = vadd.f32 %v5132, %v5102
        %v5134 = vadd.f32 %v5133, %v5103
        %v5135 = vadd.f32 %v5134, %v5104
        %v5136 = vadd.f32 %v5135, %v5105
        %v5137 = vadd.f32 %v5136, %v5106
        %v5138 = vadd.f32 %v5137, %v5107
        %v5139 = vadd.f32 %v5138, %v5108
        %v5140 = vadd.f32 %v5139, %v5109
        %v5141 = vadd.f32 %v5140, %v5110
        %v5142 = vadd.f32 %v5141, %v5111
        %v5143 = vadd.f32 %v5142, %v5112
        %v5144 = vadd.f32 %v5143, %v5113
        %v5145 = vadd.f32 %v5144, %v5114
        %v5146 = vadd.f32 %v5145, %v5115
        %v5147 = vadd.f32 %v5146, %v5116
        %v5148 = vadd.f32 %v5147, %v5117
        %v5149 = vadd.f32 %v5148, %v5118
        %v5150 = vadd.f32 %v5149, %v5119
        %v5151 = vadd.f32 %v5150, %v5120
        %v5152 = vadd.f32 %v5151, %v5121
        %v5153 = vadd.f32 %v5152, %v5122
        %v5154 = vadd.f32 %v5153, %v5123
        %v5155 = vrot.slane %v5154, 4
        %v5156 = vadd.f32 %v5154, %v5155
        %v5157 = vrot.slane %v5156, 2
        %v5158 = vadd.f32 %v5156, %v5157
        %v5159 = vrot.slane %v5158, 1
        %v5160 = vadd.f32 %v5158, %v5159
        %vm5161 = vcmask 1040384
        %v5162 = vsel %vm5161, %v5091, %v5160
        %5163 = vst [vmem:[%s203] sm:$0x3] %v5162
        %s5164 = sand.u32 %s95, 1
        %s5165 = scalar_lea.sflag [#allocation3], %s5164
        %s5166 = sand.u32 %s95, 1
        %s5167 = smul.addr %s5166, 256
        %s5168 = scalar_lea.vmem [#allocation2], %s5167
        %s5169 = sand.u32 %s123, 1
        %s5170 = scalar_lea.sflag [#allocation5], %s5169
        %s5171 = sand.u32 %s123, 1
        %s5172 = smul.addr %s5171, 2
        %s5173 = scalar_lea.vmem [#allocation4], %s5172
        // Predicated region
        $region29: #{tpu_custom_call.1} parent=27 // pred_check
          %p5174 = pneg %p105
        $region30: #{tpu_custom_call.1} parent=27 // pred_check_branch
          %5176 = sbr.rel (%p5174) target = $region32
        $region31: #{tpu_custom_call.1} parent=27 // pred_region
          %s5178 = ssub.s32 4096, 4096
          %5179 = vsyncadd %s5165, %s5178
          %s5180 = smul.addr %s25, 32
          %s5181 = sadd.s32 %s26, %s5180
          %s5182 = smul.addr %s5181, 128
          %s5183 = scalar_lea.hbm %s2, %s5182
          %s5184 = sshll.u32 %s5168, 4
          %s5185 = int_to_ptr.vmem [resolvable:$true] %s5184
          %5190 = dma.vmem_to_hbm [thread:$0]  %s5185, 4096, %s5183, %s5165, 128, 128, 8
        $region32: #{tpu_custom_call.1} parent=27 // pred_fallthru
          _
        // Predicated region
        $region33: #{tpu_custom_call.1} parent=27 // pred_check
          %p5191 = pneg %p133
        $region34: #{tpu_custom_call.1} parent=27 // pred_check_branch
          %5193 = sbr.rel (%p5191) target = $region36
        $region35: #{tpu_custom_call.1} parent=27 // pred_region
          %s5195 = ssub.s32 32, 32
          %5196 = vsyncadd %s5170, %s5195
          %s5197 = sadd.s32 %s26, %s25
          %s5198 = smul.addr %s5197, 32
          %s5199 = scalar_lea.hbm %s3, %s5198
          %s5201 = sshll.u32 %s5173, 4
          %s5202 = int_to_ptr.vmem [resolvable:$true] %s5201
          %5204 = dma.vmem_to_hbm [thread:$0]  %s5202, 32, %s5199, %s5170
        $region36: #{tpu_custom_call.1} parent=27 // pred_fallthru
          _
      $region28: #{tpu_custom_call.1} parent=5 // pred_fallthru
        _
      %p5205 = scmp.le.s32.totalorder 2, %s16
      // Predicated region
      $region37: #{tpu_custom_call.1} parent=5 // pred_check
        %p5206 = pneg %p5205
      $region38: #{tpu_custom_call.1} parent=5 // pred_check_branch
        %5208 = sbr.rel (%p5206) target = $region40
      $region39: #{tpu_custom_call.1} parent=5 // pred_region
        %s5209 = ssub.s32 %s16, 2
        // Predicated region
        $region41: #{tpu_custom_call.1} parent=39 // pred_check
          %p5210 = pneg %p111
        $region42: #{tpu_custom_call.1} parent=39 // pred_check_branch
          %5212 = sbr.rel (%p5210) target = $region44
        $region43: #{tpu_custom_call.1} parent=39 // pred_region
          %s5213 = sand.u32 %s96, 1
          %s5214 = scalar_lea.sflag [#allocation3], %s5213
          %s5215 = sand.u32 %s96, 1
          %s5216 = smul.addr %s5215, 256
          %s5217 = scalar_lea.vmem [#allocation2], %s5216
          %5218 = dma.done %s5214, 4096
        $region44: #{tpu_custom_call.1} parent=39 // pred_fallthru
          _
        // Predicated region
        $region45: #{tpu_custom_call.1} parent=39 // pred_check
          %p5219 = pneg %p139
        $region46: #{tpu_custom_call.1} parent=39 // pred_check_branch
          %5221 = sbr.rel (%p5219) target = $region48
        $region47: #{tpu_custom_call.1} parent=39 // pred_region
          %s5222 = sand.u32 %s124, 1
          %s5223 = scalar_lea.sflag [#allocation5], %s5222
          %s5224 = sand.u32 %s124, 1
          %s5225 = smul.addr %s5224, 2
          %s5226 = scalar_lea.vmem [#allocation4], %s5225
          %5227 = dma.done %s5223, 32
        $region48: #{tpu_custom_call.1} parent=39 // pred_fallthru
          _
      $region40: #{tpu_custom_call.1} parent=5 // pred_fallthru
        _
    $region6: #{tpu_custom_call.1} parent=1 // loop_footer
      %s20 = sadd.s32 1, %s16
    $region7: #{tpu_custom_call.1} parent=1 // loop_footer_branch
      %15 = sbr.rel target = $region3
    $region8: #{tpu_custom_call.1} parent=1 // loop_exit
      _
    %5228 = vsyncpa [#allocation3], 1
    %s5229 = scalar_lea.sflag [#allocation3], 1
    %5230 = vsyncpa %s5229, 1
    %5231 = vsyncpa [#allocation5], 1
    %s5232 = scalar_lea.sflag [#allocation5], 1
    %5233 = vsyncpa %s5232, 1

</llo_original>
